<compile_context>
chip_gen: v7x
topology: tpu7x:2x2x1
jax: 0.10.0
libtpu: 0.0.40
codegen_flags: <defaults>
</compile_context>

<pallas_src>
import jax
import jax.numpy as jnp
from jax.experimental import pallas as pl
from jax.experimental.pallas import tpu as pltpu

LANE = 128
SUBLANE = 8


def _round_up(x, m):
    return (x + m - 1) // m * m


def _full_spec(shape):
    nd = len(shape)
    return pl.BlockSpec(shape, lambda i, _nd=nd: (0,) * _nd)


# --------------------------- fused GRU + FC kernel ---------------------------
def _make_fused_gru_kernel(num_layers, T, Bp, Hp):
    """Kernel fusing `num_layers` GRU layers + final FC on last hidden state.

    Ref layout (positional):
      inputs : x_ref (T, Bp, Dp) f32,
               [wih (Din_p, 3Hp) bf16, whh (Hp, 3Hp) bf16,
                bgi (1, 3Hp) f32, bhn (1, Hp) f32] * L,
               wfc (Hp, Op) bf16, bfc (1, Op) f32
      outputs: out_ref (Bp, Op) f32
      scratch: gi_ref (T, Bp, 3Hp) f32, seq_ref (T, Bp, Hp) f32
    """

    def kernel(*refs):
        x_ref = refs[0]
        layer_refs = refs[1:1 + 4 * num_layers]
        wfc_ref = refs[1 + 4 * num_layers]
        bfc_ref = refs[2 + 4 * num_layers]
        out_ref = refs[3 + 4 * num_layers]
        gi_ref = refs[4 + 4 * num_layers]
        seq_ref = refs[5 + 4 * num_layers]

        h_last = None
        for l in range(num_layers):
            wih_ref, whh_ref, bgi_ref, bhn_ref = layer_refs[4 * l:4 * l + 4]

            # Hoisted input projection: one big bf16 GEMM over all timesteps,
            # f32 accumulation, biases (b_ih + r/z part of b_hh) folded in.
            if l == 0:
                din = x_ref.shape[-1]
                x_flat = x_ref[...].reshape(T * Bp, din)
            else:
                x_flat = seq_ref[...].reshape(T * Bp, Hp)
            gi = (jnp.dot(x_flat.astype(jnp.bfloat16), wih_ref[...],
                          preferred_element_type=jnp.float32)
                  + bgi_ref[...])
            gi_ref[...] = gi.reshape(T, Bp, 3 * Hp)

            # Hoist W_hh load and the b_hn broadcast out of the serial loop so
            # the MXU RHS can stay resident across the unrolled timesteps.
            whh = whh_ref[...]                                   # bf16 (Hp, 3Hp)
            bhn = jnp.broadcast_to(bhn_ref[...], (Bp, Hp))       # f32

            last_layer = (l == num_layers - 1)

            def step(t, h, _whh=whh, _bhn=bhn, _last=last_layer):
                gh = jnp.dot(h.astype(jnp.bfloat16), _whh,
                             preferred_element_type=jnp.float32)
                gi_t = gi_ref[t]                                 # (Bp, 3Hp)
                r = jax.nn.sigmoid(gi_t[:, 0 * Hp:1 * Hp] + gh[:, 0 * Hp:1 * Hp])
                z = jax.nn.sigmoid(gi_t[:, 1 * Hp:2 * Hp] + gh[:, 1 * Hp:2 * Hp])
                n = jnp.tanh(gi_t[:, 2 * Hp:3 * Hp]
                             + r * (gh[:, 2 * Hp:3 * Hp] + _bhn))
                h_new = n + z * (h - n)                          # == (1-z)*n + z*h
                if not _last:
                    # Last layer's sequence is never read; skip the writeback.
                    seq_ref[t] = h_new
                return h_new

            h_last = jax.lax.fori_loop(
                0, T, step, jnp.zeros((Bp, Hp), jnp.float32), unroll=True)

        # Final FC on the last timestep's hidden state of the last layer.
        out_ref[...] = (jnp.dot(h_last.astype(jnp.bfloat16), wfc_ref[...],
                                preferred_element_type=jnp.float32)
                        + bfc_ref[...])

    return kernel


# ------------------------------ parameter prep -------------------------------
def init_params(key, input_size, hidden_size, num_layers, output_size):
    """PyTorch-shaped params: uniform(-1/sqrt(H), 1/sqrt(H)), like nn.GRU/Linear."""
    bound = 1.0 / float(hidden_size) ** 0.5
    gru_layers = []
    for l in range(num_layers):
        in_size = input_size if l == 0 else hidden_size
        key, k1, k2, k3, k4 = jax.random.split(key, 5)
        w_ih = jax.random.uniform(k1, (3 * hidden_size, in_size), jnp.float32, -bound, bound)
        w_hh = jax.random.uniform(k2, (3 * hidden_size, hidden_size), jnp.float32, -bound, bound)
        b_ih = jax.random.uniform(k3, (3 * hidden_size,), jnp.float32, -bound, bound)
        b_hh = jax.random.uniform(k4, (3 * hidden_size,), jnp.float32, -bound, bound)
        gru_layers.append((w_ih, w_hh, b_ih, b_hh))
    key, kf1, kf2 = jax.random.split(key, 3)
    w_fc = jax.random.uniform(kf1, (output_size, hidden_size), jnp.float32, -bound, bound)
    b_fc = jax.random.uniform(kf2, (output_size,), jnp.float32, -bound, bound)
    return {"gru": gru_layers, "fc": (w_fc, b_fc)}


def prepare_params(params, input_size, hidden_size, output_size):
    """One-time prep: transpose, pad each gate to a 128-lane group, fold biases,
    and store matmul weights in bf16 (biases stay f32 for the f32 accumulate)."""
    H = hidden_size
    Hp = _round_up(H, LANE)
    Dp = _round_up(input_size, LANE)
    Op = _round_up(output_size, LANE)

    layers = []
    for l, (w_ih, w_hh, b_ih, b_hh) in enumerate(params["gru"]):
        in_size = w_ih.shape[1]
        in_pad = Dp if l == 0 else Hp
        wih_t = jnp.transpose(w_ih)  # (in, 3H), gate order r, z, n
        whh_t = jnp.transpose(w_hh)  # (H, 3H)

        wih_p = jnp.zeros((in_pad, 3 * Hp), jnp.float32)
        whh_p = jnp.zeros((Hp, 3 * Hp), jnp.float32)
        bgi_p = jnp.zeros((1, 3 * Hp), jnp.float32)
        for g in range(3):
            wih_p = wih_p.at[:in_size, g * Hp:g * Hp + H].set(wih_t[:, g * H:(g + 1) * H])
            whh_p = whh_p.at[:H, g * Hp:g * Hp + H].set(whh_t[:, g * H:(g + 1) * H])
        # Fold b_ih + (r,z parts of b_hh) into the hoisted GEMM bias;
        # b_hn must stay separate: n = tanh(gi_n + r*(W_hn h + b_hn)).
        bgi_p = bgi_p.at[0, 0 * Hp:0 * Hp + H].set(b_ih[0:H] + b_hh[0:H])
        bgi_p = bgi_p.at[0, 1 * Hp:1 * Hp + H].set(b_ih[H:2 * H] + b_hh[H:2 * H])
        bgi_p = bgi_p.at[0, 2 * Hp:2 * Hp + H].set(b_ih[2 * H:3 * H])
        bhn_p = jnp.zeros((1, Hp), jnp.float32).at[0, :H].set(b_hh[2 * H:3 * H])
        layers.append((wih_p.astype(jnp.bfloat16), whh_p.astype(jnp.bfloat16),
                       bgi_p, bhn_p))

    w_fc, b_fc = params["fc"]
    wfc_p = jnp.zeros((Hp, Op), jnp.float32).at[:H, :output_size].set(jnp.transpose(w_fc))
    bfc_p = jnp.zeros((1, Op), jnp.float32).at[0, :output_size].set(b_fc)
    return {"layers": layers, "fc": (wfc_p.astype(jnp.bfloat16), bfc_p),
            "dims": (Dp, Hp, Op), "out": output_size}


# --------------------------------- forward -----------------------------------
def gru_model_forward(x_btd, prep):
    """x_btd: (B, T, D) -> logits (B, output_size). One fused pallas_call."""
    B, T, D = x_btd.shape
    Dp, Hp, Op = prep["dims"]
    Bp = _round_up(max(B, SUBLANE), SUBLANE)
    num_layers = len(prep["layers"])

    # Pad then transpose in one fused expression (no separate (T,B,D) copy);
    # zero padding keeps padded lanes/rows inert inside the kernel.
    x_pad = jnp.transpose(
        jnp.pad(x_btd.astype(jnp.float32),
                ((0, Bp - B), (0, 0), (0, Dp - D))),
        (1, 0, 2))                                   # (T, Bp, Dp)

    flat_inputs = [x_pad]
    for layer in prep["layers"]:
        flat_inputs.extend(layer)
    wfc_p, bfc_p = prep["fc"]
    flat_inputs.extend([wfc_p, bfc_p])

    kernel = _make_fused_gru_kernel(num_layers, T, Bp, Hp)
    out_pad = pl.pallas_call(
        kernel,
        out_shape=jax.ShapeDtypeStruct((Bp, Op), jnp.float32),
        grid_spec=pltpu.PrefetchScalarGridSpec(
            num_scalar_prefetch=0,
            grid=(1,),
            in_specs=[_full_spec(a.shape) for a in flat_inputs],
            out_specs=_full_spec((Bp, Op)),
            scratch_shapes=[
                pltpu.VMEM((T, Bp, 3 * Hp), jnp.float32),  # hoisted gi (per layer)
                pltpu.VMEM((T, Bp, Hp), jnp.float32),      # layer output sequence
            ],
        ),
        compiler_params=pltpu.CompilerParams(
            dimension_semantics=("arbitrary",),
            vmem_limit_bytes=32 * 1024 * 1024),
    )(*flat_inputs)

    return out_pad[:B, :prep["out"]]


# ------------------------------ plain-JAX reference ---------------------------
def _reference_forward(x_btd, params):
    hi = jax.lax.Precision.HIGHEST
    h_seq = jnp.transpose(x_btd, (1, 0, 2)).astype(jnp.float32)  # (T, B, D)
    for (w_ih, w_hh, b_ih, b_hh) in params["gru"]:
        H = w_hh.shape[1]
        T, B, _ = h_seq.shape
        h = jnp.zeros((B, H), jnp.float32)
        outs = []
        for t in range(T):
            gi = jnp.dot(h_seq[t], w_ih.T, precision=hi) + b_ih
            gh = jnp.dot(h, w_hh.T, precision=hi) + b_hh
            r = jax.nn.sigmoid(gi[:, :H] + gh[:, :H])
            z = jax.nn.sigmoid(gi[:, H:2 * H] + gh[:, H:2 * H])
            n = jnp.tanh(gi[:, 2 * H:] + r * gh[:, 2 * H:])
            h = (1.0 - z) * n + z * h
            outs.append(h)
        h_seq = jnp.stack(outs, axis=0)
    w_fc, b_fc = params["fc"]
    return jnp.dot(h_seq[-1], w_fc.T, precision=hi) + b_fc


if __name__ == "__main__":
    # Small shapes consistent with the module: batch=2, seq=8, input=16,
    # hidden=32, num_layers=2, output=10.
    B, T, INPUT, HIDDEN, LAYERS, OUTPUT = 2, 8, 16, 32, 2, 10

    key = jax.random.PRNGKey(0)
    key, kx = jax.random.split(key)
    x = jax.random.normal(kx, (B, T, INPUT), jnp.float32)

    raw_params = init_params(key, INPUT, HIDDEN, LAYERS, OUTPUT)
    prep = prepare_params(raw_params, INPUT, HIDDEN, OUTPUT)

    out = gru_model_forward(x, prep)
    out = jax.block_until_ready(out)
    assert out.shape == (B, OUTPUT) and out.dtype == jnp.float32

    ref = jax.block_until_ready(_reference_forward(x, raw_params))
    max_err = float(jnp.max(jnp.abs(out - ref)))
    # Tolerance accounts for bf16 MXU operands (f32 accumulation) vs the
    # f32 HIGHEST-precision reference over 2 layers x 8 timesteps.
    assert max_err < 2e-2, f"mismatch vs reference: {max_err}"
    print("KERNEL_OK")
</pallas_src>

<mosaic_0001>
module attributes {stable_mosaic.version = 11 : i64} {
  func.func @kernel(%arg0: i32, %arg1: memref<8x8x128xf32, #tpu.memory_space<vmem>>, %arg2: memref<128x384xbf16, #tpu.memory_space<vmem>>, %arg3: memref<128x384xbf16, #tpu.memory_space<vmem>>, %arg4: memref<1x384xf32, #tpu.memory_space<vmem>>, %arg5: memref<1x128xf32, #tpu.memory_space<vmem>>, %arg6: memref<128x384xbf16, #tpu.memory_space<vmem>>, %arg7: memref<128x384xbf16, #tpu.memory_space<vmem>>, %arg8: memref<1x384xf32, #tpu.memory_space<vmem>>, %arg9: memref<1x128xf32, #tpu.memory_space<vmem>>, %arg10: memref<128x128xbf16, #tpu.memory_space<vmem>>, %arg11: memref<1x128xf32, #tpu.memory_space<vmem>>, %arg12: memref<8x128xf32, #tpu.memory_space<vmem>>, %arg13: memref<8x8x384xf32, #tpu.memory_space<vmem>>, %arg14: memref<8x8x128xf32, #tpu.memory_space<vmem>>) attributes {dimension_semantics = [#tpu.dimension_semantics<arbitrary>], iteration_bounds = array<i64: 1>, scalar_prefetch = 0 : i64, scratch_operands = 2 : i64, tpu.core_type = #tpu.core_type<tc>, window_params = [{pipeline_mode = #tpu.pipeline_mode<synchronous>, transform_indices = @transform_0, window_bounds = array<i64: 8, 8, 128>}, {pipeline_mode = #tpu.pipeline_mode<synchronous>, transform_indices = @transform_1, window_bounds = array<i64: 128, 384>}, {pipeline_mode = #tpu.pipeline_mode<synchronous>, transform_indices = @transform_2, window_bounds = array<i64: 128, 384>}, {pipeline_mode = #tpu.pipeline_mode<synchronous>, transform_indices = @transform_3, window_bounds = array<i64: 1, 384>}, {pipeline_mode = #tpu.pipeline_mode<synchronous>, transform_indices = @transform_4, window_bounds = array<i64: 1, 128>}, {pipeline_mode = #tpu.pipeline_mode<synchronous>, transform_indices = @transform_5, window_bounds = array<i64: 128, 384>}, {pipeline_mode = #tpu.pipeline_mode<synchronous>, transform_indices = @transform_6, window_bounds = array<i64: 128, 384>}, {pipeline_mode = #tpu.pipeline_mode<synchronous>, transform_indices = @transform_7, window_bounds = array<i64: 1, 384>}, {pipeline_mode = #tpu.pipeline_mode<synchronous>, transform_indices = @transform_8, window_bounds = array<i64: 1, 128>}, {pipeline_mode = #tpu.pipeline_mode<synchronous>, transform_indices = @transform_9, window_bounds = array<i64: 128, 128>}, {pipeline_mode = #tpu.pipeline_mode<synchronous>, transform_indices = @transform_10, window_bounds = array<i64: 1, 128>}, {pipeline_mode = #tpu.pipeline_mode<synchronous>, transform_indices = @transform_11, window_bounds = array<i64: 8, 128>}]} {
    %c0 = arith.constant 0 : index
    %c0_0 = arith.constant 0 : index
    %c0_1 = arith.constant 0 : index
    %0 = vector.load %arg1[%c0, %c0_0, %c0_1] : memref<8x8x128xf32, #tpu.memory_space<vmem>>, vector<8x8x128xf32>
    %1 = vector.shape_cast %0 : vector<8x8x128xf32> to vector<64x128xf32>
    %2 = arith.truncf %1 : vector<64x128xf32> to vector<64x128xbf16>
    %c0_2 = arith.constant 0 : index
    %c0_3 = arith.constant 0 : index
    %3 = vector.load %arg2[%c0_2, %c0_3] : memref<128x384xbf16, #tpu.memory_space<vmem>>, vector<128x384xbf16>
    %cst = arith.constant dense<0.000000e+00> : vector<64x384xf32>
    %4 = tpu.matmul %2, %3, %cst {dimension_numbers = #tpu.dot_dimension_numbers<[1], [0], [0], [1], [0, 0, 1, 1], [], []>} : vector<64x128xbf16>, vector<128x384xbf16>, vector<64x384xf32> -> vector<64x384xf32>
    %c0_4 = arith.constant 0 : index
    %c0_5 = arith.constant 0 : index
    %5 = vector.load %arg4[%c0_4, %c0_5] : memref<1x384xf32, #tpu.memory_space<vmem>>, vector<1x384xf32>
    %6 = vector.broadcast %5 : vector<1x384xf32> to vector<64x384xf32>
    %7 = arith.addf %4, %6 : vector<64x384xf32>
    %8 = vector.shape_cast %7 : vector<64x384xf32> to vector<8x8x384xf32>
    %c0_6 = arith.constant 0 : index
    %c0_7 = arith.constant 0 : index
    %c0_8 = arith.constant 0 : index
    %9 = vector.load %arg13[%c0_6, %c0_7, %c0_8] : memref<8x8x384xf32, #tpu.memory_space<vmem>>, vector<8x8x384xf32>
    tpu.vector_store %arg13[%c0_6, %c0_7, %c0_8], %8 {strides = array<i32>} : memref<8x8x384xf32, #tpu.memory_space<vmem>>, vector<8x8x384xf32>,
    %c0_9 = arith.constant 0 : index
    %c0_10 = arith.constant 0 : index
    %10 = vector.load %arg3[%c0_9, %c0_10] : memref<128x384xbf16, #tpu.memory_space<vmem>>, vector<128x384xbf16>
    %c0_11 = arith.constant 0 : index
    %c0_12 = arith.constant 0 : index
    %11 = vector.load %arg5[%c0_11, %c0_12] : memref<1x128xf32, #tpu.memory_space<vmem>>, vector<1x128xf32>
    %12 = vector.shape_cast %11 : vector<1x128xf32> to vector<1x128xf32>
    %13 = vector.broadcast %12 : vector<1x128xf32> to vector<8x128xf32>
    %cst_13 = arith.constant 0.000000e+00 : f32
    %14 = vector.broadcast %cst_13 : f32 to vector<8x128xf32>
    %c0_i32 = arith.constant 0 : i32
    %15 = arith.truncf %14 : vector<8x128xf32> to vector<8x128xbf16>
    %cst_14 = arith.constant dense<0.000000e+00> : vector<8x384xf32>
    %16 = tpu.matmul %15, %10, %cst_14 {dimension_numbers = #tpu.dot_dimension_numbers<[1], [0], [0], [1], [0, 0, 1, 1], [], []>} : vector<8x128xbf16>, vector<128x384xbf16>, vector<8x384xf32> -> vector<8x384xf32>
    %17 = arith.index_cast %c0_i32 : i32 to index
    %c0_15 = arith.constant 0 : index
    %c0_16 = arith.constant 0 : index
    %18 = vector.load %arg13[%17, %c0_15, %c0_16] : memref<8x8x384xf32, #tpu.memory_space<vmem>>, vector<1x8x384xf32>
    %19 = vector.shape_cast %18 : vector<1x8x384xf32> to vector<8x384xf32>
    %20 = vector.extract_strided_slice %19 {offsets = [0, 0], sizes = [8, 128], strides = [1, 1]} : vector<8x384xf32> to vector<8x128xf32>
    %21 = vector.extract_strided_slice %16 {offsets = [0, 0], sizes = [8, 128], strides = [1, 1]} : vector<8x384xf32> to vector<8x128xf32>
    %22 = arith.addf %20, %21 : vector<8x128xf32>
    %23 = arith.negf %22 : vector<8x128xf32>
    %24 = math.exp %23 : vector<8x128xf32>
    %cst_17 = arith.constant 1.000000e+00 : f32
    %25 = vector.broadcast %cst_17 : f32 to vector<8x128xf32>
    %26 = arith.addf %25, %24 : vector<8x128xf32>
    %27 = arith.divf %25, %26 : vector<8x128xf32>
    %28 = vector.extract_strided_slice %19 {offsets = [0, 128], sizes = [8, 128], strides = [1, 1]} : vector<8x384xf32> to vector<8x128xf32>
    %29 = vector.extract_strided_slice %16 {offsets = [0, 128], sizes = [8, 128], strides = [1, 1]} : vector<8x384xf32> to vector<8x128xf32>
    %30 = arith.addf %28, %29 : vector<8x128xf32>
    %31 = arith.negf %30 : vector<8x128xf32>
    %32 = math.exp %31 : vector<8x128xf32>
    %cst_18 = arith.constant 1.000000e+00 : f32
    %33 = vector.broadcast %cst_18 : f32 to vector<8x128xf32>
    %34 = arith.addf %33, %32 : vector<8x128xf32>
    %35 = arith.divf %33, %34 : vector<8x128xf32>
    %36 = vector.extract_strided_slice %19 {offsets = [0, 256], sizes = [8, 128], strides = [1, 1]} : vector<8x384xf32> to vector<8x128xf32>
    %37 = vector.extract_strided_slice %16 {offsets = [0, 256], sizes = [8, 128], strides = [1, 1]} : vector<8x384xf32> to vector<8x128xf32>
    %38 = arith.addf %37, %13 : vector<8x128xf32>
    %39 = arith.mulf %27, %38 : vector<8x128xf32>
    %40 = arith.addf %36, %39 : vector<8x128xf32>
    %41 = math.tanh %40 : vector<8x128xf32>
    %42 = arith.subf %14, %41 : vector<8x128xf32>
    %43 = arith.mulf %35, %42 : vector<8x128xf32>
    %44 = arith.addf %41, %43 : vector<8x128xf32>
    %45 = arith.index_cast %c0_i32 : i32 to index
    %c0_19 = arith.constant 0 : index
    %c0_20 = arith.constant 0 : index
    %46 = vector.load %arg14[%45, %c0_19, %c0_20] : memref<8x8x128xf32, #tpu.memory_space<vmem>>, vector<1x8x128xf32>
    %47 = vector.shape_cast %46 : vector<1x8x128xf32> to vector<8x128xf32>
    %48 = vector.shape_cast %44 : vector<8x128xf32> to vector<1x8x128xf32>
    tpu.vector_store %arg14[%45, %c0_19, %c0_20], %48 {strides = array<i32>} : memref<8x8x128xf32, #tpu.memory_space<vmem>>, vector<1x8x128xf32>,
    %c1_i32 = arith.constant 1 : i32
    %49 = arith.truncf %44 : vector<8x128xf32> to vector<8x128xbf16>
    %cst_21 = arith.constant dense<0.000000e+00> : vector<8x384xf32>
    %50 = tpu.matmul %49, %10, %cst_21 {dimension_numbers = #tpu.dot_dimension_numbers<[1], [0], [0], [1], [0, 0, 1, 1], [], []>} : vector<8x128xbf16>, vector<128x384xbf16>, vector<8x384xf32> -> vector<8x384xf32>
    %51 = arith.index_cast %c1_i32 : i32 to index
    %c0_22 = arith.constant 0 : index
    %c0_23 = arith.constant 0 : index
    %52 = vector.load %arg13[%51, %c0_22, %c0_23] : memref<8x8x384xf32, #tpu.memory_space<vmem>>, vector<1x8x384xf32>
    %53 = vector.shape_cast %52 : vector<1x8x384xf32> to vector<8x384xf32>
    %54 = vector.extract_strided_slice %53 {offsets = [0, 0], sizes = [8, 128], strides = [1, 1]} : vector<8x384xf32> to vector<8x128xf32>
    %55 = vector.extract_strided_slice %50 {offsets = [0, 0], sizes = [8, 128], strides = [1, 1]} : vector<8x384xf32> to vector<8x128xf32>
    %56 = arith.addf %54, %55 : vector<8x128xf32>
    %57 = arith.negf %56 : vector<8x128xf32>
    %58 = math.exp %57 : vector<8x128xf32>
    %cst_24 = arith.constant 1.000000e+00 : f32
    %59 = vector.broadcast %cst_24 : f32 to vector<8x128xf32>
    %60 = arith.addf %59, %58 : vector<8x128xf32>
    %61 = arith.divf %59, %60 : vector<8x128xf32>
    %62 = vector.extract_strided_slice %53 {offsets = [0, 128], sizes = [8, 128], strides = [1, 1]} : vector<8x384xf32> to vector<8x128xf32>
    %63 = vector.extract_strided_slice %50 {offsets = [0, 128], sizes = [8, 128], strides = [1, 1]} : vector<8x384xf32> to vector<8x128xf32>
    %64 = arith.addf %62, %63 : vector<8x128xf32>
    %65 = arith.negf %64 : vector<8x128xf32>
    %66 = math.exp %65 : vector<8x128xf32>
    %cst_25 = arith.constant 1.000000e+00 : f32
    %67 = vector.broadcast %cst_25 : f32 to vector<8x128xf32>
    %68 = arith.addf %67, %66 : vector<8x128xf32>
    %69 = arith.divf %67, %68 : vector<8x128xf32>
    %70 = vector.extract_strided_slice %53 {offsets = [0, 256], sizes = [8, 128], strides = [1, 1]} : vector<8x384xf32> to vector<8x128xf32>
    %71 = vector.extract_strided_slice %50 {offsets = [0, 256], sizes = [8, 128], strides = [1, 1]} : vector<8x384xf32> to vector<8x128xf32>
    %72 = arith.addf %71, %13 : vector<8x128xf32>
    %73 = arith.mulf %61, %72 : vector<8x128xf32>
    %74 = arith.addf %70, %73 : vector<8x128xf32>
    %75 = math.tanh %74 : vector<8x128xf32>
    %76 = arith.subf %44, %75 : vector<8x128xf32>
    %77 = arith.mulf %69, %76 : vector<8x128xf32>
    %78 = arith.addf %75, %77 : vector<8x128xf32>
    %79 = arith.index_cast %c1_i32 : i32 to index
    %c0_26 = arith.constant 0 : index
    %c0_27 = arith.constant 0 : index
    %80 = vector.load %arg14[%79, %c0_26, %c0_27] : memref<8x8x128xf32, #tpu.memory_space<vmem>>, vector<1x8x128xf32>
    %81 = vector.shape_cast %80 : vector<1x8x128xf32> to vector<8x128xf32>
    %82 = vector.shape_cast %78 : vector<8x128xf32> to vector<1x8x128xf32>
    tpu.vector_store %arg14[%79, %c0_26, %c0_27], %82 {strides = array<i32>} : memref<8x8x128xf32, #tpu.memory_space<vmem>>, vector<1x8x128xf32>,
    %c2_i32 = arith.constant 2 : i32
    %83 = arith.truncf %78 : vector<8x128xf32> to vector<8x128xbf16>
    %cst_28 = arith.constant dense<0.000000e+00> : vector<8x384xf32>
    %84 = tpu.matmul %83, %10, %cst_28 {dimension_numbers = #tpu.dot_dimension_numbers<[1], [0], [0], [1], [0, 0, 1, 1], [], []>} : vector<8x128xbf16>, vector<128x384xbf16>, vector<8x384xf32> -> vector<8x384xf32>
    %85 = arith.index_cast %c2_i32 : i32 to index
    %c0_29 = arith.constant 0 : index
    %c0_30 = arith.constant 0 : index
    %86 = vector.load %arg13[%85, %c0_29, %c0_30] : memref<8x8x384xf32, #tpu.memory_space<vmem>>, vector<1x8x384xf32>
    %87 = vector.shape_cast %86 : vector<1x8x384xf32> to vector<8x384xf32>
    %88 = vector.extract_strided_slice %87 {offsets = [0, 0], sizes = [8, 128], strides = [1, 1]} : vector<8x384xf32> to vector<8x128xf32>
    %89 = vector.extract_strided_slice %84 {offsets = [0, 0], sizes = [8, 128], strides = [1, 1]} : vector<8x384xf32> to vector<8x128xf32>
    %90 = arith.addf %88, %89 : vector<8x128xf32>
    %91 = arith.negf %90 : vector<8x128xf32>
    %92 = math.exp %91 : vector<8x128xf32>
    %cst_31 = arith.constant 1.000000e+00 : f32
    %93 = vector.broadcast %cst_31 : f32 to vector<8x128xf32>
    %94 = arith.addf %93, %92 : vector<8x128xf32>
    %95 = arith.divf %93, %94 : vector<8x128xf32>
    %96 = vector.extract_strided_slice %87 {offsets = [0, 128], sizes = [8, 128], strides = [1, 1]} : vector<8x384xf32> to vector<8x128xf32>
    %97 = vector.extract_strided_slice %84 {offsets = [0, 128], sizes = [8, 128], strides = [1, 1]} : vector<8x384xf32> to vector<8x128xf32>
    %98 = arith.addf %96, %97 : vector<8x128xf32>
    %99 = arith.negf %98 : vector<8x128xf32>
    %100 = math.exp %99 : vector<8x128xf32>
    %cst_32 = arith.constant 1.000000e+00 : f32
    %101 = vector.broadcast %cst_32 : f32 to vector<8x128xf32>
    %102 = arith.addf %101, %100 : vector<8x128xf32>
    %103 = arith.divf %101, %102 : vector<8x128xf32>
    %104 = vector.extract_strided_slice %87 {offsets = [0, 256], sizes = [8, 128], strides = [1, 1]} : vector<8x384xf32> to vector<8x128xf32>
    %105 = vector.extract_strided_slice %84 {offsets = [0, 256], sizes = [8, 128], strides = [1, 1]} : vector<8x384xf32> to vector<8x128xf32>
    %106 = arith.addf %105, %13 : vector<8x128xf32>
    %107 = arith.mulf %95, %106 : vector<8x128xf32>
    %108 = arith.addf %104, %107 : vector<8x128xf32>
    %109 = math.tanh %108 : vector<8x128xf32>
    %110 = arith.subf %78, %109 : vector<8x128xf32>
    %111 = arith.mulf %103, %110 : vector<8x128xf32>
    %112 = arith.addf %109, %111 : vector<8x128xf32>
    %113 = arith.index_cast %c2_i32 : i32 to index
    %c0_33 = arith.constant 0 : index
    %c0_34 = arith.constant 0 : index
    %114 = vector.load %arg14[%113, %c0_33, %c0_34] : memref<8x8x128xf32, #tpu.memory_space<vmem>>, vector<1x8x128xf32>
    %115 = vector.shape_cast %114 : vector<1x8x128xf32> to vector<8x128xf32>
    %116 = vector.shape_cast %112 : vector<8x128xf32> to vector<1x8x128xf32>
    tpu.vector_store %arg14[%113, %c0_33, %c0_34], %116 {strides = array<i32>} : memref<8x8x128xf32, #tpu.memory_space<vmem>>, vector<1x8x128xf32>,
    %c3_i32 = arith.constant 3 : i32
    %117 = arith.truncf %112 : vector<8x128xf32> to vector<8x128xbf16>
    %cst_35 = arith.constant dense<0.000000e+00> : vector<8x384xf32>
    %118 = tpu.matmul %117, %10, %cst_35 {dimension_numbers = #tpu.dot_dimension_numbers<[1], [0], [0], [1], [0, 0, 1, 1], [], []>} : vector<8x128xbf16>, vector<128x384xbf16>, vector<8x384xf32> -> vector<8x384xf32>
    %119 = arith.index_cast %c3_i32 : i32 to index
    %c0_36 = arith.constant 0 : index
    %c0_37 = arith.constant 0 : index
    %120 = vector.load %arg13[%119, %c0_36, %c0_37] : memref<8x8x384xf32, #tpu.memory_space<vmem>>, vector<1x8x384xf32>
    %121 = vector.shape_cast %120 : vector<1x8x384xf32> to vector<8x384xf32>
    %122 = vector.extract_strided_slice %121 {offsets = [0, 0], sizes = [8, 128], strides = [1, 1]} : vector<8x384xf32> to vector<8x128xf32>
    %123 = vector.extract_strided_slice %118 {offsets = [0, 0], sizes = [8, 128], strides = [1, 1]} : vector<8x384xf32> to vector<8x128xf32>
    %124 = arith.addf %122, %123 : vector<8x128xf32>
    %125 = arith.negf %124 : vector<8x128xf32>
    %126 = math.exp %125 : vector<8x128xf32>
    %cst_38 = arith.constant 1.000000e+00 : f32
    %127 = vector.broadcast %cst_38 : f32 to vector<8x128xf32>
    %128 = arith.addf %127, %126 : vector<8x128xf32>
    %129 = arith.divf %127, %128 : vector<8x128xf32>
    %130 = vector.extract_strided_slice %121 {offsets = [0, 128], sizes = [8, 128], strides = [1, 1]} : vector<8x384xf32> to vector<8x128xf32>
    %131 = vector.extract_strided_slice %118 {offsets = [0, 128], sizes = [8, 128], strides = [1, 1]} : vector<8x384xf32> to vector<8x128xf32>
    %132 = arith.addf %130, %131 : vector<8x128xf32>
    %133 = arith.negf %132 : vector<8x128xf32>
    %134 = math.exp %133 : vector<8x128xf32>
    %cst_39 = arith.constant 1.000000e+00 : f32
    %135 = vector.broadcast %cst_39 : f32 to vector<8x128xf32>
    %136 = arith.addf %135, %134 : vector<8x128xf32>
    %137 = arith.divf %135, %136 : vector<8x128xf32>
    %138 = vector.extract_strided_slice %121 {offsets = [0, 256], sizes = [8, 128], strides = [1, 1]} : vector<8x384xf32> to vector<8x128xf32>
    %139 = vector.extract_strided_slice %118 {offsets = [0, 256], sizes = [8, 128], strides = [1, 1]} : vector<8x384xf32> to vector<8x128xf32>
    %140 = arith.addf %139, %13 : vector<8x128xf32>
    %141 = arith.mulf %129, %140 : vector<8x128xf32>
    %142 = arith.addf %138, %141 : vector<8x128xf32>
    %143 = math.tanh %142 : vector<8x128xf32>
    %144 = arith.subf %112, %143 : vector<8x128xf32>
    %145 = arith.mulf %137, %144 : vector<8x128xf32>
    %146 = arith.addf %143, %145 : vector<8x128xf32>
    %147 = arith.index_cast %c3_i32 : i32 to index
    %c0_40 = arith.constant 0 : index
    %c0_41 = arith.constant 0 : index
    %148 = vector.load %arg14[%147, %c0_40, %c0_41] : memref<8x8x128xf32, #tpu.memory_space<vmem>>, vector<1x8x128xf32>
    %149 = vector.shape_cast %148 : vector<1x8x128xf32> to vector<8x128xf32>
    %150 = vector.shape_cast %146 : vector<8x128xf32> to vector<1x8x128xf32>
    tpu.vector_store %arg14[%147, %c0_40, %c0_41], %150 {strides = array<i32>} : memref<8x8x128xf32, #tpu.memory_space<vmem>>, vector<1x8x128xf32>,
    %c4_i32 = arith.constant 4 : i32
    %151 = arith.truncf %146 : vector<8x128xf32> to vector<8x128xbf16>
    %cst_42 = arith.constant dense<0.000000e+00> : vector<8x384xf32>
    %152 = tpu.matmul %151, %10, %cst_42 {dimension_numbers = #tpu.dot_dimension_numbers<[1], [0], [0], [1], [0, 0, 1, 1], [], []>} : vector<8x128xbf16>, vector<128x384xbf16>, vector<8x384xf32> -> vector<8x384xf32>
    %153 = arith.index_cast %c4_i32 : i32 to index
    %c0_43 = arith.constant 0 : index
    %c0_44 = arith.constant 0 : index
    %154 = vector.load %arg13[%153, %c0_43, %c0_44] : memref<8x8x384xf32, #tpu.memory_space<vmem>>, vector<1x8x384xf32>
    %155 = vector.shape_cast %154 : vector<1x8x384xf32> to vector<8x384xf32>
    %156 = vector.extract_strided_slice %155 {offsets = [0, 0], sizes = [8, 128], strides = [1, 1]} : vector<8x384xf32> to vector<8x128xf32>
    %157 = vector.extract_strided_slice %152 {offsets = [0, 0], sizes = [8, 128], strides = [1, 1]} : vector<8x384xf32> to vector<8x128xf32>
    %158 = arith.addf %156, %157 : vector<8x128xf32>
    %159 = arith.negf %158 : vector<8x128xf32>
    %160 = math.exp %159 : vector<8x128xf32>
    %cst_45 = arith.constant 1.000000e+00 : f32
    %161 = vector.broadcast %cst_45 : f32 to vector<8x128xf32>
    %162 = arith.addf %161, %160 : vector<8x128xf32>
    %163 = arith.divf %161, %162 : vector<8x128xf32>
    %164 = vector.extract_strided_slice %155 {offsets = [0, 128], sizes = [8, 128], strides = [1, 1]} : vector<8x384xf32> to vector<8x128xf32>
    %165 = vector.extract_strided_slice %152 {offsets = [0, 128], sizes = [8, 128], strides = [1, 1]} : vector<8x384xf32> to vector<8x128xf32>
    %166 = arith.addf %164, %165 : vector<8x128xf32>
    %167 = arith.negf %166 : vector<8x128xf32>
    %168 = math.exp %167 : vector<8x128xf32>
    %cst_46 = arith.constant 1.000000e+00 : f32
    %169 = vector.broadcast %cst_46 : f32 to vector<8x128xf32>
    %170 = arith.addf %169, %168 : vector<8x128xf32>
    %171 = arith.divf %169, %170 : vector<8x128xf32>
    %172 = vector.extract_strided_slice %155 {offsets = [0, 256], sizes = [8, 128], strides = [1, 1]} : vector<8x384xf32> to vector<8x128xf32>
    %173 = vector.extract_strided_slice %152 {offsets = [0, 256], sizes = [8, 128], strides = [1, 1]} : vector<8x384xf32> to vector<8x128xf32>
    %174 = arith.addf %173, %13 : vector<8x128xf32>
    %175 = arith.mulf %163, %174 : vector<8x128xf32>
    %176 = arith.addf %172, %175 : vector<8x128xf32>
    %177 = math.tanh %176 : vector<8x128xf32>
    %178 = arith.subf %146, %177 : vector<8x128xf32>
    %179 = arith.mulf %171, %178 : vector<8x128xf32>
    %180 = arith.addf %177, %179 : vector<8x128xf32>
    %181 = arith.index_cast %c4_i32 : i32 to index
    %c0_47 = arith.constant 0 : index
    %c0_48 = arith.constant 0 : index
    %182 = vector.load %arg14[%181, %c0_47, %c0_48] : memref<8x8x128xf32, #tpu.memory_space<vmem>>, vector<1x8x128xf32>
    %183 = vector.shape_cast %182 : vector<1x8x128xf32> to vector<8x128xf32>
    %184 = vector.shape_cast %180 : vector<8x128xf32> to vector<1x8x128xf32>
    tpu.vector_store %arg14[%181, %c0_47, %c0_48], %184 {strides = array<i32>} : memref<8x8x128xf32, #tpu.memory_space<vmem>>, vector<1x8x128xf32>,
    %c5_i32 = arith.constant 5 : i32
    %185 = arith.truncf %180 : vector<8x128xf32> to vector<8x128xbf16>
    %cst_49 = arith.constant dense<0.000000e+00> : vector<8x384xf32>
    %186 = tpu.matmul %185, %10, %cst_49 {dimension_numbers = #tpu.dot_dimension_numbers<[1], [0], [0], [1], [0, 0, 1, 1], [], []>} : vector<8x128xbf16>, vector<128x384xbf16>, vector<8x384xf32> -> vector<8x384xf32>
    %187 = arith.index_cast %c5_i32 : i32 to index
    %c0_50 = arith.constant 0 : index
    %c0_51 = arith.constant 0 : index
    %188 = vector.load %arg13[%187, %c0_50, %c0_51] : memref<8x8x384xf32, #tpu.memory_space<vmem>>, vector<1x8x384xf32>
    %189 = vector.shape_cast %188 : vector<1x8x384xf32> to vector<8x384xf32>
    %190 = vector.extract_strided_slice %189 {offsets = [0, 0], sizes = [8, 128], strides = [1, 1]} : vector<8x384xf32> to vector<8x128xf32>
    %191 = vector.extract_strided_slice %186 {offsets = [0, 0], sizes = [8, 128], strides = [1, 1]} : vector<8x384xf32> to vector<8x128xf32>
    %192 = arith.addf %190, %191 : vector<8x128xf32>
    %193 = arith.negf %192 : vector<8x128xf32>
    %194 = math.exp %193 : vector<8x128xf32>
    %cst_52 = arith.constant 1.000000e+00 : f32
    %195 = vector.broadcast %cst_52 : f32 to vector<8x128xf32>
    %196 = arith.addf %195, %194 : vector<8x128xf32>
    %197 = arith.divf %195, %196 : vector<8x128xf32>
    %198 = vector.extract_strided_slice %189 {offsets = [0, 128], sizes = [8, 128], strides = [1, 1]} : vector<8x384xf32> to vector<8x128xf32>
    %199 = vector.extract_strided_slice %186 {offsets = [0, 128], sizes = [8, 128], strides = [1, 1]} : vector<8x384xf32> to vector<8x128xf32>
    %200 = arith.addf %198, %199 : vector<8x128xf32>
    %201 = arith.negf %200 : vector<8x128xf32>
    %202 = math.exp %201 : vector<8x128xf32>
    %cst_53 = arith.constant 1.000000e+00 : f32
    %203 = vector.broadcast %cst_53 : f32 to vector<8x128xf32>
    %204 = arith.addf %203, %202 : vector<8x128xf32>
    %205 = arith.divf %203, %204 : vector<8x128xf32>
    %206 = vector.extract_strided_slice %189 {offsets = [0, 256], sizes = [8, 128], strides = [1, 1]} : vector<8x384xf32> to vector<8x128xf32>
    %207 = vector.extract_strided_slice %186 {offsets = [0, 256], sizes = [8, 128], strides = [1, 1]} : vector<8x384xf32> to vector<8x128xf32>
    %208 = arith.addf %207, %13 : vector<8x128xf32>
    %209 = arith.mulf %197, %208 : vector<8x128xf32>
    %210 = arith.addf %206, %209 : vector<8x128xf32>
    %211 = math.tanh %210 : vector<8x128xf32>
    %212 = arith.subf %180, %211 : vector<8x128xf32>
    %213 = arith.mulf %205, %212 : vector<8x128xf32>
    %214 = arith.addf %211, %213 : vector<8x128xf32>
    %215 = arith.index_cast %c5_i32 : i32 to index
    %c0_54 = arith.constant 0 : index
    %c0_55 = arith.constant 0 : index
    %216 = vector.load %arg14[%215, %c0_54, %c0_55] : memref<8x8x128xf32, #tpu.memory_space<vmem>>, vector<1x8x128xf32>
    %217 = vector.shape_cast %216 : vector<1x8x128xf32> to vector<8x128xf32>
    %218 = vector.shape_cast %214 : vector<8x128xf32> to vector<1x8x128xf32>
    tpu.vector_store %arg14[%215, %c0_54, %c0_55], %218 {strides = array<i32>} : memref<8x8x128xf32, #tpu.memory_space<vmem>>, vector<1x8x128xf32>,
    %c6_i32 = arith.constant 6 : i32
    %219 = arith.truncf %214 : vector<8x128xf32> to vector<8x128xbf16>
    %cst_56 = arith.constant dense<0.000000e+00> : vector<8x384xf32>
    %220 = tpu.matmul %219, %10, %cst_56 {dimension_numbers = #tpu.dot_dimension_numbers<[1], [0], [0], [1], [0, 0, 1, 1], [], []>} : vector<8x128xbf16>, vector<128x384xbf16>, vector<8x384xf32> -> vector<8x384xf32>
    %221 = arith.index_cast %c6_i32 : i32 to index
    %c0_57 = arith.constant 0 : index
    %c0_58 = arith.constant 0 : index
    %222 = vector.load %arg13[%221, %c0_57, %c0_58] : memref<8x8x384xf32, #tpu.memory_space<vmem>>, vector<1x8x384xf32>
    %223 = vector.shape_cast %222 : vector<1x8x384xf32> to vector<8x384xf32>
    %224 = vector.extract_strided_slice %223 {offsets = [0, 0], sizes = [8, 128], strides = [1, 1]} : vector<8x384xf32> to vector<8x128xf32>
    %225 = vector.extract_strided_slice %220 {offsets = [0, 0], sizes = [8, 128], strides = [1, 1]} : vector<8x384xf32> to vector<8x128xf32>
    %226 = arith.addf %224, %225 : vector<8x128xf32>
    %227 = arith.negf %226 : vector<8x128xf32>
    %228 = math.exp %227 : vector<8x128xf32>
    %cst_59 = arith.constant 1.000000e+00 : f32
    %229 = vector.broadcast %cst_59 : f32 to vector<8x128xf32>
    %230 = arith.addf %229, %228 : vector<8x128xf32>
    %231 = arith.divf %229, %230 : vector<8x128xf32>
    %232 = vector.extract_strided_slice %223 {offsets = [0, 128], sizes = [8, 128], strides = [1, 1]} : vector<8x384xf32> to vector<8x128xf32>
    %233 = vector.extract_strided_slice %220 {offsets = [0, 128], sizes = [8, 128], strides = [1, 1]} : vector<8x384xf32> to vector<8x128xf32>
    %234 = arith.addf %232, %233 : vector<8x128xf32>
    %235 = arith.negf %234 : vector<8x128xf32>
    %236 = math.exp %235 : vector<8x128xf32>
    %cst_60 = arith.constant 1.000000e+00 : f32
    %237 = vector.broadcast %cst_60 : f32 to vector<8x128xf32>
    %238 = arith.addf %237, %236 : vector<8x128xf32>
    %239 = arith.divf %237, %238 : vector<8x128xf32>
    %240 = vector.extract_strided_slice %223 {offsets = [0, 256], sizes = [8, 128], strides = [1, 1]} : vector<8x384xf32> to vector<8x128xf32>
    %241 = vector.extract_strided_slice %220 {offsets = [0, 256], sizes = [8, 128], strides = [1, 1]} : vector<8x384xf32> to vector<8x128xf32>
    %242 = arith.addf %241, %13 : vector<8x128xf32>
    %243 = arith.mulf %231, %242 : vector<8x128xf32>
    %244 = arith.addf %240, %243 : vector<8x128xf32>
    %245 = math.tanh %244 : vector<8x128xf32>
    %246 = arith.subf %214, %245 : vector<8x128xf32>
    %247 = arith.mulf %239, %246 : vector<8x128xf32>
    %248 = arith.addf %245, %247 : vector<8x128xf32>
    %249 = arith.index_cast %c6_i32 : i32 to index
    %c0_61 = arith.constant 0 : index
    %c0_62 = arith.constant 0 : index
    %250 = vector.load %arg14[%249, %c0_61, %c0_62] : memref<8x8x128xf32, #tpu.memory_space<vmem>>, vector<1x8x128xf32>
    %251 = vector.shape_cast %250 : vector<1x8x128xf32> to vector<8x128xf32>
    %252 = vector.shape_cast %248 : vector<8x128xf32> to vector<1x8x128xf32>
    tpu.vector_store %arg14[%249, %c0_61, %c0_62], %252 {strides = array<i32>} : memref<8x8x128xf32, #tpu.memory_space<vmem>>, vector<1x8x128xf32>,
    %c7_i32 = arith.constant 7 : i32
    %253 = arith.truncf %248 : vector<8x128xf32> to vector<8x128xbf16>
    %cst_63 = arith.constant dense<0.000000e+00> : vector<8x384xf32>
    %254 = tpu.matmul %253, %10, %cst_63 {dimension_numbers = #tpu.dot_dimension_numbers<[1], [0], [0], [1], [0, 0, 1, 1], [], []>} : vector<8x128xbf16>, vector<128x384xbf16>, vector<8x384xf32> -> vector<8x384xf32>
    %255 = arith.index_cast %c7_i32 : i32 to index
    %c0_64 = arith.constant 0 : index
    %c0_65 = arith.constant 0 : index
    %256 = vector.load %arg13[%255, %c0_64, %c0_65] : memref<8x8x384xf32, #tpu.memory_space<vmem>>, vector<1x8x384xf32>
    %257 = vector.shape_cast %256 : vector<1x8x384xf32> to vector<8x384xf32>
    %258 = vector.extract_strided_slice %257 {offsets = [0, 0], sizes = [8, 128], strides = [1, 1]} : vector<8x384xf32> to vector<8x128xf32>
    %259 = vector.extract_strided_slice %254 {offsets = [0, 0], sizes = [8, 128], strides = [1, 1]} : vector<8x384xf32> to vector<8x128xf32>
    %260 = arith.addf %258, %259 : vector<8x128xf32>
    %261 = arith.negf %260 : vector<8x128xf32>
    %262 = math.exp %261 : vector<8x128xf32>
    %cst_66 = arith.constant 1.000000e+00 : f32
    %263 = vector.broadcast %cst_66 : f32 to vector<8x128xf32>
    %264 = arith.addf %263, %262 : vector<8x128xf32>
    %265 = arith.divf %263, %264 : vector<8x128xf32>
    %266 = vector.extract_strided_slice %257 {offsets = [0, 128], sizes = [8, 128], strides = [1, 1]} : vector<8x384xf32> to vector<8x128xf32>
    %267 = vector.extract_strided_slice %254 {offsets = [0, 128], sizes = [8, 128], strides = [1, 1]} : vector<8x384xf32> to vector<8x128xf32>
    %268 = arith.addf %266, %267 : vector<8x128xf32>
    %269 = arith.negf %268 : vector<8x128xf32>
    %270 = math.exp %269 : vector<8x128xf32>
    %cst_67 = arith.constant 1.000000e+00 : f32
    %271 = vector.broadcast %cst_67 : f32 to vector<8x128xf32>
    %272 = arith.addf %271, %270 : vector<8x128xf32>
    %273 = arith.divf %271, %272 : vector<8x128xf32>
    %274 = vector.extract_strided_slice %257 {offsets = [0, 256], sizes = [8, 128], strides = [1, 1]} : vector<8x384xf32> to vector<8x128xf32>
    %275 = vector.extract_strided_slice %254 {offsets = [0, 256], sizes = [8, 128], strides = [1, 1]} : vector<8x384xf32> to vector<8x128xf32>
    %276 = arith.addf %275, %13 : vector<8x128xf32>
    %277 = arith.mulf %265, %276 : vector<8x128xf32>
    %278 = arith.addf %274, %277 : vector<8x128xf32>
    %279 = math.tanh %278 : vector<8x128xf32>
    %280 = arith.subf %248, %279 : vector<8x128xf32>
    %281 = arith.mulf %273, %280 : vector<8x128xf32>
    %282 = arith.addf %279, %281 : vector<8x128xf32>
    %283 = arith.index_cast %c7_i32 : i32 to index
    %c0_68 = arith.constant 0 : index
    %c0_69 = arith.constant 0 : index
    %284 = vector.load %arg14[%283, %c0_68, %c0_69] : memref<8x8x128xf32, #tpu.memory_space<vmem>>, vector<1x8x128xf32>
    %285 = vector.shape_cast %284 : vector<1x8x128xf32> to vector<8x128xf32>
    %286 = vector.shape_cast %282 : vector<8x128xf32> to vector<1x8x128xf32>
    tpu.vector_store %arg14[%283, %c0_68, %c0_69], %286 {strides = array<i32>} : memref<8x8x128xf32, #tpu.memory_space<vmem>>, vector<1x8x128xf32>,
    %c8_i32 = arith.constant 8 : i32
    %c0_70 = arith.constant 0 : index
    %c0_71 = arith.constant 0 : index
    %c0_72 = arith.constant 0 : index
    %287 = vector.load %arg14[%c0_70, %c0_71, %c0_72] : memref<8x8x128xf32, #tpu.memory_space<vmem>>, vector<8x8x128xf32>
    %288 = vector.shape_cast %287 : vector<8x8x128xf32> to vector<64x128xf32>
    %289 = arith.truncf %288 : vector<64x128xf32> to vector<64x128xbf16>
    %c0_73 = arith.constant 0 : index
    %c0_74 = arith.constant 0 : index
    %290 = vector.load %arg6[%c0_73, %c0_74] : memref<128x384xbf16, #tpu.memory_space<vmem>>, vector<128x384xbf16>
    %cst_75 = arith.constant dense<0.000000e+00> : vector<64x384xf32>
    %291 = tpu.matmul %289, %290, %cst_75 {dimension_numbers = #tpu.dot_dimension_numbers<[1], [0], [0], [1], [0, 0, 1, 1], [], []>} : vector<64x128xbf16>, vector<128x384xbf16>, vector<64x384xf32> -> vector<64x384xf32>
    %c0_76 = arith.constant 0 : index
    %c0_77 = arith.constant 0 : index
    %292 = vector.load %arg8[%c0_76, %c0_77] : memref<1x384xf32, #tpu.memory_space<vmem>>, vector<1x384xf32>
    %293 = vector.broadcast %292 : vector<1x384xf32> to vector<64x384xf32>
    %294 = arith.addf %291, %293 : vector<64x384xf32>
    %295 = vector.shape_cast %294 : vector<64x384xf32> to vector<8x8x384xf32>
    %c0_78 = arith.constant 0 : index
    %c0_79 = arith.constant 0 : index
    %c0_80 = arith.constant 0 : index
    %296 = vector.load %arg13[%c0_78, %c0_79, %c0_80] : memref<8x8x384xf32, #tpu.memory_space<vmem>>, vector<8x8x384xf32>
    tpu.vector_store %arg13[%c0_78, %c0_79, %c0_80], %295 {strides = array<i32>} : memref<8x8x384xf32, #tpu.memory_space<vmem>>, vector<8x8x384xf32>,
    %c0_81 = arith.constant 0 : index
    %c0_82 = arith.constant 0 : index
    %297 = vector.load %arg7[%c0_81, %c0_82] : memref<128x384xbf16, #tpu.memory_space<vmem>>, vector<128x384xbf16>
    %c0_83 = arith.constant 0 : index
    %c0_84 = arith.constant 0 : index
    %298 = vector.load %arg9[%c0_83, %c0_84] : memref<1x128xf32, #tpu.memory_space<vmem>>, vector<1x128xf32>
    %299 = vector.shape_cast %298 : vector<1x128xf32> to vector<1x128xf32>
    %300 = vector.broadcast %299 : vector<1x128xf32> to vector<8x128xf32>
    %cst_85 = arith.constant 0.000000e+00 : f32
    %301 = vector.broadcast %cst_85 : f32 to vector<8x128xf32>
    %c0_i32_86 = arith.constant 0 : i32
    %302 = arith.truncf %301 : vector<8x128xf32> to vector<8x128xbf16>
    %cst_87 = arith.constant dense<0.000000e+00> : vector<8x384xf32>
    %303 = tpu.matmul %302, %297, %cst_87 {dimension_numbers = #tpu.dot_dimension_numbers<[1], [0], [0], [1], [0, 0, 1, 1], [], []>} : vector<8x128xbf16>, vector<128x384xbf16>, vector<8x384xf32> -> vector<8x384xf32>
    %304 = arith.index_cast %c0_i32_86 : i32 to index
    %c0_88 = arith.constant 0 : index
    %c0_89 = arith.constant 0 : index
    %305 = vector.load %arg13[%304, %c0_88, %c0_89] : memref<8x8x384xf32, #tpu.memory_space<vmem>>, vector<1x8x384xf32>
    %306 = vector.shape_cast %305 : vector<1x8x384xf32> to vector<8x384xf32>
    %307 = vector.extract_strided_slice %306 {offsets = [0, 0], sizes = [8, 128], strides = [1, 1]} : vector<8x384xf32> to vector<8x128xf32>
    %308 = vector.extract_strided_slice %303 {offsets = [0, 0], sizes = [8, 128], strides = [1, 1]} : vector<8x384xf32> to vector<8x128xf32>
    %309 = arith.addf %307, %308 : vector<8x128xf32>
    %310 = arith.negf %309 : vector<8x128xf32>
    %311 = math.exp %310 : vector<8x128xf32>
    %cst_90 = arith.constant 1.000000e+00 : f32
    %312 = vector.broadcast %cst_90 : f32 to vector<8x128xf32>
    %313 = arith.addf %312, %311 : vector<8x128xf32>
    %314 = arith.divf %312, %313 : vector<8x128xf32>
    %315 = vector.extract_strided_slice %306 {offsets = [0, 128], sizes = [8, 128], strides = [1, 1]} : vector<8x384xf32> to vector<8x128xf32>
    %316 = vector.extract_strided_slice %303 {offsets = [0, 128], sizes = [8, 128], strides = [1, 1]} : vector<8x384xf32> to vector<8x128xf32>
    %317 = arith.addf %315, %316 : vector<8x128xf32>
    %318 = arith.negf %317 : vector<8x128xf32>
    %319 = math.exp %318 : vector<8x128xf32>
    %cst_91 = arith.constant 1.000000e+00 : f32
    %320 = vector.broadcast %cst_91 : f32 to vector<8x128xf32>
    %321 = arith.addf %320, %319 : vector<8x128xf32>
    %322 = arith.divf %320, %321 : vector<8x128xf32>
    %323 = vector.extract_strided_slice %306 {offsets = [0, 256], sizes = [8, 128], strides = [1, 1]} : vector<8x384xf32> to vector<8x128xf32>
    %324 = vector.extract_strided_slice %303 {offsets = [0, 256], sizes = [8, 128], strides = [1, 1]} : vector<8x384xf32> to vector<8x128xf32>
    %325 = arith.addf %324, %300 : vector<8x128xf32>
    %326 = arith.mulf %314, %325 : vector<8x128xf32>
    %327 = arith.addf %323, %326 : vector<8x128xf32>
    %328 = math.tanh %327 : vector<8x128xf32>
    %329 = arith.subf %301, %328 : vector<8x128xf32>
    %330 = arith.mulf %322, %329 : vector<8x128xf32>
    %331 = arith.addf %328, %330 : vector<8x128xf32>
    %c1_i32_92 = arith.constant 1 : i32
    %332 = arith.truncf %331 : vector<8x128xf32> to vector<8x128xbf16>
    %cst_93 = arith.constant dense<0.000000e+00> : vector<8x384xf32>
    %333 = tpu.matmul %332, %297, %cst_93 {dimension_numbers = #tpu.dot_dimension_numbers<[1], [0], [0], [1], [0, 0, 1, 1], [], []>} : vector<8x128xbf16>, vector<128x384xbf16>, vector<8x384xf32> -> vector<8x384xf32>
    %334 = arith.index_cast %c1_i32_92 : i32 to index
    %c0_94 = arith.constant 0 : index
    %c0_95 = arith.constant 0 : index
    %335 = vector.load %arg13[%334, %c0_94, %c0_95] : memref<8x8x384xf32, #tpu.memory_space<vmem>>, vector<1x8x384xf32>
    %336 = vector.shape_cast %335 : vector<1x8x384xf32> to vector<8x384xf32>
    %337 = vector.extract_strided_slice %336 {offsets = [0, 0], sizes = [8, 128], strides = [1, 1]} : vector<8x384xf32> to vector<8x128xf32>
    %338 = vector.extract_strided_slice %333 {offsets = [0, 0], sizes = [8, 128], strides = [1, 1]} : vector<8x384xf32> to vector<8x128xf32>
    %339 = arith.addf %337, %338 : vector<8x128xf32>
    %340 = arith.negf %339 : vector<8x128xf32>
    %341 = math.exp %340 : vector<8x128xf32>
    %cst_96 = arith.constant 1.000000e+00 : f32
    %342 = vector.broadcast %cst_96 : f32 to vector<8x128xf32>
    %343 = arith.addf %342, %341 : vector<8x128xf32>
    %344 = arith.divf %342, %343 : vector<8x128xf32>
    %345 = vector.extract_strided_slice %336 {offsets = [0, 128], sizes = [8, 128], strides = [1, 1]} : vector<8x384xf32> to vector<8x128xf32>
    %346 = vector.extract_strided_slice %333 {offsets = [0, 128], sizes = [8, 128], strides = [1, 1]} : vector<8x384xf32> to vector<8x128xf32>
    %347 = arith.addf %345, %346 : vector<8x128xf32>
    %348 = arith.negf %347 : vector<8x128xf32>
    %349 = math.exp %348 : vector<8x128xf32>
    %cst_97 = arith.constant 1.000000e+00 : f32
    %350 = vector.broadcast %cst_97 : f32 to vector<8x128xf32>
    %351 = arith.addf %350, %349 : vector<8x128xf32>
    %352 = arith.divf %350, %351 : vector<8x128xf32>
    %353 = vector.extract_strided_slice %336 {offsets = [0, 256], sizes = [8, 128], strides = [1, 1]} : vector<8x384xf32> to vector<8x128xf32>
    %354 = vector.extract_strided_slice %333 {offsets = [0, 256], sizes = [8, 128], strides = [1, 1]} : vector<8x384xf32> to vector<8x128xf32>
    %355 = arith.addf %354, %300 : vector<8x128xf32>
    %356 = arith.mulf %344, %355 : vector<8x128xf32>
    %357 = arith.addf %353, %356 : vector<8x128xf32>
    %358 = math.tanh %357 : vector<8x128xf32>
    %359 = arith.subf %331, %358 : vector<8x128xf32>
    %360 = arith.mulf %352, %359 : vector<8x128xf32>
    %361 = arith.addf %358, %360 : vector<8x128xf32>
    %c2_i32_98 = arith.constant 2 : i32
    %362 = arith.truncf %361 : vector<8x128xf32> to vector<8x128xbf16>
    %cst_99 = arith.constant dense<0.000000e+00> : vector<8x384xf32>
    %363 = tpu.matmul %362, %297, %cst_99 {dimension_numbers = #tpu.dot_dimension_numbers<[1], [0], [0], [1], [0, 0, 1, 1], [], []>} : vector<8x128xbf16>, vector<128x384xbf16>, vector<8x384xf32> -> vector<8x384xf32>
    %364 = arith.index_cast %c2_i32_98 : i32 to index
    %c0_100 = arith.constant 0 : index
    %c0_101 = arith.constant 0 : index
    %365 = vector.load %arg13[%364, %c0_100, %c0_101] : memref<8x8x384xf32, #tpu.memory_space<vmem>>, vector<1x8x384xf32>
    %366 = vector.shape_cast %365 : vector<1x8x384xf32> to vector<8x384xf32>
    %367 = vector.extract_strided_slice %366 {offsets = [0, 0], sizes = [8, 128], strides = [1, 1]} : vector<8x384xf32> to vector<8x128xf32>
    %368 = vector.extract_strided_slice %363 {offsets = [0, 0], sizes = [8, 128], strides = [1, 1]} : vector<8x384xf32> to vector<8x128xf32>
    %369 = arith.addf %367, %368 : vector<8x128xf32>
    %370 = arith.negf %369 : vector<8x128xf32>
    %371 = math.exp %370 : vector<8x128xf32>
    %cst_102 = arith.constant 1.000000e+00 : f32
    %372 = vector.broadcast %cst_102 : f32 to vector<8x128xf32>
    %373 = arith.addf %372, %371 : vector<8x128xf32>
    %374 = arith.divf %372, %373 : vector<8x128xf32>
    %375 = vector.extract_strided_slice %366 {offsets = [0, 128], sizes = [8, 128], strides = [1, 1]} : vector<8x384xf32> to vector<8x128xf32>
    %376 = vector.extract_strided_slice %363 {offsets = [0, 128], sizes = [8, 128], strides = [1, 1]} : vector<8x384xf32> to vector<8x128xf32>
    %377 = arith.addf %375, %376 : vector<8x128xf32>
    %378 = arith.negf %377 : vector<8x128xf32>
    %379 = math.exp %378 : vector<8x128xf32>
    %cst_103 = arith.constant 1.000000e+00 : f32
    %380 = vector.broadcast %cst_103 : f32 to vector<8x128xf32>
    %381 = arith.addf %380, %379 : vector<8x128xf32>
    %382 = arith.divf %380, %381 : vector<8x128xf32>
    %383 = vector.extract_strided_slice %366 {offsets = [0, 256], sizes = [8, 128], strides = [1, 1]} : vector<8x384xf32> to vector<8x128xf32>
    %384 = vector.extract_strided_slice %363 {offsets = [0, 256], sizes = [8, 128], strides = [1, 1]} : vector<8x384xf32> to vector<8x128xf32>
    %385 = arith.addf %384, %300 : vector<8x128xf32>
    %386 = arith.mulf %374, %385 : vector<8x128xf32>
    %387 = arith.addf %383, %386 : vector<8x128xf32>
    %388 = math.tanh %387 : vector<8x128xf32>
    %389 = arith.subf %361, %388 : vector<8x128xf32>
    %390 = arith.mulf %382, %389 : vector<8x128xf32>
    %391 = arith.addf %388, %390 : vector<8x128xf32>
    %c3_i32_104 = arith.constant 3 : i32
    %392 = arith.truncf %391 : vector<8x128xf32> to vector<8x128xbf16>
    %cst_105 = arith.constant dense<0.000000e+00> : vector<8x384xf32>
    %393 = tpu.matmul %392, %297, %cst_105 {dimension_numbers = #tpu.dot_dimension_numbers<[1], [0], [0], [1], [0, 0, 1, 1], [], []>} : vector<8x128xbf16>, vector<128x384xbf16>, vector<8x384xf32> -> vector<8x384xf32>
    %394 = arith.index_cast %c3_i32_104 : i32 to index
    %c0_106 = arith.constant 0 : index
    %c0_107 = arith.constant 0 : index
    %395 = vector.load %arg13[%394, %c0_106, %c0_107] : memref<8x8x384xf32, #tpu.memory_space<vmem>>, vector<1x8x384xf32>
    %396 = vector.shape_cast %395 : vector<1x8x384xf32> to vector<8x384xf32>
    %397 = vector.extract_strided_slice %396 {offsets = [0, 0], sizes = [8, 128], strides = [1, 1]} : vector<8x384xf32> to vector<8x128xf32>
    %398 = vector.extract_strided_slice %393 {offsets = [0, 0], sizes = [8, 128], strides = [1, 1]} : vector<8x384xf32> to vector<8x128xf32>
    %399 = arith.addf %397, %398 : vector<8x128xf32>
    %400 = arith.negf %399 : vector<8x128xf32>
    %401 = math.exp %400 : vector<8x128xf32>
    %cst_108 = arith.constant 1.000000e+00 : f32
    %402 = vector.broadcast %cst_108 : f32 to vector<8x128xf32>
    %403 = arith.addf %402, %401 : vector<8x128xf32>
    %404 = arith.divf %402, %403 : vector<8x128xf32>
    %405 = vector.extract_strided_slice %396 {offsets = [0, 128], sizes = [8, 128], strides = [1, 1]} : vector<8x384xf32> to vector<8x128xf32>
    %406 = vector.extract_strided_slice %393 {offsets = [0, 128], sizes = [8, 128], strides = [1, 1]} : vector<8x384xf32> to vector<8x128xf32>
    %407 = arith.addf %405, %406 : vector<8x128xf32>
    %408 = arith.negf %407 : vector<8x128xf32>
    %409 = math.exp %408 : vector<8x128xf32>
    %cst_109 = arith.constant 1.000000e+00 : f32
    %410 = vector.broadcast %cst_109 : f32 to vector<8x128xf32>
    %411 = arith.addf %410, %409 : vector<8x128xf32>
    %412 = arith.divf %410, %411 : vector<8x128xf32>
    %413 = vector.extract_strided_slice %396 {offsets = [0, 256], sizes = [8, 128], strides = [1, 1]} : vector<8x384xf32> to vector<8x128xf32>
    %414 = vector.extract_strided_slice %393 {offsets = [0, 256], sizes = [8, 128], strides = [1, 1]} : vector<8x384xf32> to vector<8x128xf32>
    %415 = arith.addf %414, %300 : vector<8x128xf32>
    %416 = arith.mulf %404, %415 : vector<8x128xf32>
    %417 = arith.addf %413, %416 : vector<8x128xf32>
    %418 = math.tanh %417 : vector<8x128xf32>
    %419 = arith.subf %391, %418 : vector<8x128xf32>
    %420 = arith.mulf %412, %419 : vector<8x128xf32>
    %421 = arith.addf %418, %420 : vector<8x128xf32>
    %c4_i32_110 = arith.constant 4 : i32
    %422 = arith.truncf %421 : vector<8x128xf32> to vector<8x128xbf16>
    %cst_111 = arith.constant dense<0.000000e+00> : vector<8x384xf32>
    %423 = tpu.matmul %422, %297, %cst_111 {dimension_numbers = #tpu.dot_dimension_numbers<[1], [0], [0], [1], [0, 0, 1, 1], [], []>} : vector<8x128xbf16>, vector<128x384xbf16>, vector<8x384xf32> -> vector<8x384xf32>
    %424 = arith.index_cast %c4_i32_110 : i32 to index
    %c0_112 = arith.constant 0 : index
    %c0_113 = arith.constant 0 : index
    %425 = vector.load %arg13[%424, %c0_112, %c0_113] : memref<8x8x384xf32, #tpu.memory_space<vmem>>, vector<1x8x384xf32>
    %426 = vector.shape_cast %425 : vector<1x8x384xf32> to vector<8x384xf32>
    %427 = vector.extract_strided_slice %426 {offsets = [0, 0], sizes = [8, 128], strides = [1, 1]} : vector<8x384xf32> to vector<8x128xf32>
    %428 = vector.extract_strided_slice %423 {offsets = [0, 0], sizes = [8, 128], strides = [1, 1]} : vector<8x384xf32> to vector<8x128xf32>
    %429 = arith.addf %427, %428 : vector<8x128xf32>
    %430 = arith.negf %429 : vector<8x128xf32>
    %431 = math.exp %430 : vector<8x128xf32>
    %cst_114 = arith.constant 1.000000e+00 : f32
    %432 = vector.broadcast %cst_114 : f32 to vector<8x128xf32>
    %433 = arith.addf %432, %431 : vector<8x128xf32>
    %434 = arith.divf %432, %433 : vector<8x128xf32>
    %435 = vector.extract_strided_slice %426 {offsets = [0, 128], sizes = [8, 128], strides = [1, 1]} : vector<8x384xf32> to vector<8x128xf32>
    %436 = vector.extract_strided_slice %423 {offsets = [0, 128], sizes = [8, 128], strides = [1, 1]} : vector<8x384xf32> to vector<8x128xf32>
    %437 = arith.addf %435, %436 : vector<8x128xf32>
    %438 = arith.negf %437 : vector<8x128xf32>
    %439 = math.exp %438 : vector<8x128xf32>
    %cst_115 = arith.constant 1.000000e+00 : f32
    %440 = vector.broadcast %cst_115 : f32 to vector<8x128xf32>
    %441 = arith.addf %440, %439 : vector<8x128xf32>
    %442 = arith.divf %440, %441 : vector<8x128xf32>
    %443 = vector.extract_strided_slice %426 {offsets = [0, 256], sizes = [8, 128], strides = [1, 1]} : vector<8x384xf32> to vector<8x128xf32>
    %444 = vector.extract_strided_slice %423 {offsets = [0, 256], sizes = [8, 128], strides = [1, 1]} : vector<8x384xf32> to vector<8x128xf32>
    %445 = arith.addf %444, %300 : vector<8x128xf32>
    %446 = arith.mulf %434, %445 : vector<8x128xf32>
    %447 = arith.addf %443, %446 : vector<8x128xf32>
    %448 = math.tanh %447 : vector<8x128xf32>
    %449 = arith.subf %421, %448 : vector<8x128xf32>
    %450 = arith.mulf %442, %449 : vector<8x128xf32>
    %451 = arith.addf %448, %450 : vector<8x128xf32>
    %c5_i32_116 = arith.constant 5 : i32
    %452 = arith.truncf %451 : vector<8x128xf32> to vector<8x128xbf16>
    %cst_117 = arith.constant dense<0.000000e+00> : vector<8x384xf32>
    %453 = tpu.matmul %452, %297, %cst_117 {dimension_numbers = #tpu.dot_dimension_numbers<[1], [0], [0], [1], [0, 0, 1, 1], [], []>} : vector<8x128xbf16>, vector<128x384xbf16>, vector<8x384xf32> -> vector<8x384xf32>
    %454 = arith.index_cast %c5_i32_116 : i32 to index
    %c0_118 = arith.constant 0 : index
    %c0_119 = arith.constant 0 : index
    %455 = vector.load %arg13[%454, %c0_118, %c0_119] : memref<8x8x384xf32, #tpu.memory_space<vmem>>, vector<1x8x384xf32>
    %456 = vector.shape_cast %455 : vector<1x8x384xf32> to vector<8x384xf32>
    %457 = vector.extract_strided_slice %456 {offsets = [0, 0], sizes = [8, 128], strides = [1, 1]} : vector<8x384xf32> to vector<8x128xf32>
    %458 = vector.extract_strided_slice %453 {offsets = [0, 0], sizes = [8, 128], strides = [1, 1]} : vector<8x384xf32> to vector<8x128xf32>
    %459 = arith.addf %457, %458 : vector<8x128xf32>
    %460 = arith.negf %459 : vector<8x128xf32>
    %461 = math.exp %460 : vector<8x128xf32>
    %cst_120 = arith.constant 1.000000e+00 : f32
    %462 = vector.broadcast %cst_120 : f32 to vector<8x128xf32>
    %463 = arith.addf %462, %461 : vector<8x128xf32>
    %464 = arith.divf %462, %463 : vector<8x128xf32>
    %465 = vector.extract_strided_slice %456 {offsets = [0, 128], sizes = [8, 128], strides = [1, 1]} : vector<8x384xf32> to vector<8x128xf32>
    %466 = vector.extract_strided_slice %453 {offsets = [0, 128], sizes = [8, 128], strides = [1, 1]} : vector<8x384xf32> to vector<8x128xf32>
    %467 = arith.addf %465, %466 : vector<8x128xf32>
    %468 = arith.negf %467 : vector<8x128xf32>
    %469 = math.exp %468 : vector<8x128xf32>
    %cst_121 = arith.constant 1.000000e+00 : f32
    %470 = vector.broadcast %cst_121 : f32 to vector<8x128xf32>
    %471 = arith.addf %470, %469 : vector<8x128xf32>
    %472 = arith.divf %470, %471 : vector<8x128xf32>
    %473 = vector.extract_strided_slice %456 {offsets = [0, 256], sizes = [8, 128], strides = [1, 1]} : vector<8x384xf32> to vector<8x128xf32>
    %474 = vector.extract_strided_slice %453 {offsets = [0, 256], sizes = [8, 128], strides = [1, 1]} : vector<8x384xf32> to vector<8x128xf32>
    %475 = arith.addf %474, %300 : vector<8x128xf32>
    %476 = arith.mulf %464, %475 : vector<8x128xf32>
    %477 = arith.addf %473, %476 : vector<8x128xf32>
    %478 = math.tanh %477 : vector<8x128xf32>
    %479 = arith.subf %451, %478 : vector<8x128xf32>
    %480 = arith.mulf %472, %479 : vector<8x128xf32>
    %481 = arith.addf %478, %480 : vector<8x128xf32>
    %c6_i32_122 = arith.constant 6 : i32
    %482 = arith.truncf %481 : vector<8x128xf32> to vector<8x128xbf16>
    %cst_123 = arith.constant dense<0.000000e+00> : vector<8x384xf32>
    %483 = tpu.matmul %482, %297, %cst_123 {dimension_numbers = #tpu.dot_dimension_numbers<[1], [0], [0], [1], [0, 0, 1, 1], [], []>} : vector<8x128xbf16>, vector<128x384xbf16>, vector<8x384xf32> -> vector<8x384xf32>
    %484 = arith.index_cast %c6_i32_122 : i32 to index
    %c0_124 = arith.constant 0 : index
    %c0_125 = arith.constant 0 : index
    %485 = vector.load %arg13[%484, %c0_124, %c0_125] : memref<8x8x384xf32, #tpu.memory_space<vmem>>, vector<1x8x384xf32>
    %486 = vector.shape_cast %485 : vector<1x8x384xf32> to vector<8x384xf32>
    %487 = vector.extract_strided_slice %486 {offsets = [0, 0], sizes = [8, 128], strides = [1, 1]} : vector<8x384xf32> to vector<8x128xf32>
    %488 = vector.extract_strided_slice %483 {offsets = [0, 0], sizes = [8, 128], strides = [1, 1]} : vector<8x384xf32> to vector<8x128xf32>
    %489 = arith.addf %487, %488 : vector<8x128xf32>
    %490 = arith.negf %489 : vector<8x128xf32>
    %491 = math.exp %490 : vector<8x128xf32>
    %cst_126 = arith.constant 1.000000e+00 : f32
    %492 = vector.broadcast %cst_126 : f32 to vector<8x128xf32>
    %493 = arith.addf %492, %491 : vector<8x128xf32>
    %494 = arith.divf %492, %493 : vector<8x128xf32>
    %495 = vector.extract_strided_slice %486 {offsets = [0, 128], sizes = [8, 128], strides = [1, 1]} : vector<8x384xf32> to vector<8x128xf32>
    %496 = vector.extract_strided_slice %483 {offsets = [0, 128], sizes = [8, 128], strides = [1, 1]} : vector<8x384xf32> to vector<8x128xf32>
    %497 = arith.addf %495, %496 : vector<8x128xf32>
    %498 = arith.negf %497 : vector<8x128xf32>
    %499 = math.exp %498 : vector<8x128xf32>
    %cst_127 = arith.constant 1.000000e+00 : f32
    %500 = vector.broadcast %cst_127 : f32 to vector<8x128xf32>
    %501 = arith.addf %500, %499 : vector<8x128xf32>
    %502 = arith.divf %500, %501 : vector<8x128xf32>
    %503 = vector.extract_strided_slice %486 {offsets = [0, 256], sizes = [8, 128], strides = [1, 1]} : vector<8x384xf32> to vector<8x128xf32>
    %504 = vector.extract_strided_slice %483 {offsets = [0, 256], sizes = [8, 128], strides = [1, 1]} : vector<8x384xf32> to vector<8x128xf32>
    %505 = arith.addf %504, %300 : vector<8x128xf32>
    %506 = arith.mulf %494, %505 : vector<8x128xf32>
    %507 = arith.addf %503, %506 : vector<8x128xf32>
    %508 = math.tanh %507 : vector<8x128xf32>
    %509 = arith.subf %481, %508 : vector<8x128xf32>
    %510 = arith.mulf %502, %509 : vector<8x128xf32>
    %511 = arith.addf %508, %510 : vector<8x128xf32>
    %c7_i32_128 = arith.constant 7 : i32
    %512 = arith.truncf %511 : vector<8x128xf32> to vector<8x128xbf16>
    %cst_129 = arith.constant dense<0.000000e+00> : vector<8x384xf32>
    %513 = tpu.matmul %512, %297, %cst_129 {dimension_numbers = #tpu.dot_dimension_numbers<[1], [0], [0], [1], [0, 0, 1, 1], [], []>} : vector<8x128xbf16>, vector<128x384xbf16>, vector<8x384xf32> -> vector<8x384xf32>
    %514 = arith.index_cast %c7_i32_128 : i32 to index
    %c0_130 = arith.constant 0 : index
    %c0_131 = arith.constant 0 : index
    %515 = vector.load %arg13[%514, %c0_130, %c0_131] : memref<8x8x384xf32, #tpu.memory_space<vmem>>, vector<1x8x384xf32>
    %516 = vector.shape_cast %515 : vector<1x8x384xf32> to vector<8x384xf32>
    %517 = vector.extract_strided_slice %516 {offsets = [0, 0], sizes = [8, 128], strides = [1, 1]} : vector<8x384xf32> to vector<8x128xf32>
    %518 = vector.extract_strided_slice %513 {offsets = [0, 0], sizes = [8, 128], strides = [1, 1]} : vector<8x384xf32> to vector<8x128xf32>
    %519 = arith.addf %517, %518 : vector<8x128xf32>
    %520 = arith.negf %519 : vector<8x128xf32>
    %521 = math.exp %520 : vector<8x128xf32>
    %cst_132 = arith.constant 1.000000e+00 : f32
    %522 = vector.broadcast %cst_132 : f32 to vector<8x128xf32>
    %523 = arith.addf %522, %521 : vector<8x128xf32>
    %524 = arith.divf %522, %523 : vector<8x128xf32>
    %525 = vector.extract_strided_slice %516 {offsets = [0, 128], sizes = [8, 128], strides = [1, 1]} : vector<8x384xf32> to vector<8x128xf32>
    %526 = vector.extract_strided_slice %513 {offsets = [0, 128], sizes = [8, 128], strides = [1, 1]} : vector<8x384xf32> to vector<8x128xf32>
    %527 = arith.addf %525, %526 : vector<8x128xf32>
    %528 = arith.negf %527 : vector<8x128xf32>
    %529 = math.exp %528 : vector<8x128xf32>
    %cst_133 = arith.constant 1.000000e+00 : f32
    %530 = vector.broadcast %cst_133 : f32 to vector<8x128xf32>
    %531 = arith.addf %530, %529 : vector<8x128xf32>
    %532 = arith.divf %530, %531 : vector<8x128xf32>
    %533 = vector.extract_strided_slice %516 {offsets = [0, 256], sizes = [8, 128], strides = [1, 1]} : vector<8x384xf32> to vector<8x128xf32>
    %534 = vector.extract_strided_slice %513 {offsets = [0, 256], sizes = [8, 128], strides = [1, 1]} : vector<8x384xf32> to vector<8x128xf32>
    %535 = arith.addf %534, %300 : vector<8x128xf32>
    %536 = arith.mulf %524, %535 : vector<8x128xf32>
    %537 = arith.addf %533, %536 : vector<8x128xf32>
    %538 = math.tanh %537 : vector<8x128xf32>
    %539 = arith.subf %511, %538 : vector<8x128xf32>
    %540 = arith.mulf %532, %539 : vector<8x128xf32>
    %541 = arith.addf %538, %540 : vector<8x128xf32>
    %c8_i32_134 = arith.constant 8 : i32
    %542 = arith.truncf %541 : vector<8x128xf32> to vector<8x128xbf16>
    %c0_135 = arith.constant 0 : index
    %c0_136 = arith.constant 0 : index
    %543 = vector.load %arg10[%c0_135, %c0_136] : memref<128x128xbf16, #tpu.memory_space<vmem>>, vector<128x128xbf16>
    %cst_137 = arith.constant dense<0.000000e+00> : vector<8x128xf32>
    %544 = tpu.matmul %542, %543, %cst_137 {dimension_numbers = #tpu.dot_dimension_numbers<[1], [0], [0], [1], [0, 0, 1, 1], [], []>} : vector<8x128xbf16>, vector<128x128xbf16>, vector<8x128xf32> -> vector<8x128xf32>
    %c0_138 = arith.constant 0 : index
    %c0_139 = arith.constant 0 : index
    %545 = vector.load %arg11[%c0_138, %c0_139] : memref<1x128xf32, #tpu.memory_space<vmem>>, vector<1x128xf32>
    %546 = vector.broadcast %545 : vector<1x128xf32> to vector<8x128xf32>
    %547 = arith.addf %544, %546 : vector<8x128xf32>
    %c0_140 = arith.constant 0 : index
    %c0_141 = arith.constant 0 : index
    %548 = vector.load %arg12[%c0_140, %c0_141] : memref<8x128xf32, #tpu.memory_space<vmem>>, vector<8x128xf32>
    tpu.vector_store %arg12[%c0_140, %c0_141], %547 {strides = array<i32>} : memref<8x128xf32, #tpu.memory_space<vmem>>, vector<8x128xf32>,
    return
  }
  func.func @transform_0(%arg0: i32) -> (i32, i32, i32) {
    %c0_i32 = arith.constant 0 : i32
    %c0_i32_0 = arith.constant 0 : i32
    %c0_i32_1 = arith.constant 0 : i32
    %c0_i32_2 = arith.constant 0 : i32
    return %c0_i32, %c0_i32_0, %c0_i32_1 : i32, i32, i32
  }
  func.func @transform_1(%arg0: i32) -> (i32, i32) {
    %c0_i32 = arith.constant 0 : i32
    %c0_i32_0 = arith.constant 0 : i32
    %c0_i32_1 = arith.constant 0 : i32
    return %c0_i32, %c0_i32_0 : i32, i32
  }
  func.func @transform_2(%arg0: i32) -> (i32, i32) {
    %c0_i32 = arith.constant 0 : i32
    %c0_i32_0 = arith.constant 0 : i32
    %c0_i32_1 = arith.constant 0 : i32
    return %c0_i32, %c0_i32_0 : i32, i32
  }
  func.func @transform_3(%arg0: i32) -> (i32, i32) {
    %c0_i32 = arith.constant 0 : i32
    %c0_i32_0 = arith.constant 0 : i32
    %c0_i32_1 = arith.constant 0 : i32
    return %c0_i32, %c0_i32_0 : i32, i32
  }
  func.func @transform_4(%arg0: i32) -> (i32, i32) {
    %c0_i32 = arith.constant 0 : i32
    %c0_i32_0 = arith.constant 0 : i32
    %c0_i32_1 = arith.constant 0 : i32
    return %c0_i32, %c0_i32_0 : i32, i32
  }
  func.func @transform_5(%arg0: i32) -> (i32, i32) {
    %c0_i32 = arith.constant 0 : i32
    %c0_i32_0 = arith.constant 0 : i32
    %c0_i32_1 = arith.constant 0 : i32
    return %c0_i32, %c0_i32_0 : i32, i32
  }
  func.func @transform_6(%arg0: i32) -> (i32, i32) {
    %c0_i32 = arith.constant 0 : i32
    %c0_i32_0 = arith.constant 0 : i32
    %c0_i32_1 = arith.constant 0 : i32
    return %c0_i32, %c0_i32_0 : i32, i32
  }
  func.func @transform_7(%arg0: i32) -> (i32, i32) {
    %c0_i32 = arith.constant 0 : i32
    %c0_i32_0 = arith.constant 0 : i32
    %c0_i32_1 = arith.constant 0 : i32
    return %c0_i32, %c0_i32_0 : i32, i32
  }
  func.func @transform_8(%arg0: i32) -> (i32, i32) {
    %c0_i32 = arith.constant 0 : i32
    %c0_i32_0 = arith.constant 0 : i32
    %c0_i32_1 = arith.constant 0 : i32
    return %c0_i32, %c0_i32_0 : i32, i32
  }
  func.func @transform_9(%arg0: i32) -> (i32, i32) {
    %c0_i32 = arith.constant 0 : i32
    %c0_i32_0 = arith.constant 0 : i32
    %c0_i32_1 = arith.constant 0 : i32
    return %c0_i32, %c0_i32_0 : i32, i32
  }
  func.func @transform_10(%arg0: i32) -> (i32, i32) {
    %c0_i32 = arith.constant 0 : i32
    %c0_i32_0 = arith.constant 0 : i32
    %c0_i32_1 = arith.constant 0 : i32
    return %c0_i32, %c0_i32_0 : i32, i32
  }
  func.func @transform_11(%arg0: i32) -> (i32, i32) {
    %c0_i32 = arith.constant 0 : i32
    %c0_i32_0 = arith.constant 0 : i32
    %c0_i32_1 = arith.constant 0 : i32
    return %c0_i32, %c0_i32_0 : i32, i32
  }
}

</mosaic_0001>

<llo_original>
// kernel: tpu_custom_call.1
$region0: #{tpu_custom_call.1}
  #allocation0 [shape = 'u32[]', space=smem, size = 0x4, offset = 0x4, fixed_abs, tag = 'smem constant byte address 0x4 - core index']
  #allocation1 [shape = 'u32[144,128]{1,0:T(1,128)}', space=vmem, size = 0x12000, scoped, tag = 'internal scratch']
  #allocation2 [shape = 'f32[8,8,384]{2,1,0:T(8,128)}', space=vmem, size = 0x18000, scoped, tag = 'scratch operand']
  #allocation3 [shape = 'f32[8,8,128]{2,1,0:T(8,128)}', space=vmem, size = 0x8000, scoped, tag = 'scratch operand']
  %s0 = inlined_call_operand.hbm [shape: f32[8,8,128], index: 0, kind: input, shape index: {}]
  %s1 = inlined_call_operand.hbm [shape: bf16[128,384], index: 1, kind: input, shape index: {}]
  %s2 = inlined_call_operand.hbm [shape: bf16[128,384], index: 2, kind: input, shape index: {}]
  %s3 = inlined_call_operand.vmem [shape: f32[1,384], index: 3, kind: input, shape index: {}]
  %s4 = inlined_call_operand.vmem [shape: f32[1,128], index: 4, kind: input, shape index: {}]
  %s5 = inlined_call_operand.hbm [shape: bf16[128,384], index: 5, kind: input, shape index: {}]
  %s6 = inlined_call_operand.hbm [shape: bf16[128,384], index: 6, kind: input, shape index: {}]
  %s7 = inlined_call_operand.vmem [shape: f32[1,384], index: 7, kind: input, shape index: {}]
  %s8 = inlined_call_operand.vmem [shape: f32[1,128], index: 8, kind: input, shape index: {}]
  %s9 = inlined_call_operand.hbm [shape: bf16[128,128], index: 9, kind: input, shape index: {}]
  %s10 = inlined_call_operand.vmem [shape: f32[1,128], index: 10, kind: input, shape index: {}]
  %s11 = inlined_call_operand.hbm [shape: f32[8,128], index: 11, kind: output, shape index: {}]
  %s12 = sld [smem:[#allocation0]]
  $region78: #{tpu_custom_call.1} parent=0
    _
  %s14 = ssub.s32 1, %s12
  %s15 = scalar_select 0, %s14, %s12
  $region1: #{tpu_custom_call.1} parent=0
    #allocation4 [shape = 'u8[32768]{0}', space=vmem, size = 0x8000, scoped, tag = 'input window, operand 0, single buffered']
    #allocation5 [shape = 's32[1]{0}', space=sflag, size = 0x4, scoped, tag = 'scoped memory for tpu_custom_call.1']
    #allocation6 [shape = 's32[1]{0}', space=sflag, size = 0x4, scoped, tag = 'scoped memory for tpu_custom_call.1']
    #allocation7 [shape = 'u8[98304]{0}', space=vmem, size = 0x18000, scoped, tag = 'input window, operand 1, single buffered']
    #allocation8 [shape = 's32[1]{0}', space=sflag, size = 0x4, scoped, tag = 'scoped memory for tpu_custom_call.1']
    #allocation9 [shape = 'u8[98304]{0}', space=vmem, size = 0x18000, scoped, tag = 'input window, operand 2, single buffered']
    #allocation10 [shape = 'u8[98304]{0}', space=vmem, size = 0x18000, scoped, tag = 'input window, operand 5, single buffered']
    #allocation11 [shape = 's32[1]{0}', space=sflag, size = 0x4, scoped, tag = 'scoped memory for tpu_custom_call.1']
    #allocation12 [shape = 'u8[98304]{0}', space=vmem, size = 0x18000, scoped, tag = 'input window, operand 6, single buffered']
    #allocation13 [shape = 'u8[32768]{0}', space=vmem, size = 0x8000, scoped, tag = 'input window, operand 9, single buffered']
    #allocation14 [shape = 's32[1]{0}', space=sflag, size = 0x4, scoped, tag = 'scoped memory for tpu_custom_call.1']
    #allocation15 [shape = 'u8[4096]{0}', space=vmem, size = 0x1000, scoped, tag = 'output window, operand 0, single buffered']
    %16 = vsyncpa [#allocation5], 0
    %17 = vsyncpa [#allocation8], 0
    %18 = vsyncpa [#allocation11], 0
    %19 = vsyncpa [#allocation14], 0
    %20 = vsyncpa [#allocation6], 0
    // Predicated region
    $region2: #{tpu_custom_call.1} parent=1 // pred_check
      _
    $region3: #{tpu_custom_call.1} parent=1 // pred_check_branch
      %22 = sbr.rel (0) target = $region5
    $region4: #{tpu_custom_call.1} parent=1 // pred_region
      %s24 = ssub.s32 1024, 1024
      %25 = vsyncadd [#allocation5], %s24
      %s26 = sshll.u32 [#allocation4], 4
      %s27 = int_to_ptr.vmem [resolvable:$true] %s26
      %32 = dma.hbm_to_vmem [thread:$0]  %s0, 1024, %s27, [#allocation5], 128, 128, 8
    $region5: #{tpu_custom_call.1} parent=1 // pred_fallthru
      _
    // Predicated region
    $region6: #{tpu_custom_call.1} parent=1 // pred_check
      _
    $region7: #{tpu_custom_call.1} parent=1 // pred_check_branch
      %34 = sbr.rel (0) target = $region9
    $region8: #{tpu_custom_call.1} parent=1 // pred_region
      %s36 = ssub.s32 3072, 3072
      %37 = vsyncadd [#allocation8], %s36
      %s38 = sshll.u32 [#allocation7], 4
      %s39 = int_to_ptr.vmem [resolvable:$true] %s38
      %44 = dma.hbm_to_vmem [thread:$0]  %s1, 3072, %s39, [#allocation8], 192, 192, 12
    $region9: #{tpu_custom_call.1} parent=1 // pred_fallthru
      _
    // Predicated region
    $region10: #{tpu_custom_call.1} parent=1 // pred_check
      _
    $region11: #{tpu_custom_call.1} parent=1 // pred_check_branch
      %46 = sbr.rel (0) target = $region13
    $region12: #{tpu_custom_call.1} parent=1 // pred_region
      %s48 = ssub.s32 3072, 3072
      %49 = vsyncadd [#allocation8], %s48
      %s50 = sshll.u32 [#allocation9], 4
      %s51 = int_to_ptr.vmem [resolvable:$true] %s50
      %56 = dma.hbm_to_vmem [thread:$0]  %s2, 3072, %s51, [#allocation8], 192, 192, 12
    $region13: #{tpu_custom_call.1} parent=1 // pred_fallthru
      _
    // Predicated region
    $region14: #{tpu_custom_call.1} parent=1 // pred_check
      _
    $region15: #{tpu_custom_call.1} parent=1 // pred_check_branch
      %58 = sbr.rel (0) target = $region17
    $region16: #{tpu_custom_call.1} parent=1 // pred_region
      _
    $region17: #{tpu_custom_call.1} parent=1 // pred_fallthru
      _
    // Predicated region
    $region18: #{tpu_custom_call.1} parent=1 // pred_check
      _
    $region19: #{tpu_custom_call.1} parent=1 // pred_check_branch
      %60 = sbr.rel (0) target = $region21
    $region20: #{tpu_custom_call.1} parent=1 // pred_region
      _
    $region21: #{tpu_custom_call.1} parent=1 // pred_fallthru
      _
    // Predicated region
    $region22: #{tpu_custom_call.1} parent=1 // pred_check
      _
    $region23: #{tpu_custom_call.1} parent=1 // pred_check_branch
      %62 = sbr.rel (0) target = $region25
    $region24: #{tpu_custom_call.1} parent=1 // pred_region
      %s64 = ssub.s32 3072, 3072
      %65 = vsyncadd [#allocation11], %s64
      %s66 = sshll.u32 [#allocation10], 4
      %s67 = int_to_ptr.vmem [resolvable:$true] %s66
      %72 = dma.hbm_to_vmem [thread:$0]  %s5, 3072, %s67, [#allocation11], 192, 192, 12
    $region25: #{tpu_custom_call.1} parent=1 // pred_fallthru
      _
    // Predicated region
    $region26: #{tpu_custom_call.1} parent=1 // pred_check
      _
    $region27: #{tpu_custom_call.1} parent=1 // pred_check_branch
      %74 = sbr.rel (0) target = $region29
    $region28: #{tpu_custom_call.1} parent=1 // pred_region
      %s76 = ssub.s32 3072, 3072
      %77 = vsyncadd [#allocation11], %s76
      %s78 = sshll.u32 [#allocation12], 4
      %s79 = int_to_ptr.vmem [resolvable:$true] %s78
      %84 = dma.hbm_to_vmem [thread:$0]  %s6, 3072, %s79, [#allocation11], 192, 192, 12
    $region29: #{tpu_custom_call.1} parent=1 // pred_fallthru
      _
    // Predicated region
    $region30: #{tpu_custom_call.1} parent=1 // pred_check
      _
    $region31: #{tpu_custom_call.1} parent=1 // pred_check_branch
      %86 = sbr.rel (0) target = $region33
    $region32: #{tpu_custom_call.1} parent=1 // pred_region
      _
    $region33: #{tpu_custom_call.1} parent=1 // pred_fallthru
      _
    // Predicated region
    $region34: #{tpu_custom_call.1} parent=1 // pred_check
      _
    $region35: #{tpu_custom_call.1} parent=1 // pred_check_branch
      %88 = sbr.rel (0) target = $region37
    $region36: #{tpu_custom_call.1} parent=1 // pred_region
      _
    $region37: #{tpu_custom_call.1} parent=1 // pred_fallthru
      _
    // Predicated region
    $region38: #{tpu_custom_call.1} parent=1 // pred_check
      _
    $region39: #{tpu_custom_call.1} parent=1 // pred_check_branch
      %90 = sbr.rel (0) target = $region41
    $region40: #{tpu_custom_call.1} parent=1 // pred_region
      %s92 = ssub.s32 1024, 1024
      %93 = vsyncadd [#allocation14], %s92
      %s94 = sshll.u32 [#allocation13], 4
      %s95 = int_to_ptr.vmem [resolvable:$true] %s94
      %100 = dma.hbm_to_vmem [thread:$0]  %s9, 1024, %s95, [#allocation14], 64, 64, 4
    $region41: #{tpu_custom_call.1} parent=1 // pred_fallthru
      _
    // Predicated region
    $region42: #{tpu_custom_call.1} parent=1 // pred_check
      _
    $region43: #{tpu_custom_call.1} parent=1 // pred_check_branch
      %102 = sbr.rel (0) target = $region45
    $region44: #{tpu_custom_call.1} parent=1 // pred_region
      _
    $region45: #{tpu_custom_call.1} parent=1 // pred_fallthru
      _
    // Predicated region
    $region46: #{tpu_custom_call.1} parent=1 // pred_check
      _
    $region47: #{tpu_custom_call.1} parent=1 // pred_check_branch
      %104 = sbr.rel (0) target = $region49
    $region48: #{tpu_custom_call.1} parent=1 // pred_region
      %105 = dma.done [#allocation5], 1024
    $region49: #{tpu_custom_call.1} parent=1 // pred_fallthru
      _
    // Predicated region
    $region50: #{tpu_custom_call.1} parent=1 // pred_check
      _
    $region51: #{tpu_custom_call.1} parent=1 // pred_check_branch
      %107 = sbr.rel (0) target = $region53
    $region52: #{tpu_custom_call.1} parent=1 // pred_region
      %108 = dma.done [#allocation8], 3072
    $region53: #{tpu_custom_call.1} parent=1 // pred_fallthru
      _
    // Predicated region
    $region54: #{tpu_custom_call.1} parent=1 // pred_check
      _
    $region55: #{tpu_custom_call.1} parent=1 // pred_check_branch
      %110 = sbr.rel (0) target = $region57
    $region56: #{tpu_custom_call.1} parent=1 // pred_region
      %111 = dma.done [#allocation8], 3072
    $region57: #{tpu_custom_call.1} parent=1 // pred_fallthru
      _
    // Predicated region
    $region58: #{tpu_custom_call.1} parent=1 // pred_check
      _
    $region59: #{tpu_custom_call.1} parent=1 // pred_check_branch
      %113 = sbr.rel (0) target = $region61
    $region60: #{tpu_custom_call.1} parent=1 // pred_region
      %114 = dma.done [#allocation11], 3072
    $region61: #{tpu_custom_call.1} parent=1 // pred_fallthru
      _
    // Predicated region
    $region62: #{tpu_custom_call.1} parent=1 // pred_check
      _
    $region63: #{tpu_custom_call.1} parent=1 // pred_check_branch
      %116 = sbr.rel (0) target = $region65
    $region64: #{tpu_custom_call.1} parent=1 // pred_region
      %117 = dma.done [#allocation11], 3072
    $region65: #{tpu_custom_call.1} parent=1 // pred_fallthru
      _
    // Predicated region
    $region66: #{tpu_custom_call.1} parent=1 // pred_check
      _
    $region67: #{tpu_custom_call.1} parent=1 // pred_check_branch
      %119 = sbr.rel (0) target = $region69
    $region68: #{tpu_custom_call.1} parent=1 // pred_region
      %120 = dma.done [#allocation14], 1024
    $region69: #{tpu_custom_call.1} parent=1 // pred_fallthru
      _
    %v122 = vld [vmem:[#allocation4] sm:$0xff]
    %v123 = vld [vmem:[#allocation4 + $0x8] sm:$0xff]
    %v124 = vld [vmem:[#allocation4 + $0x10] sm:$0xff]
    %v125 = vld [vmem:[#allocation4 + $0x18] sm:$0xff]
    %v126 = vld [vmem:[#allocation4 + $0x20] sm:$0xff]
    %v127 = vld [vmem:[#allocation4 + $0x28] sm:$0xff]
    %v128 = vld [vmem:[#allocation4 + $0x30] sm:$0xff]
    %v129 = vld [vmem:[#allocation4 + $0x38] sm:$0xff]
    %v130 = vpack.c.bf16 %v123, %v122
    %v131 = vpack.c.bf16 %v125, %v124
    %v132 = vpack.c.bf16 %v127, %v126
    %v133 = vpack.c.bf16 %v129, %v128
    %v134 = vld [vmem:[#allocation7] sm:$0xff]
    %v135 = vld [vmem:[#allocation7 + $0x8] sm:$0xf]
    %v136 = vld [vmem:[#allocation7 + $0xc] sm:$0xff]
    %v137 = vld [vmem:[#allocation7 + $0x14] sm:$0xf]
    %v138 = vld [vmem:[#allocation7 + $0x18] sm:$0xff]
    %v139 = vld [vmem:[#allocation7 + $0x20] sm:$0xf]
    %v140 = vld [vmem:[#allocation7 + $0x24] sm:$0xff]
    %v141 = vld [vmem:[#allocation7 + $0x2c] sm:$0xf]
    %v142 = vld [vmem:[#allocation7 + $0x30] sm:$0xff]
    %v143 = vld [vmem:[#allocation7 + $0x38] sm:$0xf]
    %v144 = vld [vmem:[#allocation7 + $0x3c] sm:$0xff]
    %v145 = vld [vmem:[#allocation7 + $0x44] sm:$0xf]
    %v146 = vld [vmem:[#allocation7 + $0x48] sm:$0xff]
    %v147 = vld [vmem:[#allocation7 + $0x50] sm:$0xf]
    %v148 = vld [vmem:[#allocation7 + $0x54] sm:$0xff]
    %v149 = vld [vmem:[#allocation7 + $0x5c] sm:$0xf]
    %v150 = vld [vmem:[#allocation7 + $0x60] sm:$0xff]
    %v151 = vld [vmem:[#allocation7 + $0x68] sm:$0xf]
    %v152 = vld [vmem:[#allocation7 + $0x6c] sm:$0xff]
    %v153 = vld [vmem:[#allocation7 + $0x74] sm:$0xf]
    %v154 = vld [vmem:[#allocation7 + $0x78] sm:$0xff]
    %v155 = vld [vmem:[#allocation7 + $0x80] sm:$0xf]
    %v156 = vld [vmem:[#allocation7 + $0x84] sm:$0xff]
    %v157 = vld [vmem:[#allocation7 + $0x8c] sm:$0xf]
    %v158 = vld [vmem:[#allocation7 + $0x90] sm:$0xff]
    %v159 = vld [vmem:[#allocation7 + $0x98] sm:$0xf]
    %v160 = vld [vmem:[#allocation7 + $0x9c] sm:$0xff]
    %v161 = vld [vmem:[#allocation7 + $0xa4] sm:$0xf]
    %v162 = vld [vmem:[#allocation7 + $0xa8] sm:$0xff]
    %v163 = vld [vmem:[#allocation7 + $0xb0] sm:$0xf]
    %v164 = vld [vmem:[#allocation7 + $0xb4] sm:$0xff]
    %v165 = vld [vmem:[#allocation7 + $0xbc] sm:$0xf]
    %v166 = vld [vmem:[%s3] sm:$0x7]
    %v168 = vlaneseq
    %v169 = vshrl.u32 %v168, 7
    %v170 = vsub.s32 0, %v169
    %v171 = vrot.slane %v166, %v170
    %v172 = vlaneseq
    %v173 = vshrl.u32 %v172, 7
    %v174 = vsub.s32 1, %v173
    %v175 = vrot.slane %v166, %v174
    %v176 = vlaneseq
    %v177 = vshrl.u32 %v176, 7
    %v178 = vsub.s32 2, %v177
    %v179 = vrot.slane %v166, %v178
    %v215 = vunpack.c.l.b16 %v134
    %v216 = vunpack.c.h.b16 %v134
    %v217 = vunpack.c.l.b16 %v135
    %v218 = vunpack.c.l.b16 %v136
    %v219 = vunpack.c.h.b16 %v136
    %v220 = vunpack.c.l.b16 %v137
    %v221 = vunpack.c.l.b16 %v138
    %v222 = vunpack.c.h.b16 %v138
    %v223 = vunpack.c.l.b16 %v139
    %v224 = vunpack.c.l.b16 %v140
    %v225 = vunpack.c.h.b16 %v140
    %v226 = vunpack.c.l.b16 %v141
    %v227 = vunpack.c.l.b16 %v142
    %v228 = vunpack.c.h.b16 %v142
    %v229 = vunpack.c.l.b16 %v143
    %v230 = vunpack.c.l.b16 %v144
    %v231 = vunpack.c.h.b16 %v144
    %v232 = vunpack.c.l.b16 %v145
    %v233 = vunpack.c.l.b16 %v146
    %v234 = vunpack.c.h.b16 %v146
    %v235 = vunpack.c.l.b16 %v147
    %v236 = vunpack.c.l.b16 %v148
    %v237 = vunpack.c.h.b16 %v148
    %v238 = vunpack.c.l.b16 %v149
    %v239 = vunpack.c.l.b16 %v150
    %v240 = vunpack.c.h.b16 %v150
    %v241 = vunpack.c.l.b16 %v151
    %v242 = vunpack.c.l.b16 %v152
    %v243 = vunpack.c.h.b16 %v152
    %v244 = vunpack.c.l.b16 %v153
    %v245 = vunpack.c.l.b16 %v154
    %v246 = vunpack.c.h.b16 %v154
    %v247 = vunpack.c.l.b16 %v155
    %v248 = vunpack.c.l.b16 %v156
    %v249 = vunpack.c.h.b16 %v156
    %v250 = vunpack.c.l.b16 %v157
    %v251 = vunpack.c.l.b16 %v158
    %v252 = vunpack.c.h.b16 %v158
    %v253 = vunpack.c.l.b16 %v159
    %v254 = vunpack.c.l.b16 %v160
    %v255 = vunpack.c.h.b16 %v160
    %v256 = vunpack.c.l.b16 %v161
    %v257 = vunpack.c.l.b16 %v162
    %v258 = vunpack.c.h.b16 %v162
    %v259 = vunpack.c.l.b16 %v163
    %v260 = vunpack.c.l.b16 %v164
    %v261 = vunpack.c.h.b16 %v164
    %v262 = vunpack.c.l.b16 %v165
    %v263 = vpack.c.b16 %v218, %v215
    %v264 = vpack.c.b16 %v219, %v216
    %v265 = vpack.c.b16 %v220, %v217
    %v266 = vpack.c.b16 %v224, %v221
    %v267 = vpack.c.b16 %v225, %v222
    %v268 = vpack.c.b16 %v226, %v223
    %v269 = vpack.c.b16 %v230, %v227
    %v270 = vpack.c.b16 %v231, %v228
    %v271 = vpack.c.b16 %v232, %v229
    %v272 = vpack.c.b16 %v236, %v233
    %v273 = vpack.c.b16 %v237, %v234
    %v274 = vpack.c.b16 %v238, %v235
    %v275 = vpack.c.b16 %v242, %v239
    %v276 = vpack.c.b16 %v243, %v240
    %v277 = vpack.c.b16 %v244, %v241
    %v278 = vpack.c.b16 %v248, %v245
    %v279 = vpack.c.b16 %v249, %v246
    %v280 = vpack.c.b16 %v250, %v247
    %v281 = vpack.c.b16 %v254, %v251
    %v282 = vpack.c.b16 %v255, %v252
    %v283 = vpack.c.b16 %v256, %v253
    %v284 = vpack.c.b16 %v260, %v257
    %v285 = vpack.c.b16 %v261, %v258
    %v286 = vpack.c.b16 %v262, %v259
    %311 = vmatprep.subr.bf16.mxu0 %v264
    %312 = vmatpush1.bf16.msra.mxu0 %v263
    %313 = vmatprep.subr.bf16.mxu0 %v267
    %314 = vmatpush1.bf16.msra.mxu0 %v266
    %315 = vmatprep.subr.bf16.mxu0 %v270
    %316 = vmatpush1.bf16.msra.mxu0 %v269
    %317 = vmatprep.subr.bf16.mxu0 %v273
    %318 = vmatpush1.bf16.msra.mxu0 %v272
    %319 = vmatprep.subr.bf16.mxu0 %v276
    %320 = vmatpush1.bf16.msra.mxu0 %v275
    %321 = vmatprep.subr.bf16.mxu0 %v279
    %322 = vmatpush1.bf16.msra.mxu0 %v278
    %323 = vmatprep.subr.bf16.mxu0 %v282
    %324 = vmatpush1.bf16.msra.mxu0 %v281
    %325 = vmatprep.subr.bf16.mxu0 %v285
    %326 = vmatpush1.bf16.msra.mxu0 %v284
    %327 = vmatprep.subr.bf16.mxu0 0
    %328 = vmatpush1.bf16.msra.mxu0 0
    %329 = vmatprep.subr.bf16.mxu0 0
    %330 = vmatpush1.bf16.msra.mxu0 0
    %331 = vmatprep.subr.bf16.mxu0 0
    %332 = vmatpush1.bf16.msra.mxu0 0
    %333 = vmatprep.subr.bf16.mxu0 0
    %334 = vmatpush1.bf16.msra.mxu0 0
    %335 = vmatprep.subr.bf16.mxu0 0
    %336 = vmatpush1.bf16.msra.mxu0 0
    %337 = vmatprep.subr.bf16.mxu0 0
    %338 = vmatpush1.bf16.msra.mxu0 0
    %339 = vmatprep.subr.bf16.mxu0 0
    %340 = vmatpush1.bf16.msra.mxu0 0
    %341 = vmatprep.subr.bf16.mxu0 0
    %342 = vmatpush1.bf16.msra.mxu0 0
    %343 = vmatprep.mubr.bf16.mxu0 0
    %344 = vmatmul.mubr.bf16.gmra.mrb[0].mxu0 %v130
    %v345 = vpop.f32.mrb[0].mxu0
    %v346 = vadd.f32 %v171, %v345
    %v347 = vpop.f32.mrb[0].mxu0
    %v348 = vadd.f32 %v175, %v347
    %v349 = vpop.f32.mrb[0].mxu0
    %v350 = vadd.f32 %v171, %v349
    %v351 = vpop.f32.mrb[0].mxu0
    %v352 = vadd.f32 %v175, %v351
    %353 = vmatprep.mubr.bf16.mxu0 0
    %354 = vmatmul.mubr.bf16.gmra.mrb[0].mxu0 %v131
    %v355 = vpop.f32.mrb[0].mxu0
    %v356 = vadd.f32 %v171, %v355
    %v357 = vpop.f32.mrb[0].mxu0
    %v358 = vadd.f32 %v175, %v357
    %v359 = vpop.f32.mrb[0].mxu0
    %v360 = vadd.f32 %v171, %v359
    %v361 = vpop.f32.mrb[0].mxu0
    %v362 = vadd.f32 %v175, %v361
    %363 = vmatprep.mubr.bf16.mxu0 0
    %364 = vmatmul.mubr.bf16.gmra.mrb[0].mxu0 %v132
    %v365 = vpop.f32.mrb[0].mxu0
    %v366 = vadd.f32 %v171, %v365
    %v367 = vpop.f32.mrb[0].mxu0
    %v368 = vadd.f32 %v175, %v367
    %v369 = vpop.f32.mrb[0].mxu0
    %v370 = vadd.f32 %v171, %v369
    %v371 = vpop.f32.mrb[0].mxu0
    %v372 = vadd.f32 %v175, %v371
    %373 = vmatprep.mubr.bf16.mxu0 0
    %374 = vmatmul.mubr.bf16.gmra.mrb[0].mxu0 %v133
    %v375 = vpop.f32.mrb[0].mxu0
    %v376 = vadd.f32 %v171, %v375
    %v377 = vpop.f32.mrb[0].mxu0
    %v378 = vadd.f32 %v175, %v377
    %v379 = vpop.f32.mrb[0].mxu0
    %v380 = vadd.f32 %v171, %v379
    %v381 = vpop.f32.mrb[0].mxu0
    %v382 = vadd.f32 %v175, %v381
    %383 = vdwg.mxu0
    %384 = vmatprep.subr.bf16.mxu0 0
    %385 = vmatpush1.bf16.msra.mxu0 %v265
    %386 = vmatprep.subr.bf16.mxu0 0
    %387 = vmatpush1.bf16.msra.mxu0 %v268
    %388 = vmatprep.subr.bf16.mxu0 0
    %389 = vmatpush1.bf16.msra.mxu0 %v271
    %390 = vmatprep.subr.bf16.mxu0 0
    %391 = vmatpush1.bf16.msra.mxu0 %v274
    %392 = vmatprep.subr.bf16.mxu0 0
    %393 = vmatpush1.bf16.msra.mxu0 %v277
    %394 = vmatprep.subr.bf16.mxu0 0
    %395 = vmatpush1.bf16.msra.mxu0 %v280
    %396 = vmatprep.subr.bf16.mxu0 0
    %397 = vmatpush1.bf16.msra.mxu0 %v283
    %398 = vmatprep.subr.bf16.mxu0 0
    %399 = vmatpush1.bf16.msra.mxu0 %v286
    %400 = vmatprep.subr.bf16.mxu0 0
    %401 = vmatpush1.bf16.msra.mxu0 0
    %402 = vmatprep.subr.bf16.mxu0 0
    %403 = vmatpush1.bf16.msra.mxu0 0
    %404 = vmatprep.subr.bf16.mxu0 0
    %405 = vmatpush1.bf16.msra.mxu0 0
    %406 = vmatprep.subr.bf16.mxu0 0
    %407 = vmatpush1.bf16.msra.mxu0 0
    %408 = vmatprep.subr.bf16.mxu0 0
    %409 = vmatpush1.bf16.msra.mxu0 0
    %410 = vmatprep.subr.bf16.mxu0 0
    %411 = vmatpush1.bf16.msra.mxu0 0
    %412 = vmatprep.subr.bf16.mxu0 0
    %413 = vmatpush1.bf16.msra.mxu0 0
    %414 = vmatprep.subr.bf16.mxu0 0
    %415 = vmatpush1.bf16.msra.mxu0 0
    %416 = vmatprep.mubr.bf16.mxu0 0
    %417 = vmatmul.mubr.bf16.gmra.mrb[0].mxu0 %v130
    %v418 = vpop.f32.mrb[0].mxu0
    %v419 = vadd.f32 %v179, %v418
    %v420 = vpop.f32.mrb[0].mxu0
    %v421 = vpop.f32.mrb[0].mxu0
    %v422 = vadd.f32 %v179, %v421
    %v423 = vpop.f32.mrb[0].mxu0
    %424 = vmatprep.mubr.bf16.mxu0 0
    %425 = vmatmul.mubr.bf16.gmra.mrb[0].mxu0 %v131
    %v426 = vpop.f32.mrb[0].mxu0
    %v427 = vadd.f32 %v179, %v426
    %v428 = vpop.f32.mrb[0].mxu0
    %v429 = vpop.f32.mrb[0].mxu0
    %v430 = vadd.f32 %v179, %v429
    %v431 = vpop.f32.mrb[0].mxu0
    %432 = vmatprep.mubr.bf16.mxu0 0
    %433 = vmatmul.mubr.bf16.gmra.mrb[0].mxu0 %v132
    %v434 = vpop.f32.mrb[0].mxu0
    %v435 = vadd.f32 %v179, %v434
    %v436 = vpop.f32.mrb[0].mxu0
    %v437 = vpop.f32.mrb[0].mxu0
    %v438 = vadd.f32 %v179, %v437
    %v439 = vpop.f32.mrb[0].mxu0
    %440 = vmatprep.mubr.bf16.mxu0 0
    %441 = vmatmul.mubr.bf16.gmra.mrb[0].mxu0 %v133
    %v442 = vpop.f32.mrb[0].mxu0
    %v443 = vadd.f32 %v179, %v442
    %v444 = vpop.f32.mrb[0].mxu0
    %v445 = vpop.f32.mrb[0].mxu0
    %v446 = vadd.f32 %v179, %v445
    %v447 = vpop.f32.mrb[0].mxu0
    %448 = vdwg.mxu0
    %449 = vst [vmem:[#allocation2] sm:$0xff] %v346
    %450 = vst [vmem:[#allocation2 + $0x8] sm:$0xff] %v348
    %451 = vst [vmem:[#allocation2 + $0x10] sm:$0xff] %v419
    %452 = vst [vmem:[#allocation2 + $0x18] sm:$0xff] %v350
    %453 = vst [vmem:[#allocation2 + $0x20] sm:$0xff] %v352
    %454 = vst [vmem:[#allocation2 + $0x28] sm:$0xff] %v422
    %455 = vst [vmem:[#allocation2 + $0x30] sm:$0xff] %v356
    %456 = vst [vmem:[#allocation2 + $0x38] sm:$0xff] %v358
    %457 = vst [vmem:[#allocation2 + $0x40] sm:$0xff] %v427
    %458 = vst [vmem:[#allocation2 + $0x48] sm:$0xff] %v360
    %459 = vst [vmem:[#allocation2 + $0x50] sm:$0xff] %v362
    %460 = vst [vmem:[#allocation2 + $0x58] sm:$0xff] %v430
    %461 = vst [vmem:[#allocation2 + $0x60] sm:$0xff] %v366
    %462 = vst [vmem:[#allocation2 + $0x68] sm:$0xff] %v368
    %463 = vst [vmem:[#allocation2 + $0x70] sm:$0xff] %v435
    %464 = vst [vmem:[#allocation2 + $0x78] sm:$0xff] %v370
    %465 = vst [vmem:[#allocation2 + $0x80] sm:$0xff] %v372
    %466 = vst [vmem:[#allocation2 + $0x88] sm:$0xff] %v438
    %467 = vst [vmem:[#allocation2 + $0x90] sm:$0xff] %v376
    %468 = vst [vmem:[#allocation2 + $0x98] sm:$0xff] %v378
    %469 = vst [vmem:[#allocation2 + $0xa0] sm:$0xff] %v443
    %470 = vst [vmem:[#allocation2 + $0xa8] sm:$0xff] %v380
    %471 = vst [vmem:[#allocation2 + $0xb0] sm:$0xff] %v382
    %472 = vst [vmem:[#allocation2 + $0xb8] sm:$0xff] %v446
    %v473 = vld [vmem:[#allocation9] sm:$0xff]
    %v474 = vld [vmem:[#allocation9 + $0x8] sm:$0xf]
    %v475 = vld [vmem:[#allocation9 + $0xc] sm:$0xff]
    %v476 = vld [vmem:[#allocation9 + $0x14] sm:$0xf]
    %v477 = vld [vmem:[#allocation9 + $0x18] sm:$0xff]
    %v478 = vld [vmem:[#allocation9 + $0x20] sm:$0xf]
    %v479 = vld [vmem:[#allocation9 + $0x24] sm:$0xff]
    %v480 = vld [vmem:[#allocation9 + $0x2c] sm:$0xf]
    %v481 = vld [vmem:[#allocation9 + $0x30] sm:$0xff]
    %v482 = vld [vmem:[#allocation9 + $0x38] sm:$0xf]
    %v483 = vld [vmem:[#allocation9 + $0x3c] sm:$0xff]
    %v484 = vld [vmem:[#allocation9 + $0x44] sm:$0xf]
    %v485 = vld [vmem:[#allocation9 + $0x48] sm:$0xff]
    %v486 = vld [vmem:[#allocation9 + $0x50] sm:$0xf]
    %v487 = vld [vmem:[#allocation9 + $0x54] sm:$0xff]
    %v488 = vld [vmem:[#allocation9 + $0x5c] sm:$0xf]
    %v489 = vld [vmem:[#allocation9 + $0x60] sm:$0xff]
    %v490 = vld [vmem:[#allocation9 + $0x68] sm:$0xf]
    %v491 = vld [vmem:[#allocation9 + $0x6c] sm:$0xff]
    %v492 = vld [vmem:[#allocation9 + $0x74] sm:$0xf]
    %v493 = vld [vmem:[#allocation9 + $0x78] sm:$0xff]
    %v494 = vld [vmem:[#allocation9 + $0x80] sm:$0xf]
    %v495 = vld [vmem:[#allocation9 + $0x84] sm:$0xff]
    %v496 = vld [vmem:[#allocation9 + $0x8c] sm:$0xf]
    %v497 = vld [vmem:[#allocation9 + $0x90] sm:$0xff]
    %v498 = vld [vmem:[#allocation9 + $0x98] sm:$0xf]
    %v499 = vld [vmem:[#allocation9 + $0x9c] sm:$0xff]
    %v500 = vld [vmem:[#allocation9 + $0xa4] sm:$0xf]
    %v501 = vld [vmem:[#allocation9 + $0xa8] sm:$0xff]
    %v502 = vld [vmem:[#allocation9 + $0xb0] sm:$0xf]
    %v503 = vld [vmem:[#allocation9 + $0xb4] sm:$0xff]
    %v504 = vld [vmem:[#allocation9 + $0xbc] sm:$0xf]
    %v505 = vld [vmem:[%s4] sm:$0x1]
    %v507 = vlaneseq
    %v508 = vshrl.u32 %v507, 7
    %v509 = vsub.s32 0, %v508
    %v510 = vrot.slane %v505, %v509
    %v544 = vunpack.c.l.b16 %v473
    %v545 = vunpack.c.h.b16 %v473
    %v546 = vunpack.c.l.b16 %v474
    %v547 = vunpack.c.l.b16 %v475
    %v548 = vunpack.c.h.b16 %v475
    %v549 = vunpack.c.l.b16 %v476
    %v550 = vunpack.c.l.b16 %v477
    %v551 = vunpack.c.h.b16 %v477
    %v552 = vunpack.c.l.b16 %v478
    %v553 = vunpack.c.l.b16 %v479
    %v554 = vunpack.c.h.b16 %v479
    %v555 = vunpack.c.l.b16 %v480
    %v556 = vunpack.c.l.b16 %v481
    %v557 = vunpack.c.h.b16 %v481
    %v558 = vunpack.c.l.b16 %v482
    %v559 = vunpack.c.l.b16 %v483
    %v560 = vunpack.c.h.b16 %v483
    %v561 = vunpack.c.l.b16 %v484
    %v562 = vunpack.c.l.b16 %v485
    %v563 = vunpack.c.h.b16 %v485
    %v564 = vunpack.c.l.b16 %v486
    %v565 = vunpack.c.l.b16 %v487
    %v566 = vunpack.c.h.b16 %v487
    %v567 = vunpack.c.l.b16 %v488
    %v568 = vunpack.c.l.b16 %v489
    %v569 = vunpack.c.h.b16 %v489
    %v570 = vunpack.c.l.b16 %v490
    %v571 = vunpack.c.l.b16 %v491
    %v572 = vunpack.c.h.b16 %v491
    %v573 = vunpack.c.l.b16 %v492
    %v574 = vunpack.c.l.b16 %v493
    %v575 = vunpack.c.h.b16 %v493
    %v576 = vunpack.c.l.b16 %v494
    %v577 = vunpack.c.l.b16 %v495
    %v578 = vunpack.c.h.b16 %v495
    %v579 = vunpack.c.l.b16 %v496
    %v580 = vunpack.c.l.b16 %v497
    %v581 = vunpack.c.h.b16 %v497
    %v582 = vunpack.c.l.b16 %v498
    %v583 = vunpack.c.l.b16 %v499
    %v584 = vunpack.c.h.b16 %v499
    %v585 = vunpack.c.l.b16 %v500
    %v586 = vunpack.c.l.b16 %v501
    %v587 = vunpack.c.h.b16 %v501
    %v588 = vunpack.c.l.b16 %v502
    %v589 = vunpack.c.l.b16 %v503
    %v590 = vunpack.c.h.b16 %v503
    %v591 = vunpack.c.l.b16 %v504
    %v592 = vpack.c.b16 %v547, %v544
    %v593 = vpack.c.b16 %v548, %v545
    %v594 = vpack.c.b16 %v549, %v546
    %v595 = vpack.c.b16 %v553, %v550
    %v596 = vpack.c.b16 %v554, %v551
    %v597 = vpack.c.b16 %v555, %v552
    %v598 = vpack.c.b16 %v559, %v556
    %v599 = vpack.c.b16 %v560, %v557
    %v600 = vpack.c.b16 %v561, %v558
    %v601 = vpack.c.b16 %v565, %v562
    %v602 = vpack.c.b16 %v566, %v563
    %v603 = vpack.c.b16 %v567, %v564
    %v604 = vpack.c.b16 %v571, %v568
    %v605 = vpack.c.b16 %v572, %v569
    %v606 = vpack.c.b16 %v573, %v570
    %v607 = vpack.c.b16 %v577, %v574
    %v608 = vpack.c.b16 %v578, %v575
    %v609 = vpack.c.b16 %v579, %v576
    %v610 = vpack.c.b16 %v583, %v580
    %v611 = vpack.c.b16 %v584, %v581
    %v612 = vpack.c.b16 %v585, %v582
    %v613 = vpack.c.b16 %v589, %v586
    %v614 = vpack.c.b16 %v590, %v587
    %v615 = vpack.c.b16 %v591, %v588
    %640 = vmatprep.subr.bf16.mxu0 %v593
    %641 = vmatpush1.bf16.msra.mxu0 %v592
    %642 = vmatprep.subr.bf16.mxu0 %v596
    %643 = vmatpush1.bf16.msra.mxu0 %v595
    %644 = vmatprep.subr.bf16.mxu0 %v599
    %645 = vmatpush1.bf16.msra.mxu0 %v598
    %646 = vmatprep.subr.bf16.mxu0 %v602
    %647 = vmatpush1.bf16.msra.mxu0 %v601
    %648 = vmatprep.subr.bf16.mxu0 %v605
    %649 = vmatpush1.bf16.msra.mxu0 %v604
    %650 = vmatprep.subr.bf16.mxu0 %v608
    %651 = vmatpush1.bf16.msra.mxu0 %v607
    %652 = vmatprep.subr.bf16.mxu0 %v611
    %653 = vmatpush1.bf16.msra.mxu0 %v610
    %654 = vmatprep.subr.bf16.mxu0 %v614
    %655 = vmatpush1.bf16.msra.mxu0 %v613
    %656 = vmatprep.subr.bf16.mxu0 0
    %657 = vmatpush1.bf16.msra.mxu0 0
    %658 = vmatprep.subr.bf16.mxu0 0
    %659 = vmatpush1.bf16.msra.mxu0 0
    %660 = vmatprep.subr.bf16.mxu0 0
    %661 = vmatpush1.bf16.msra.mxu0 0
    %662 = vmatprep.subr.bf16.mxu0 0
    %663 = vmatpush1.bf16.msra.mxu0 0
    %664 = vmatprep.subr.bf16.mxu0 0
    %665 = vmatpush1.bf16.msra.mxu0 0
    %666 = vmatprep.subr.bf16.mxu0 0
    %667 = vmatpush1.bf16.msra.mxu0 0
    %668 = vmatprep.subr.bf16.mxu0 0
    %669 = vmatpush1.bf16.msra.mxu0 0
    %670 = vmatprep.subr.bf16.mxu0 0
    %671 = vmatpush1.bf16.msra.mxu0 0
    %672 = vmatprep.mubr.bf16.mxu0 0
    %673 = vmatmul.mubr.bf16.gmra.mrb[0].mxu0 0
    %v674 = vpop.f32.mrb[0].mxu0
    %v675 = vadd.f32 0.0, %v674
    %v676 = vpop.f32.mrb[0].mxu0
    %v677 = vadd.f32 0.0, %v676
    %v678 = vpop.f32.mrb[0].mxu0
    %v679 = vpop.f32.mrb[0].mxu0
    %680 = vdwg.mxu0
    %681 = vmatprep.subr.bf16.mxu0 0
    %682 = vmatpush1.bf16.msra.mxu0 %v594
    %683 = vmatprep.subr.bf16.mxu0 0
    %684 = vmatpush1.bf16.msra.mxu0 %v597
    %685 = vmatprep.subr.bf16.mxu0 0
    %686 = vmatpush1.bf16.msra.mxu0 %v600
    %687 = vmatprep.subr.bf16.mxu0 0
    %688 = vmatpush1.bf16.msra.mxu0 %v603
    %689 = vmatprep.subr.bf16.mxu0 0
    %690 = vmatpush1.bf16.msra.mxu0 %v606
    %691 = vmatprep.subr.bf16.mxu0 0
    %692 = vmatpush1.bf16.msra.mxu0 %v609
    %693 = vmatprep.subr.bf16.mxu0 0
    %694 = vmatpush1.bf16.msra.mxu0 %v612
    %695 = vmatprep.subr.bf16.mxu0 0
    %696 = vmatpush1.bf16.msra.mxu0 %v615
    %697 = vmatprep.subr.bf16.mxu0 0
    %698 = vmatpush1.bf16.msra.mxu0 0
    %699 = vmatprep.subr.bf16.mxu0 0
    %700 = vmatpush1.bf16.msra.mxu0 0
    %701 = vmatprep.subr.bf16.mxu0 0
    %702 = vmatpush1.bf16.msra.mxu0 0
    %703 = vmatprep.subr.bf16.mxu0 0
    %704 = vmatpush1.bf16.msra.mxu0 0
    %705 = vmatprep.subr.bf16.mxu0 0
    %706 = vmatpush1.bf16.msra.mxu0 0
    %707 = vmatprep.subr.bf16.mxu0 0
    %708 = vmatpush1.bf16.msra.mxu0 0
    %709 = vmatprep.subr.bf16.mxu0 0
    %710 = vmatpush1.bf16.msra.mxu0 0
    %711 = vmatprep.subr.bf16.mxu0 0
    %712 = vmatpush1.bf16.msra.mxu0 0
    %713 = vmatprep.mubr.bf16.mxu0 0
    %714 = vmatmul.mubr.bf16.gmra.mrb[0].mxu0 0
    %v715 = vpop.f32.mrb[0].mxu0
    %v716 = vadd.f32 0.0, %v715
    %v717 = vpop.f32.mrb[0].mxu0
    %v718 = vpop.f32.mrb[0].mxu0
    %v719 = vpop.f32.mrb[0].mxu0
    %720 = vdwg.mxu0
    %v721 = vld [vmem:[#allocation2] sm:$0xff]
    %v722 = vld [vmem:[#allocation2 + $0x8] sm:$0xff]
    %v723 = vld [vmem:[#allocation2 + $0x10] sm:$0xff]
    %v724 = vadd.f32 %v721, %v675
    %v725 = vxor.u32 %v724, 2147483648
    %v726 = vmul.f32 %v725, 1.442695
    %v727 = vpow.pop %v726
    %v728 = vadd.f32 %v727, 1.0
    %v729 = vrcp.pop %v728
    %v730 = vmul.f32 1.0, %v729
    %v731 = vadd.f32 %v722, %v677
    %v732 = vxor.u32 %v731, 2147483648
    %v733 = vmul.f32 %v732, 1.442695
    %v734 = vpow.pop %v733
    %v735 = vadd.f32 %v734, 1.0
    %v736 = vrcp.pop %v735
    %v737 = vmul.f32 1.0, %v736
    %v738 = vadd.f32 %v716, %v510
    %v739 = vmul.f32 %v730, %v738
    %v740 = vadd.f32 %v723, %v739
    %v741 = vtanh.pop %v740
    %v742 = vsub.f32 0.0, %v741
    %v743 = vmul.f32 %v737, %v742
    %v744 = vadd.f32 %v741, %v743
    %745 = vst [vmem:[#allocation3] sm:$0xff] %v744
    %v746 = vpack.c.bf16 %v744, %v744
    %747 = vmatprep.subr.bf16.mxu0 %v593
    %748 = vmatpush1.bf16.msra.mxu0 %v592
    %749 = vmatprep.subr.bf16.mxu0 %v596
    %750 = vmatpush1.bf16.msra.mxu0 %v595
    %751 = vmatprep.subr.bf16.mxu0 %v599
    %752 = vmatpush1.bf16.msra.mxu0 %v598
    %753 = vmatprep.subr.bf16.mxu0 %v602
    %754 = vmatpush1.bf16.msra.mxu0 %v601
    %755 = vmatprep.subr.bf16.mxu0 %v605
    %756 = vmatpush1.bf16.msra.mxu0 %v604
    %757 = vmatprep.subr.bf16.mxu0 %v608
    %758 = vmatpush1.bf16.msra.mxu0 %v607
    %759 = vmatprep.subr.bf16.mxu0 %v611
    %760 = vmatpush1.bf16.msra.mxu0 %v610
    %761 = vmatprep.subr.bf16.mxu0 %v614
    %762 = vmatpush1.bf16.msra.mxu0 %v613
    %763 = vmatprep.subr.bf16.mxu0 0
    %764 = vmatpush1.bf16.msra.mxu0 0
    %765 = vmatprep.subr.bf16.mxu0 0
    %766 = vmatpush1.bf16.msra.mxu0 0
    %767 = vmatprep.subr.bf16.mxu0 0
    %768 = vmatpush1.bf16.msra.mxu0 0
    %769 = vmatprep.subr.bf16.mxu0 0
    %770 = vmatpush1.bf16.msra.mxu0 0
    %771 = vmatprep.subr.bf16.mxu0 0
    %772 = vmatpush1.bf16.msra.mxu0 0
    %773 = vmatprep.subr.bf16.mxu0 0
    %774 = vmatpush1.bf16.msra.mxu0 0
    %775 = vmatprep.subr.bf16.mxu0 0
    %776 = vmatpush1.bf16.msra.mxu0 0
    %777 = vmatprep.subr.bf16.mxu0 0
    %778 = vmatpush1.bf16.msra.mxu0 0
    %779 = vmatprep.mubr.bf16.mxu0 0
    %780 = vmatmul.mubr.bf16.gmra.mrb[0].mxu0 %v746
    %v781 = vpop.f32.mrb[0].mxu0
    %v782 = vadd.f32 0.0, %v781
    %v783 = vpop.f32.mrb[0].mxu0
    %v784 = vadd.f32 0.0, %v783
    %v785 = vpop.f32.mrb[0].mxu0
    %v786 = vpop.f32.mrb[0].mxu0
    %787 = vdwg.mxu0
    %788 = vmatprep.subr.bf16.mxu0 0
    %789 = vmatpush1.bf16.msra.mxu0 %v594
    %790 = vmatprep.subr.bf16.mxu0 0
    %791 = vmatpush1.bf16.msra.mxu0 %v597
    %792 = vmatprep.subr.bf16.mxu0 0
    %793 = vmatpush1.bf16.msra.mxu0 %v600
    %794 = vmatprep.subr.bf16.mxu0 0
    %795 = vmatpush1.bf16.msra.mxu0 %v603
    %796 = vmatprep.subr.bf16.mxu0 0
    %797 = vmatpush1.bf16.msra.mxu0 %v606
    %798 = vmatprep.subr.bf16.mxu0 0
    %799 = vmatpush1.bf16.msra.mxu0 %v609
    %800 = vmatprep.subr.bf16.mxu0 0
    %801 = vmatpush1.bf16.msra.mxu0 %v612
    %802 = vmatprep.subr.bf16.mxu0 0
    %803 = vmatpush1.bf16.msra.mxu0 %v615
    %804 = vmatprep.subr.bf16.mxu0 0
    %805 = vmatpush1.bf16.msra.mxu0 0
    %806 = vmatprep.subr.bf16.mxu0 0
    %807 = vmatpush1.bf16.msra.mxu0 0
    %808 = vmatprep.subr.bf16.mxu0 0
    %809 = vmatpush1.bf16.msra.mxu0 0
    %810 = vmatprep.subr.bf16.mxu0 0
    %811 = vmatpush1.bf16.msra.mxu0 0
    %812 = vmatprep.subr.bf16.mxu0 0
    %813 = vmatpush1.bf16.msra.mxu0 0
    %814 = vmatprep.subr.bf16.mxu0 0
    %815 = vmatpush1.bf16.msra.mxu0 0
    %816 = vmatprep.subr.bf16.mxu0 0
    %817 = vmatpush1.bf16.msra.mxu0 0
    %818 = vmatprep.subr.bf16.mxu0 0
    %819 = vmatpush1.bf16.msra.mxu0 0
    %820 = vmatprep.mubr.bf16.mxu0 0
    %821 = vmatmul.mubr.bf16.gmra.mrb[0].mxu0 %v746
    %v822 = vpop.f32.mrb[0].mxu0
    %v823 = vadd.f32 0.0, %v822
    %v824 = vpop.f32.mrb[0].mxu0
    %v825 = vpop.f32.mrb[0].mxu0
    %v826 = vpop.f32.mrb[0].mxu0
    %827 = vdwg.mxu0
    %s828 = scalar_lea.vmem [#allocation2], 24
    %v829 = vld [vmem:[%s828] sm:$0xff]
    %v830 = vld [vmem:[%s828 + $0x8] sm:$0xff]
    %v831 = vld [vmem:[%s828 + $0x10] sm:$0xff]
    %v832 = vadd.f32 %v829, %v782
    %v833 = vxor.u32 %v832, 2147483648
    %v834 = vmul.f32 %v833, 1.442695
    %v835 = vpow.pop %v834
    %v836 = vadd.f32 %v835, 1.0
    %v837 = vrcp.pop %v836
    %v838 = vmul.f32 1.0, %v837
    %v839 = vadd.f32 %v830, %v784
    %v840 = vxor.u32 %v839, 2147483648
    %v841 = vmul.f32 %v840, 1.442695
    %v842 = vpow.pop %v841
    %v843 = vadd.f32 %v842, 1.0
    %v844 = vrcp.pop %v843
    %v845 = vmul.f32 1.0, %v844
    %v846 = vadd.f32 %v823, %v510
    %v847 = vmul.f32 %v838, %v846
    %v848 = vadd.f32 %v831, %v847
    %v849 = vtanh.pop %v848
    %v850 = vsub.f32 %v744, %v849
    %v851 = vmul.f32 %v845, %v850
    %v852 = vadd.f32 %v849, %v851
    %s853 = scalar_lea.vmem [#allocation3], 8
    %854 = vst [vmem:[%s853] sm:$0xff] %v852
    %v855 = vpack.c.bf16 %v852, %v852
    %856 = vmatprep.subr.bf16.mxu0 %v593
    %857 = vmatpush1.bf16.msra.mxu0 %v592
    %858 = vmatprep.subr.bf16.mxu0 %v596
    %859 = vmatpush1.bf16.msra.mxu0 %v595
    %860 = vmatprep.subr.bf16.mxu0 %v599
    %861 = vmatpush1.bf16.msra.mxu0 %v598
    %862 = vmatprep.subr.bf16.mxu0 %v602
    %863 = vmatpush1.bf16.msra.mxu0 %v601
    %864 = vmatprep.subr.bf16.mxu0 %v605
    %865 = vmatpush1.bf16.msra.mxu0 %v604
    %866 = vmatprep.subr.bf16.mxu0 %v608
    %867 = vmatpush1.bf16.msra.mxu0 %v607
    %868 = vmatprep.subr.bf16.mxu0 %v611
    %869 = vmatpush1.bf16.msra.mxu0 %v610
    %870 = vmatprep.subr.bf16.mxu0 %v614
    %871 = vmatpush1.bf16.msra.mxu0 %v613
    %872 = vmatprep.subr.bf16.mxu0 0
    %873 = vmatpush1.bf16.msra.mxu0 0
    %874 = vmatprep.subr.bf16.mxu0 0
    %875 = vmatpush1.bf16.msra.mxu0 0
    %876 = vmatprep.subr.bf16.mxu0 0
    %877 = vmatpush1.bf16.msra.mxu0 0
    %878 = vmatprep.subr.bf16.mxu0 0
    %879 = vmatpush1.bf16.msra.mxu0 0
    %880 = vmatprep.subr.bf16.mxu0 0
    %881 = vmatpush1.bf16.msra.mxu0 0
    %882 = vmatprep.subr.bf16.mxu0 0
    %883 = vmatpush1.bf16.msra.mxu0 0
    %884 = vmatprep.subr.bf16.mxu0 0
    %885 = vmatpush1.bf16.msra.mxu0 0
    %886 = vmatprep.subr.bf16.mxu0 0
    %887 = vmatpush1.bf16.msra.mxu0 0
    %888 = vmatprep.mubr.bf16.mxu0 0
    %889 = vmatmul.mubr.bf16.gmra.mrb[0].mxu0 %v855
    %v890 = vpop.f32.mrb[0].mxu0
    %v891 = vadd.f32 0.0, %v890
    %v892 = vpop.f32.mrb[0].mxu0
    %v893 = vadd.f32 0.0, %v892
    %v894 = vpop.f32.mrb[0].mxu0
    %v895 = vpop.f32.mrb[0].mxu0
    %896 = vdwg.mxu0
    %897 = vmatprep.subr.bf16.mxu0 0
    %898 = vmatpush1.bf16.msra.mxu0 %v594
    %899 = vmatprep.subr.bf16.mxu0 0
    %900 = vmatpush1.bf16.msra.mxu0 %v597
    %901 = vmatprep.subr.bf16.mxu0 0
    %902 = vmatpush1.bf16.msra.mxu0 %v600
    %903 = vmatprep.subr.bf16.mxu0 0
    %904 = vmatpush1.bf16.msra.mxu0 %v603
    %905 = vmatprep.subr.bf16.mxu0 0
    %906 = vmatpush1.bf16.msra.mxu0 %v606
    %907 = vmatprep.subr.bf16.mxu0 0
    %908 = vmatpush1.bf16.msra.mxu0 %v609
    %909 = vmatprep.subr.bf16.mxu0 0
    %910 = vmatpush1.bf16.msra.mxu0 %v612
    %911 = vmatprep.subr.bf16.mxu0 0
    %912 = vmatpush1.bf16.msra.mxu0 %v615
    %913 = vmatprep.subr.bf16.mxu0 0
    %914 = vmatpush1.bf16.msra.mxu0 0
    %915 = vmatprep.subr.bf16.mxu0 0
    %916 = vmatpush1.bf16.msra.mxu0 0
    %917 = vmatprep.subr.bf16.mxu0 0
    %918 = vmatpush1.bf16.msra.mxu0 0
    %919 = vmatprep.subr.bf16.mxu0 0
    %920 = vmatpush1.bf16.msra.mxu0 0
    %921 = vmatprep.subr.bf16.mxu0 0
    %922 = vmatpush1.bf16.msra.mxu0 0
    %923 = vmatprep.subr.bf16.mxu0 0
    %924 = vmatpush1.bf16.msra.mxu0 0
    %925 = vmatprep.subr.bf16.mxu0 0
    %926 = vmatpush1.bf16.msra.mxu0 0
    %927 = vmatprep.subr.bf16.mxu0 0
    %928 = vmatpush1.bf16.msra.mxu0 0
    %929 = vmatprep.mubr.bf16.mxu0 0
    %930 = vmatmul.mubr.bf16.gmra.mrb[0].mxu0 %v855
    %v931 = vpop.f32.mrb[0].mxu0
    %v932 = vadd.f32 0.0, %v931
    %v933 = vpop.f32.mrb[0].mxu0
    %v934 = vpop.f32.mrb[0].mxu0
    %v935 = vpop.f32.mrb[0].mxu0
    %936 = vdwg.mxu0
    %s937 = scalar_lea.vmem [#allocation2], 48
    %v938 = vld [vmem:[%s937] sm:$0xff]
    %v939 = vld [vmem:[%s937 + $0x8] sm:$0xff]
    %v940 = vld [vmem:[%s937 + $0x10] sm:$0xff]
    %v941 = vadd.f32 %v938, %v891
    %v942 = vxor.u32 %v941, 2147483648
    %v943 = vmul.f32 %v942, 1.442695
    %v944 = vpow.pop %v943
    %v945 = vadd.f32 %v944, 1.0
    %v946 = vrcp.pop %v945
    %v947 = vmul.f32 1.0, %v946
    %v948 = vadd.f32 %v939, %v893
    %v949 = vxor.u32 %v948, 2147483648
    %v950 = vmul.f32 %v949, 1.442695
    %v951 = vpow.pop %v950
    %v952 = vadd.f32 %v951, 1.0
    %v953 = vrcp.pop %v952
    %v954 = vmul.f32 1.0, %v953
    %v955 = vadd.f32 %v932, %v510
    %v956 = vmul.f32 %v947, %v955
    %v957 = vadd.f32 %v940, %v956
    %v958 = vtanh.pop %v957
    %v959 = vsub.f32 %v852, %v958
    %v960 = vmul.f32 %v954, %v959
    %v961 = vadd.f32 %v958, %v960
    %s962 = scalar_lea.vmem [#allocation3], 16
    %963 = vst [vmem:[%s962] sm:$0xff] %v961
    %v964 = vpack.c.bf16 %v961, %v961
    %965 = vmatprep.subr.bf16.mxu0 %v593
    %966 = vmatpush1.bf16.msra.mxu0 %v592
    %967 = vmatprep.subr.bf16.mxu0 %v596
    %968 = vmatpush1.bf16.msra.mxu0 %v595
    %969 = vmatprep.subr.bf16.mxu0 %v599
    %970 = vmatpush1.bf16.msra.mxu0 %v598
    %971 = vmatprep.subr.bf16.mxu0 %v602
    %972 = vmatpush1.bf16.msra.mxu0 %v601
    %973 = vmatprep.subr.bf16.mxu0 %v605
    %974 = vmatpush1.bf16.msra.mxu0 %v604
    %975 = vmatprep.subr.bf16.mxu0 %v608
    %976 = vmatpush1.bf16.msra.mxu0 %v607
    %977 = vmatprep.subr.bf16.mxu0 %v611
    %978 = vmatpush1.bf16.msra.mxu0 %v610
    %979 = vmatprep.subr.bf16.mxu0 %v614
    %980 = vmatpush1.bf16.msra.mxu0 %v613
    %981 = vmatprep.subr.bf16.mxu0 0
    %982 = vmatpush1.bf16.msra.mxu0 0
    %983 = vmatprep.subr.bf16.mxu0 0
    %984 = vmatpush1.bf16.msra.mxu0 0
    %985 = vmatprep.subr.bf16.mxu0 0
    %986 = vmatpush1.bf16.msra.mxu0 0
    %987 = vmatprep.subr.bf16.mxu0 0
    %988 = vmatpush1.bf16.msra.mxu0 0
    %989 = vmatprep.subr.bf16.mxu0 0
    %990 = vmatpush1.bf16.msra.mxu0 0
    %991 = vmatprep.subr.bf16.mxu0 0
    %992 = vmatpush1.bf16.msra.mxu0 0
    %993 = vmatprep.subr.bf16.mxu0 0
    %994 = vmatpush1.bf16.msra.mxu0 0
    %995 = vmatprep.subr.bf16.mxu0 0
    %996 = vmatpush1.bf16.msra.mxu0 0
    %997 = vmatprep.mubr.bf16.mxu0 0
    %998 = vmatmul.mubr.bf16.gmra.mrb[0].mxu0 %v964
    %v999 = vpop.f32.mrb[0].mxu0
    %v1000 = vadd.f32 0.0, %v999
    %v1001 = vpop.f32.mrb[0].mxu0
    %v1002 = vadd.f32 0.0, %v1001
    %v1003 = vpop.f32.mrb[0].mxu0
    %v1004 = vpop.f32.mrb[0].mxu0
    %1005 = vdwg.mxu0
    %1006 = vmatprep.subr.bf16.mxu0 0
    %1007 = vmatpush1.bf16.msra.mxu0 %v594
    %1008 = vmatprep.subr.bf16.mxu0 0
    %1009 = vmatpush1.bf16.msra.mxu0 %v597
    %1010 = vmatprep.subr.bf16.mxu0 0
    %1011 = vmatpush1.bf16.msra.mxu0 %v600
    %1012 = vmatprep.subr.bf16.mxu0 0
    %1013 = vmatpush1.bf16.msra.mxu0 %v603
    %1014 = vmatprep.subr.bf16.mxu0 0
    %1015 = vmatpush1.bf16.msra.mxu0 %v606
    %1016 = vmatprep.subr.bf16.mxu0 0
    %1017 = vmatpush1.bf16.msra.mxu0 %v609
    %1018 = vmatprep.subr.bf16.mxu0 0
    %1019 = vmatpush1.bf16.msra.mxu0 %v612
    %1020 = vmatprep.subr.bf16.mxu0 0
    %1021 = vmatpush1.bf16.msra.mxu0 %v615
    %1022 = vmatprep.subr.bf16.mxu0 0
    %1023 = vmatpush1.bf16.msra.mxu0 0
    %1024 = vmatprep.subr.bf16.mxu0 0
    %1025 = vmatpush1.bf16.msra.mxu0 0
    %1026 = vmatprep.subr.bf16.mxu0 0
    %1027 = vmatpush1.bf16.msra.mxu0 0
    %1028 = vmatprep.subr.bf16.mxu0 0
    %1029 = vmatpush1.bf16.msra.mxu0 0
    %1030 = vmatprep.subr.bf16.mxu0 0
    %1031 = vmatpush1.bf16.msra.mxu0 0
    %1032 = vmatprep.subr.bf16.mxu0 0
    %1033 = vmatpush1.bf16.msra.mxu0 0
    %1034 = vmatprep.subr.bf16.mxu0 0
    %1035 = vmatpush1.bf16.msra.mxu0 0
    %1036 = vmatprep.subr.bf16.mxu0 0
    %1037 = vmatpush1.bf16.msra.mxu0 0
    %1038 = vmatprep.mubr.bf16.mxu0 0
    %1039 = vmatmul.mubr.bf16.gmra.mrb[0].mxu0 %v964
    %v1040 = vpop.f32.mrb[0].mxu0
    %v1041 = vadd.f32 0.0, %v1040
    %v1042 = vpop.f32.mrb[0].mxu0
    %v1043 = vpop.f32.mrb[0].mxu0
    %v1044 = vpop.f32.mrb[0].mxu0
    %1045 = vdwg.mxu0
    %s1046 = scalar_lea.vmem [#allocation2], 72
    %v1047 = vld [vmem:[%s1046] sm:$0xff]
    %v1048 = vld [vmem:[%s1046 + $0x8] sm:$0xff]
    %v1049 = vld [vmem:[%s1046 + $0x10] sm:$0xff]
    %v1050 = vadd.f32 %v1047, %v1000
    %v1051 = vxor.u32 %v1050, 2147483648
    %v1052 = vmul.f32 %v1051, 1.442695
    %v1053 = vpow.pop %v1052
    %v1054 = vadd.f32 %v1053, 1.0
    %v1055 = vrcp.pop %v1054
    %v1056 = vmul.f32 1.0, %v1055
    %v1057 = vadd.f32 %v1048, %v1002
    %v1058 = vxor.u32 %v1057, 2147483648
    %v1059 = vmul.f32 %v1058, 1.442695
    %v1060 = vpow.pop %v1059
    %v1061 = vadd.f32 %v1060, 1.0
    %v1062 = vrcp.pop %v1061
    %v1063 = vmul.f32 1.0, %v1062
    %v1064 = vadd.f32 %v1041, %v510
    %v1065 = vmul.f32 %v1056, %v1064
    %v1066 = vadd.f32 %v1049, %v1065
    %v1067 = vtanh.pop %v1066
    %v1068 = vsub.f32 %v961, %v1067
    %v1069 = vmul.f32 %v1063, %v1068
    %v1070 = vadd.f32 %v1067, %v1069
    %s1071 = scalar_lea.vmem [#allocation3], 24
    %1072 = vst [vmem:[%s1071] sm:$0xff] %v1070
    %v1073 = vpack.c.bf16 %v1070, %v1070
    %1074 = vmatprep.subr.bf16.mxu0 %v593
    %1075 = vmatpush1.bf16.msra.mxu0 %v592
    %1076 = vmatprep.subr.bf16.mxu0 %v596
    %1077 = vmatpush1.bf16.msra.mxu0 %v595
    %1078 = vmatprep.subr.bf16.mxu0 %v599
    %1079 = vmatpush1.bf16.msra.mxu0 %v598
    %1080 = vmatprep.subr.bf16.mxu0 %v602
    %1081 = vmatpush1.bf16.msra.mxu0 %v601
    %1082 = vmatprep.subr.bf16.mxu0 %v605
    %1083 = vmatpush1.bf16.msra.mxu0 %v604
    %1084 = vmatprep.subr.bf16.mxu0 %v608
    %1085 = vmatpush1.bf16.msra.mxu0 %v607
    %1086 = vmatprep.subr.bf16.mxu0 %v611
    %1087 = vmatpush1.bf16.msra.mxu0 %v610
    %1088 = vmatprep.subr.bf16.mxu0 %v614
    %1089 = vmatpush1.bf16.msra.mxu0 %v613
    %1090 = vmatprep.subr.bf16.mxu0 0
    %1091 = vmatpush1.bf16.msra.mxu0 0
    %1092 = vmatprep.subr.bf16.mxu0 0
    %1093 = vmatpush1.bf16.msra.mxu0 0
    %1094 = vmatprep.subr.bf16.mxu0 0
    %1095 = vmatpush1.bf16.msra.mxu0 0
    %1096 = vmatprep.subr.bf16.mxu0 0
    %1097 = vmatpush1.bf16.msra.mxu0 0
    %1098 = vmatprep.subr.bf16.mxu0 0
    %1099 = vmatpush1.bf16.msra.mxu0 0
    %1100 = vmatprep.subr.bf16.mxu0 0
    %1101 = vmatpush1.bf16.msra.mxu0 0
    %1102 = vmatprep.subr.bf16.mxu0 0
    %1103 = vmatpush1.bf16.msra.mxu0 0
    %1104 = vmatprep.subr.bf16.mxu0 0
    %1105 = vmatpush1.bf16.msra.mxu0 0
    %1106 = vmatprep.mubr.bf16.mxu0 0
    %1107 = vmatmul.mubr.bf16.gmra.mrb[0].mxu0 %v1073
    %v1108 = vpop.f32.mrb[0].mxu0
    %v1109 = vadd.f32 0.0, %v1108
    %v1110 = vpop.f32.mrb[0].mxu0
    %v1111 = vadd.f32 0.0, %v1110
    %v1112 = vpop.f32.mrb[0].mxu0
    %v1113 = vpop.f32.mrb[0].mxu0
    %1114 = vdwg.mxu0
    %1115 = vmatprep.subr.bf16.mxu0 0
    %1116 = vmatpush1.bf16.msra.mxu0 %v594
    %1117 = vmatprep.subr.bf16.mxu0 0
    %1118 = vmatpush1.bf16.msra.mxu0 %v597
    %1119 = vmatprep.subr.bf16.mxu0 0
    %1120 = vmatpush1.bf16.msra.mxu0 %v600
    %1121 = vmatprep.subr.bf16.mxu0 0
    %1122 = vmatpush1.bf16.msra.mxu0 %v603
    %1123 = vmatprep.subr.bf16.mxu0 0
    %1124 = vmatpush1.bf16.msra.mxu0 %v606
    %1125 = vmatprep.subr.bf16.mxu0 0
    %1126 = vmatpush1.bf16.msra.mxu0 %v609
    %1127 = vmatprep.subr.bf16.mxu0 0
    %1128 = vmatpush1.bf16.msra.mxu0 %v612
    %1129 = vmatprep.subr.bf16.mxu0 0
    %1130 = vmatpush1.bf16.msra.mxu0 %v615
    %1131 = vmatprep.subr.bf16.mxu0 0
    %1132 = vmatpush1.bf16.msra.mxu0 0
    %1133 = vmatprep.subr.bf16.mxu0 0
    %1134 = vmatpush1.bf16.msra.mxu0 0
    %1135 = vmatprep.subr.bf16.mxu0 0
    %1136 = vmatpush1.bf16.msra.mxu0 0
    %1137 = vmatprep.subr.bf16.mxu0 0
    %1138 = vmatpush1.bf16.msra.mxu0 0
    %1139 = vmatprep.subr.bf16.mxu0 0
    %1140 = vmatpush1.bf16.msra.mxu0 0
    %1141 = vmatprep.subr.bf16.mxu0 0
    %1142 = vmatpush1.bf16.msra.mxu0 0
    %1143 = vmatprep.subr.bf16.mxu0 0
    %1144 = vmatpush1.bf16.msra.mxu0 0
    %1145 = vmatprep.subr.bf16.mxu0 0
    %1146 = vmatpush1.bf16.msra.mxu0 0
    %1147 = vmatprep.mubr.bf16.mxu0 0
    %1148 = vmatmul.mubr.bf16.gmra.mrb[0].mxu0 %v1073
    %v1149 = vpop.f32.mrb[0].mxu0
    %v1150 = vadd.f32 0.0, %v1149
    %v1151 = vpop.f32.mrb[0].mxu0
    %v1152 = vpop.f32.mrb[0].mxu0
    %v1153 = vpop.f32.mrb[0].mxu0
    %1154 = vdwg.mxu0
    %s1155 = scalar_lea.vmem [#allocation2], 96
    %v1156 = vld [vmem:[%s1155] sm:$0xff]
    %v1157 = vld [vmem:[%s1155 + $0x8] sm:$0xff]
    %v1158 = vld [vmem:[%s1155 + $0x10] sm:$0xff]
    %v1159 = vadd.f32 %v1156, %v1109
    %v1160 = vxor.u32 %v1159, 2147483648
    %v1161 = vmul.f32 %v1160, 1.442695
    %v1162 = vpow.pop %v1161
    %v1163 = vadd.f32 %v1162, 1.0
    %v1164 = vrcp.pop %v1163
    %v1165 = vmul.f32 1.0, %v1164
    %v1166 = vadd.f32 %v1157, %v1111
    %v1167 = vxor.u32 %v1166, 2147483648
    %v1168 = vmul.f32 %v1167, 1.442695
    %v1169 = vpow.pop %v1168
    %v1170 = vadd.f32 %v1169, 1.0
    %v1171 = vrcp.pop %v1170
    %v1172 = vmul.f32 1.0, %v1171
    %v1173 = vadd.f32 %v1150, %v510
    %v1174 = vmul.f32 %v1165, %v1173
    %v1175 = vadd.f32 %v1158, %v1174
    %v1176 = vtanh.pop %v1175
    %v1177 = vsub.f32 %v1070, %v1176
    %v1178 = vmul.f32 %v1172, %v1177
    %v1179 = vadd.f32 %v1176, %v1178
    %s1180 = scalar_lea.vmem [#allocation3], 32
    %1181 = vst [vmem:[%s1180] sm:$0xff] %v1179
    %v1182 = vpack.c.bf16 %v1179, %v1179
    %1183 = vmatprep.subr.bf16.mxu0 %v593
    %1184 = vmatpush1.bf16.msra.mxu0 %v592
    %1185 = vmatprep.subr.bf16.mxu0 %v596
    %1186 = vmatpush1.bf16.msra.mxu0 %v595
    %1187 = vmatprep.subr.bf16.mxu0 %v599
    %1188 = vmatpush1.bf16.msra.mxu0 %v598
    %1189 = vmatprep.subr.bf16.mxu0 %v602
    %1190 = vmatpush1.bf16.msra.mxu0 %v601
    %1191 = vmatprep.subr.bf16.mxu0 %v605
    %1192 = vmatpush1.bf16.msra.mxu0 %v604
    %1193 = vmatprep.subr.bf16.mxu0 %v608
    %1194 = vmatpush1.bf16.msra.mxu0 %v607
    %1195 = vmatprep.subr.bf16.mxu0 %v611
    %1196 = vmatpush1.bf16.msra.mxu0 %v610
    %1197 = vmatprep.subr.bf16.mxu0 %v614
    %1198 = vmatpush1.bf16.msra.mxu0 %v613
    %1199 = vmatprep.subr.bf16.mxu0 0
    %1200 = vmatpush1.bf16.msra.mxu0 0
    %1201 = vmatprep.subr.bf16.mxu0 0
    %1202 = vmatpush1.bf16.msra.mxu0 0
    %1203 = vmatprep.subr.bf16.mxu0 0
    %1204 = vmatpush1.bf16.msra.mxu0 0
    %1205 = vmatprep.subr.bf16.mxu0 0
    %1206 = vmatpush1.bf16.msra.mxu0 0
    %1207 = vmatprep.subr.bf16.mxu0 0
    %1208 = vmatpush1.bf16.msra.mxu0 0
    %1209 = vmatprep.subr.bf16.mxu0 0
    %1210 = vmatpush1.bf16.msra.mxu0 0
    %1211 = vmatprep.subr.bf16.mxu0 0
    %1212 = vmatpush1.bf16.msra.mxu0 0
    %1213 = vmatprep.subr.bf16.mxu0 0
    %1214 = vmatpush1.bf16.msra.mxu0 0
    %1215 = vmatprep.mubr.bf16.mxu0 0
    %1216 = vmatmul.mubr.bf16.gmra.mrb[0].mxu0 %v1182
    %v1217 = vpop.f32.mrb[0].mxu0
    %v1218 = vadd.f32 0.0, %v1217
    %v1219 = vpop.f32.mrb[0].mxu0
    %v1220 = vadd.f32 0.0, %v1219
    %v1221 = vpop.f32.mrb[0].mxu0
    %v1222 = vpop.f32.mrb[0].mxu0
    %1223 = vdwg.mxu0
    %1224 = vmatprep.subr.bf16.mxu0 0
    %1225 = vmatpush1.bf16.msra.mxu0 %v594
    %1226 = vmatprep.subr.bf16.mxu0 0
    %1227 = vmatpush1.bf16.msra.mxu0 %v597
    %1228 = vmatprep.subr.bf16.mxu0 0
    %1229 = vmatpush1.bf16.msra.mxu0 %v600
    %1230 = vmatprep.subr.bf16.mxu0 0
    %1231 = vmatpush1.bf16.msra.mxu0 %v603
    %1232 = vmatprep.subr.bf16.mxu0 0
    %1233 = vmatpush1.bf16.msra.mxu0 %v606
    %1234 = vmatprep.subr.bf16.mxu0 0
    %1235 = vmatpush1.bf16.msra.mxu0 %v609
    %1236 = vmatprep.subr.bf16.mxu0 0
    %1237 = vmatpush1.bf16.msra.mxu0 %v612
    %1238 = vmatprep.subr.bf16.mxu0 0
    %1239 = vmatpush1.bf16.msra.mxu0 %v615
    %1240 = vmatprep.subr.bf16.mxu0 0
    %1241 = vmatpush1.bf16.msra.mxu0 0
    %1242 = vmatprep.subr.bf16.mxu0 0
    %1243 = vmatpush1.bf16.msra.mxu0 0
    %1244 = vmatprep.subr.bf16.mxu0 0
    %1245 = vmatpush1.bf16.msra.mxu0 0
    %1246 = vmatprep.subr.bf16.mxu0 0
    %1247 = vmatpush1.bf16.msra.mxu0 0
    %1248 = vmatprep.subr.bf16.mxu0 0
    %1249 = vmatpush1.bf16.msra.mxu0 0
    %1250 = vmatprep.subr.bf16.mxu0 0
    %1251 = vmatpush1.bf16.msra.mxu0 0
    %1252 = vmatprep.subr.bf16.mxu0 0
    %1253 = vmatpush1.bf16.msra.mxu0 0
    %1254 = vmatprep.subr.bf16.mxu0 0
    %1255 = vmatpush1.bf16.msra.mxu0 0
    %1256 = vmatprep.mubr.bf16.mxu0 0
    %1257 = vmatmul.mubr.bf16.gmra.mrb[0].mxu0 %v1182
    %v1258 = vpop.f32.mrb[0].mxu0
    %v1259 = vadd.f32 0.0, %v1258
    %v1260 = vpop.f32.mrb[0].mxu0
    %v1261 = vpop.f32.mrb[0].mxu0
    %v1262 = vpop.f32.mrb[0].mxu0
    %1263 = vdwg.mxu0
    %s1264 = scalar_lea.vmem [#allocation2], 120
    %v1265 = vld [vmem:[%s1264] sm:$0xff]
    %v1266 = vld [vmem:[%s1264 + $0x8] sm:$0xff]
    %v1267 = vld [vmem:[%s1264 + $0x10] sm:$0xff]
    %v1268 = vadd.f32 %v1265, %v1218
    %v1269 = vxor.u32 %v1268, 2147483648
    %v1270 = vmul.f32 %v1269, 1.442695
    %v1271 = vpow.pop %v1270
    %v1272 = vadd.f32 %v1271, 1.0
    %v1273 = vrcp.pop %v1272
    %v1274 = vmul.f32 1.0, %v1273
    %v1275 = vadd.f32 %v1266, %v1220
    %v1276 = vxor.u32 %v1275, 2147483648
    %v1277 = vmul.f32 %v1276, 1.442695
    %v1278 = vpow.pop %v1277
    %v1279 = vadd.f32 %v1278, 1.0
    %v1280 = vrcp.pop %v1279
    %v1281 = vmul.f32 1.0, %v1280
    %v1282 = vadd.f32 %v1259, %v510
    %v1283 = vmul.f32 %v1274, %v1282
    %v1284 = vadd.f32 %v1267, %v1283
    %v1285 = vtanh.pop %v1284
    %v1286 = vsub.f32 %v1179, %v1285
    %v1287 = vmul.f32 %v1281, %v1286
    %v1288 = vadd.f32 %v1285, %v1287
    %s1289 = scalar_lea.vmem [#allocation3], 40
    %1290 = vst [vmem:[%s1289] sm:$0xff] %v1288
    %v1291 = vpack.c.bf16 %v1288, %v1288
    %1292 = vmatprep.subr.bf16.mxu0 %v593
    %1293 = vmatpush1.bf16.msra.mxu0 %v592
    %1294 = vmatprep.subr.bf16.mxu0 %v596
    %1295 = vmatpush1.bf16.msra.mxu0 %v595
    %1296 = vmatprep.subr.bf16.mxu0 %v599
    %1297 = vmatpush1.bf16.msra.mxu0 %v598
    %1298 = vmatprep.subr.bf16.mxu0 %v602
    %1299 = vmatpush1.bf16.msra.mxu0 %v601
    %1300 = vmatprep.subr.bf16.mxu0 %v605
    %1301 = vmatpush1.bf16.msra.mxu0 %v604
    %1302 = vmatprep.subr.bf16.mxu0 %v608
    %1303 = vmatpush1.bf16.msra.mxu0 %v607
    %1304 = vmatprep.subr.bf16.mxu0 %v611
    %1305 = vmatpush1.bf16.msra.mxu0 %v610
    %1306 = vmatprep.subr.bf16.mxu0 %v614
    %1307 = vmatpush1.bf16.msra.mxu0 %v613
    %1308 = vmatprep.subr.bf16.mxu0 0
    %1309 = vmatpush1.bf16.msra.mxu0 0
    %1310 = vmatprep.subr.bf16.mxu0 0
    %1311 = vmatpush1.bf16.msra.mxu0 0
    %1312 = vmatprep.subr.bf16.mxu0 0
    %1313 = vmatpush1.bf16.msra.mxu0 0
    %1314 = vmatprep.subr.bf16.mxu0 0
    %1315 = vmatpush1.bf16.msra.mxu0 0
    %1316 = vmatprep.subr.bf16.mxu0 0
    %1317 = vmatpush1.bf16.msra.mxu0 0
    %1318 = vmatprep.subr.bf16.mxu0 0
    %1319 = vmatpush1.bf16.msra.mxu0 0
    %1320 = vmatprep.subr.bf16.mxu0 0
    %1321 = vmatpush1.bf16.msra.mxu0 0
    %1322 = vmatprep.subr.bf16.mxu0 0
    %1323 = vmatpush1.bf16.msra.mxu0 0
    %1324 = vmatprep.mubr.bf16.mxu0 0
    %1325 = vmatmul.mubr.bf16.gmra.mrb[0].mxu0 %v1291
    %v1326 = vpop.f32.mrb[0].mxu0
    %v1327 = vadd.f32 0.0, %v1326
    %v1328 = vpop.f32.mrb[0].mxu0
    %v1329 = vadd.f32 0.0, %v1328
    %v1330 = vpop.f32.mrb[0].mxu0
    %v1331 = vpop.f32.mrb[0].mxu0
    %1332 = vdwg.mxu0
    %1333 = vmatprep.subr.bf16.mxu0 0
    %1334 = vmatpush1.bf16.msra.mxu0 %v594
    %1335 = vmatprep.subr.bf16.mxu0 0
    %1336 = vmatpush1.bf16.msra.mxu0 %v597
    %1337 = vmatprep.subr.bf16.mxu0 0
    %1338 = vmatpush1.bf16.msra.mxu0 %v600
    %1339 = vmatprep.subr.bf16.mxu0 0
    %1340 = vmatpush1.bf16.msra.mxu0 %v603
    %1341 = vmatprep.subr.bf16.mxu0 0
    %1342 = vmatpush1.bf16.msra.mxu0 %v606
    %1343 = vmatprep.subr.bf16.mxu0 0
    %1344 = vmatpush1.bf16.msra.mxu0 %v609
    %1345 = vmatprep.subr.bf16.mxu0 0
    %1346 = vmatpush1.bf16.msra.mxu0 %v612
    %1347 = vmatprep.subr.bf16.mxu0 0
    %1348 = vmatpush1.bf16.msra.mxu0 %v615
    %1349 = vmatprep.subr.bf16.mxu0 0
    %1350 = vmatpush1.bf16.msra.mxu0 0
    %1351 = vmatprep.subr.bf16.mxu0 0
    %1352 = vmatpush1.bf16.msra.mxu0 0
    %1353 = vmatprep.subr.bf16.mxu0 0
    %1354 = vmatpush1.bf16.msra.mxu0 0
    %1355 = vmatprep.subr.bf16.mxu0 0
    %1356 = vmatpush1.bf16.msra.mxu0 0
    %1357 = vmatprep.subr.bf16.mxu0 0
    %1358 = vmatpush1.bf16.msra.mxu0 0
    %1359 = vmatprep.subr.bf16.mxu0 0
    %1360 = vmatpush1.bf16.msra.mxu0 0
    %1361 = vmatprep.subr.bf16.mxu0 0
    %1362 = vmatpush1.bf16.msra.mxu0 0
    %1363 = vmatprep.subr.bf16.mxu0 0
    %1364 = vmatpush1.bf16.msra.mxu0 0
    %1365 = vmatprep.mubr.bf16.mxu0 0
    %1366 = vmatmul.mubr.bf16.gmra.mrb[0].mxu0 %v1291
    %v1367 = vpop.f32.mrb[0].mxu0
    %v1368 = vadd.f32 0.0, %v1367
    %v1369 = vpop.f32.mrb[0].mxu0
    %v1370 = vpop.f32.mrb[0].mxu0
    %v1371 = vpop.f32.mrb[0].mxu0
    %1372 = vdwg.mxu0
    %s1373 = scalar_lea.vmem [#allocation2], 144
    %v1374 = vld [vmem:[%s1373] sm:$0xff]
    %v1375 = vld [vmem:[%s1373 + $0x8] sm:$0xff]
    %v1376 = vld [vmem:[%s1373 + $0x10] sm:$0xff]
    %v1377 = vadd.f32 %v1374, %v1327
    %v1378 = vxor.u32 %v1377, 2147483648
    %v1379 = vmul.f32 %v1378, 1.442695
    %v1380 = vpow.pop %v1379
    %v1381 = vadd.f32 %v1380, 1.0
    %v1382 = vrcp.pop %v1381
    %v1383 = vmul.f32 1.0, %v1382
    %v1384 = vadd.f32 %v1375, %v1329
    %v1385 = vxor.u32 %v1384, 2147483648
    %v1386 = vmul.f32 %v1385, 1.442695
    %v1387 = vpow.pop %v1386
    %v1388 = vadd.f32 %v1387, 1.0
    %v1389 = vrcp.pop %v1388
    %v1390 = vmul.f32 1.0, %v1389
    %v1391 = vadd.f32 %v1368, %v510
    %v1392 = vmul.f32 %v1383, %v1391
    %v1393 = vadd.f32 %v1376, %v1392
    %v1394 = vtanh.pop %v1393
    %v1395 = vsub.f32 %v1288, %v1394
    %v1396 = vmul.f32 %v1390, %v1395
    %v1397 = vadd.f32 %v1394, %v1396
    %s1398 = scalar_lea.vmem [#allocation3], 48
    %1399 = vst [vmem:[%s1398] sm:$0xff] %v1397
    %v1400 = vpack.c.bf16 %v1397, %v1397
    %1401 = vmatprep.subr.bf16.mxu0 %v593
    %1402 = vmatpush1.bf16.msra.mxu0 %v592
    %1403 = vmatprep.subr.bf16.mxu0 %v596
    %1404 = vmatpush1.bf16.msra.mxu0 %v595
    %1405 = vmatprep.subr.bf16.mxu0 %v599
    %1406 = vmatpush1.bf16.msra.mxu0 %v598
    %1407 = vmatprep.subr.bf16.mxu0 %v602
    %1408 = vmatpush1.bf16.msra.mxu0 %v601
    %1409 = vmatprep.subr.bf16.mxu0 %v605
    %1410 = vmatpush1.bf16.msra.mxu0 %v604
    %1411 = vmatprep.subr.bf16.mxu0 %v608
    %1412 = vmatpush1.bf16.msra.mxu0 %v607
    %1413 = vmatprep.subr.bf16.mxu0 %v611
    %1414 = vmatpush1.bf16.msra.mxu0 %v610
    %1415 = vmatprep.subr.bf16.mxu0 %v614
    %1416 = vmatpush1.bf16.msra.mxu0 %v613
    %1417 = vmatprep.subr.bf16.mxu0 0
    %1418 = vmatpush1.bf16.msra.mxu0 0
    %1419 = vmatprep.subr.bf16.mxu0 0
    %1420 = vmatpush1.bf16.msra.mxu0 0
    %1421 = vmatprep.subr.bf16.mxu0 0
    %1422 = vmatpush1.bf16.msra.mxu0 0
    %1423 = vmatprep.subr.bf16.mxu0 0
    %1424 = vmatpush1.bf16.msra.mxu0 0
    %1425 = vmatprep.subr.bf16.mxu0 0
    %1426 = vmatpush1.bf16.msra.mxu0 0
    %1427 = vmatprep.subr.bf16.mxu0 0
    %1428 = vmatpush1.bf16.msra.mxu0 0
    %1429 = vmatprep.subr.bf16.mxu0 0
    %1430 = vmatpush1.bf16.msra.mxu0 0
    %1431 = vmatprep.subr.bf16.mxu0 0
    %1432 = vmatpush1.bf16.msra.mxu0 0
    %1433 = vmatprep.mubr.bf16.mxu0 0
    %1434 = vmatmul.mubr.bf16.gmra.mrb[0].mxu0 %v1400
    %v1435 = vpop.f32.mrb[0].mxu0
    %v1436 = vadd.f32 0.0, %v1435
    %v1437 = vpop.f32.mrb[0].mxu0
    %v1438 = vadd.f32 0.0, %v1437
    %v1439 = vpop.f32.mrb[0].mxu0
    %v1440 = vpop.f32.mrb[0].mxu0
    %1441 = vdwg.mxu0
    %1442 = vmatprep.subr.bf16.mxu0 0
    %1443 = vmatpush1.bf16.msra.mxu0 %v594
    %1444 = vmatprep.subr.bf16.mxu0 0
    %1445 = vmatpush1.bf16.msra.mxu0 %v597
    %1446 = vmatprep.subr.bf16.mxu0 0
    %1447 = vmatpush1.bf16.msra.mxu0 %v600
    %1448 = vmatprep.subr.bf16.mxu0 0
    %1449 = vmatpush1.bf16.msra.mxu0 %v603
    %1450 = vmatprep.subr.bf16.mxu0 0
    %1451 = vmatpush1.bf16.msra.mxu0 %v606
    %1452 = vmatprep.subr.bf16.mxu0 0
    %1453 = vmatpush1.bf16.msra.mxu0 %v609
    %1454 = vmatprep.subr.bf16.mxu0 0
    %1455 = vmatpush1.bf16.msra.mxu0 %v612
    %1456 = vmatprep.subr.bf16.mxu0 0
    %1457 = vmatpush1.bf16.msra.mxu0 %v615
    %1458 = vmatprep.subr.bf16.mxu0 0
    %1459 = vmatpush1.bf16.msra.mxu0 0
    %1460 = vmatprep.subr.bf16.mxu0 0
    %1461 = vmatpush1.bf16.msra.mxu0 0
    %1462 = vmatprep.subr.bf16.mxu0 0
    %1463 = vmatpush1.bf16.msra.mxu0 0
    %1464 = vmatprep.subr.bf16.mxu0 0
    %1465 = vmatpush1.bf16.msra.mxu0 0
    %1466 = vmatprep.subr.bf16.mxu0 0
    %1467 = vmatpush1.bf16.msra.mxu0 0
    %1468 = vmatprep.subr.bf16.mxu0 0
    %1469 = vmatpush1.bf16.msra.mxu0 0
    %1470 = vmatprep.subr.bf16.mxu0 0
    %1471 = vmatpush1.bf16.msra.mxu0 0
    %1472 = vmatprep.subr.bf16.mxu0 0
    %1473 = vmatpush1.bf16.msra.mxu0 0
    %1474 = vmatprep.mubr.bf16.mxu0 0
    %1475 = vmatmul.mubr.bf16.gmra.mrb[0].mxu0 %v1400
    %v1476 = vpop.f32.mrb[0].mxu0
    %v1477 = vadd.f32 0.0, %v1476
    %v1478 = vpop.f32.mrb[0].mxu0
    %v1479 = vpop.f32.mrb[0].mxu0
    %v1480 = vpop.f32.mrb[0].mxu0
    %1481 = vdwg.mxu0
    %s1482 = scalar_lea.vmem [#allocation2], 168
    %v1483 = vld [vmem:[%s1482] sm:$0xff]
    %v1484 = vld [vmem:[%s1482 + $0x8] sm:$0xff]
    %v1485 = vld [vmem:[%s1482 + $0x10] sm:$0xff]
    %v1486 = vadd.f32 %v1483, %v1436
    %v1487 = vxor.u32 %v1486, 2147483648
    %v1488 = vmul.f32 %v1487, 1.442695
    %v1489 = vpow.pop %v1488
    %v1490 = vadd.f32 %v1489, 1.0
    %v1491 = vrcp.pop %v1490
    %v1492 = vmul.f32 1.0, %v1491
    %v1493 = vadd.f32 %v1484, %v1438
    %v1494 = vxor.u32 %v1493, 2147483648
    %v1495 = vmul.f32 %v1494, 1.442695
    %v1496 = vpow.pop %v1495
    %v1497 = vadd.f32 %v1496, 1.0
    %v1498 = vrcp.pop %v1497
    %v1499 = vmul.f32 1.0, %v1498
    %v1500 = vadd.f32 %v1477, %v510
    %v1501 = vmul.f32 %v1492, %v1500
    %v1502 = vadd.f32 %v1485, %v1501
    %v1503 = vtanh.pop %v1502
    %v1504 = vsub.f32 %v1397, %v1503
    %v1505 = vmul.f32 %v1499, %v1504
    %v1506 = vadd.f32 %v1503, %v1505
    %s1507 = scalar_lea.vmem [#allocation3], 56
    %1508 = vst [vmem:[%s1507] sm:$0xff] %v1506
    %v1509 = vld [vmem:[#allocation3] sm:$0xff]
    %v1510 = vld [vmem:[#allocation3 + $0x8] sm:$0xff]
    %v1511 = vld [vmem:[#allocation3 + $0x10] sm:$0xff]
    %v1512 = vld [vmem:[#allocation3 + $0x18] sm:$0xff]
    %v1513 = vld [vmem:[#allocation3 + $0x20] sm:$0xff]
    %v1514 = vld [vmem:[#allocation3 + $0x28] sm:$0xff]
    %v1515 = vld [vmem:[#allocation3 + $0x30] sm:$0xff]
    %v1516 = vld [vmem:[#allocation3 + $0x38] sm:$0xff]
    %v1517 = vpack.c.bf16 %v1510, %v1509
    %v1518 = vpack.c.bf16 %v1512, %v1511
    %v1519 = vpack.c.bf16 %v1514, %v1513
    %v1520 = vpack.c.bf16 %v1516, %v1515
    %v1521 = vld [vmem:[#allocation10] sm:$0xff]
    %v1522 = vld [vmem:[#allocation10 + $0x8] sm:$0xf]
    %v1523 = vld [vmem:[#allocation10 + $0xc] sm:$0xff]
    %v1524 = vld [vmem:[#allocation10 + $0x14] sm:$0xf]
    %v1525 = vld [vmem:[#allocation10 + $0x18] sm:$0xff]
    %v1526 = vld [vmem:[#allocation10 + $0x20] sm:$0xf]
    %v1527 = vld [vmem:[#allocation10 + $0x24] sm:$0xff]
    %v1528 = vld [vmem:[#allocation10 + $0x2c] sm:$0xf]
    %v1529 = vld [vmem:[#allocation10 + $0x30] sm:$0xff]
    %v1530 = vld [vmem:[#allocation10 + $0x38] sm:$0xf]
    %v1531 = vld [vmem:[#allocation10 + $0x3c] sm:$0xff]
    %v1532 = vld [vmem:[#allocation10 + $0x44] sm:$0xf]
    %v1533 = vld [vmem:[#allocation10 + $0x48] sm:$0xff]
    %v1534 = vld [vmem:[#allocation10 + $0x50] sm:$0xf]
    %v1535 = vld [vmem:[#allocation10 + $0x54] sm:$0xff]
    %v1536 = vld [vmem:[#allocation10 + $0x5c] sm:$0xf]
    %v1537 = vld [vmem:[#allocation10 + $0x60] sm:$0xff]
    %v1538 = vld [vmem:[#allocation10 + $0x68] sm:$0xf]
    %v1539 = vld [vmem:[#allocation10 + $0x6c] sm:$0xff]
    %v1540 = vld [vmem:[#allocation10 + $0x74] sm:$0xf]
    %v1541 = vld [vmem:[#allocation10 + $0x78] sm:$0xff]
    %v1542 = vld [vmem:[#allocation10 + $0x80] sm:$0xf]
    %v1543 = vld [vmem:[#allocation10 + $0x84] sm:$0xff]
    %v1544 = vld [vmem:[#allocation10 + $0x8c] sm:$0xf]
    %v1545 = vld [vmem:[#allocation10 + $0x90] sm:$0xff]
    %v1546 = vld [vmem:[#allocation10 + $0x98] sm:$0xf]
    %v1547 = vld [vmem:[#allocation10 + $0x9c] sm:$0xff]
    %v1548 = vld [vmem:[#allocation10 + $0xa4] sm:$0xf]
    %v1549 = vld [vmem:[#allocation10 + $0xa8] sm:$0xff]
    %v1550 = vld [vmem:[#allocation10 + $0xb0] sm:$0xf]
    %v1551 = vld [vmem:[#allocation10 + $0xb4] sm:$0xff]
    %v1552 = vld [vmem:[#allocation10 + $0xbc] sm:$0xf]
    %v1553 = vld [vmem:[%s7] sm:$0x7]
    %v1555 = vlaneseq
    %v1556 = vshrl.u32 %v1555, 7
    %v1557 = vsub.s32 0, %v1556
    %v1558 = vrot.slane %v1553, %v1557
    %v1559 = vlaneseq
    %v1560 = vshrl.u32 %v1559, 7
    %v1561 = vsub.s32 1, %v1560
    %v1562 = vrot.slane %v1553, %v1561
    %v1563 = vlaneseq
    %v1564 = vshrl.u32 %v1563, 7
    %v1565 = vsub.s32 2, %v1564
    %v1566 = vrot.slane %v1553, %v1565
    %v1602 = vunpack.c.l.b16 %v1521
    %v1603 = vunpack.c.h.b16 %v1521
    %v1604 = vunpack.c.l.b16 %v1522
    %v1605 = vunpack.c.l.b16 %v1523
    %v1606 = vunpack.c.h.b16 %v1523
    %v1607 = vunpack.c.l.b16 %v1524
    %v1608 = vunpack.c.l.b16 %v1525
    %v1609 = vunpack.c.h.b16 %v1525
    %v1610 = vunpack.c.l.b16 %v1526
    %v1611 = vunpack.c.l.b16 %v1527
    %v1612 = vunpack.c.h.b16 %v1527
    %v1613 = vunpack.c.l.b16 %v1528
    %v1614 = vunpack.c.l.b16 %v1529
    %v1615 = vunpack.c.h.b16 %v1529
    %v1616 = vunpack.c.l.b16 %v1530
    %v1617 = vunpack.c.l.b16 %v1531
    %v1618 = vunpack.c.h.b16 %v1531
    %v1619 = vunpack.c.l.b16 %v1532
    %v1620 = vunpack.c.l.b16 %v1533
    %v1621 = vunpack.c.h.b16 %v1533
    %v1622 = vunpack.c.l.b16 %v1534
    %v1623 = vunpack.c.l.b16 %v1535
    %v1624 = vunpack.c.h.b16 %v1535
    %v1625 = vunpack.c.l.b16 %v1536
    %v1626 = vunpack.c.l.b16 %v1537
    %v1627 = vunpack.c.h.b16 %v1537
    %v1628 = vunpack.c.l.b16 %v1538
    %v1629 = vunpack.c.l.b16 %v1539
    %v1630 = vunpack.c.h.b16 %v1539
    %v1631 = vunpack.c.l.b16 %v1540
    %v1632 = vunpack.c.l.b16 %v1541
    %v1633 = vunpack.c.h.b16 %v1541
    %v1634 = vunpack.c.l.b16 %v1542
    %v1635 = vunpack.c.l.b16 %v1543
    %v1636 = vunpack.c.h.b16 %v1543
    %v1637 = vunpack.c.l.b16 %v1544
    %v1638 = vunpack.c.l.b16 %v1545
    %v1639 = vunpack.c.h.b16 %v1545
    %v1640 = vunpack.c.l.b16 %v1546
    %v1641 = vunpack.c.l.b16 %v1547
    %v1642 = vunpack.c.h.b16 %v1547
    %v1643 = vunpack.c.l.b16 %v1548
    %v1644 = vunpack.c.l.b16 %v1549
    %v1645 = vunpack.c.h.b16 %v1549
    %v1646 = vunpack.c.l.b16 %v1550
    %v1647 = vunpack.c.l.b16 %v1551
    %v1648 = vunpack.c.h.b16 %v1551
    %v1649 = vunpack.c.l.b16 %v1552
    %v1650 = vpack.c.b16 %v1605, %v1602
    %v1651 = vpack.c.b16 %v1606, %v1603
    %v1652 = vpack.c.b16 %v1607, %v1604
    %v1653 = vpack.c.b16 %v1611, %v1608
    %v1654 = vpack.c.b16 %v1612, %v1609
    %v1655 = vpack.c.b16 %v1613, %v1610
    %v1656 = vpack.c.b16 %v1617, %v1614
    %v1657 = vpack.c.b16 %v1618, %v1615
    %v1658 = vpack.c.b16 %v1619, %v1616
    %v1659 = vpack.c.b16 %v1623, %v1620
    %v1660 = vpack.c.b16 %v1624, %v1621
    %v1661 = vpack.c.b16 %v1625, %v1622
    %v1662 = vpack.c.b16 %v1629, %v1626
    %v1663 = vpack.c.b16 %v1630, %v1627
    %v1664 = vpack.c.b16 %v1631, %v1628
    %v1665 = vpack.c.b16 %v1635, %v1632
    %v1666 = vpack.c.b16 %v1636, %v1633
    %v1667 = vpack.c.b16 %v1637, %v1634
    %v1668 = vpack.c.b16 %v1641, %v1638
    %v1669 = vpack.c.b16 %v1642, %v1639
    %v1670 = vpack.c.b16 %v1643, %v1640
    %v1671 = vpack.c.b16 %v1647, %v1644
    %v1672 = vpack.c.b16 %v1648, %v1645
    %v1673 = vpack.c.b16 %v1649, %v1646
    %1698 = vmatprep.subr.bf16.mxu0 %v1651
    %1699 = vmatpush1.bf16.msra.mxu0 %v1650
    %1700 = vmatprep.subr.bf16.mxu0 %v1654
    %1701 = vmatpush1.bf16.msra.mxu0 %v1653
    %1702 = vmatprep.subr.bf16.mxu0 %v1657
    %1703 = vmatpush1.bf16.msra.mxu0 %v1656
    %1704 = vmatprep.subr.bf16.mxu0 %v1660
    %1705 = vmatpush1.bf16.msra.mxu0 %v1659
    %1706 = vmatprep.subr.bf16.mxu0 %v1663
    %1707 = vmatpush1.bf16.msra.mxu0 %v1662
    %1708 = vmatprep.subr.bf16.mxu0 %v1666
    %1709 = vmatpush1.bf16.msra.mxu0 %v1665
    %1710 = vmatprep.subr.bf16.mxu0 %v1669
    %1711 = vmatpush1.bf16.msra.mxu0 %v1668
    %1712 = vmatprep.subr.bf16.mxu0 %v1672
    %1713 = vmatpush1.bf16.msra.mxu0 %v1671
    %1714 = vmatprep.subr.bf16.mxu0 0
    %1715 = vmatpush1.bf16.msra.mxu0 0
    %1716 = vmatprep.subr.bf16.mxu0 0
    %1717 = vmatpush1.bf16.msra.mxu0 0
    %1718 = vmatprep.subr.bf16.mxu0 0
    %1719 = vmatpush1.bf16.msra.mxu0 0
    %1720 = vmatprep.subr.bf16.mxu0 0
    %1721 = vmatpush1.bf16.msra.mxu0 0
    %1722 = vmatprep.subr.bf16.mxu0 0
    %1723 = vmatpush1.bf16.msra.mxu0 0
    %1724 = vmatprep.subr.bf16.mxu0 0
    %1725 = vmatpush1.bf16.msra.mxu0 0
    %1726 = vmatprep.subr.bf16.mxu0 0
    %1727 = vmatpush1.bf16.msra.mxu0 0
    %1728 = vmatprep.subr.bf16.mxu0 0
    %1729 = vmatpush1.bf16.msra.mxu0 0
    %1730 = vmatprep.mubr.bf16.mxu0 0
    %1731 = vmatmul.mubr.bf16.gmra.mrb[0].mxu0 %v1517
    %v1732 = vpop.f32.mrb[0].mxu0
    %v1733 = vadd.f32 %v1558, %v1732
    %v1734 = vpop.f32.mrb[0].mxu0
    %v1735 = vadd.f32 %v1562, %v1734
    %v1736 = vpop.f32.mrb[0].mxu0
    %v1737 = vadd.f32 %v1558, %v1736
    %v1738 = vpop.f32.mrb[0].mxu0
    %v1739 = vadd.f32 %v1562, %v1738
    %1740 = vmatprep.mubr.bf16.mxu0 0
    %1741 = vmatmul.mubr.bf16.gmra.mrb[0].mxu0 %v1518
    %v1742 = vpop.f32.mrb[0].mxu0
    %v1743 = vadd.f32 %v1558, %v1742
    %v1744 = vpop.f32.mrb[0].mxu0
    %v1745 = vadd.f32 %v1562, %v1744
    %v1746 = vpop.f32.mrb[0].mxu0
    %v1747 = vadd.f32 %v1558, %v1746
    %v1748 = vpop.f32.mrb[0].mxu0
    %v1749 = vadd.f32 %v1562, %v1748
    %1750 = vmatprep.mubr.bf16.mxu0 0
    %1751 = vmatmul.mubr.bf16.gmra.mrb[0].mxu0 %v1519
    %v1752 = vpop.f32.mrb[0].mxu0
    %v1753 = vadd.f32 %v1558, %v1752
    %v1754 = vpop.f32.mrb[0].mxu0
    %v1755 = vadd.f32 %v1562, %v1754
    %v1756 = vpop.f32.mrb[0].mxu0
    %v1757 = vadd.f32 %v1558, %v1756
    %v1758 = vpop.f32.mrb[0].mxu0
    %v1759 = vadd.f32 %v1562, %v1758
    %1760 = vmatprep.mubr.bf16.mxu0 0
    %1761 = vmatmul.mubr.bf16.gmra.mrb[0].mxu0 %v1520
    %v1762 = vpop.f32.mrb[0].mxu0
    %v1763 = vadd.f32 %v1558, %v1762
    %v1764 = vpop.f32.mrb[0].mxu0
    %v1765 = vadd.f32 %v1562, %v1764
    %v1766 = vpop.f32.mrb[0].mxu0
    %v1767 = vadd.f32 %v1558, %v1766
    %v1768 = vpop.f32.mrb[0].mxu0
    %v1769 = vadd.f32 %v1562, %v1768
    %1770 = vdwg.mxu0
    %1771 = vmatprep.subr.bf16.mxu0 0
    %1772 = vmatpush1.bf16.msra.mxu0 %v1652
    %1773 = vmatprep.subr.bf16.mxu0 0
    %1774 = vmatpush1.bf16.msra.mxu0 %v1655
    %1775 = vmatprep.subr.bf16.mxu0 0
    %1776 = vmatpush1.bf16.msra.mxu0 %v1658
    %1777 = vmatprep.subr.bf16.mxu0 0
    %1778 = vmatpush1.bf16.msra.mxu0 %v1661
    %1779 = vmatprep.subr.bf16.mxu0 0
    %1780 = vmatpush1.bf16.msra.mxu0 %v1664
    %1781 = vmatprep.subr.bf16.mxu0 0
    %1782 = vmatpush1.bf16.msra.mxu0 %v1667
    %1783 = vmatprep.subr.bf16.mxu0 0
    %1784 = vmatpush1.bf16.msra.mxu0 %v1670
    %1785 = vmatprep.subr.bf16.mxu0 0
    %1786 = vmatpush1.bf16.msra.mxu0 %v1673
    %1787 = vmatprep.subr.bf16.mxu0 0
    %1788 = vmatpush1.bf16.msra.mxu0 0
    %1789 = vmatprep.subr.bf16.mxu0 0
    %1790 = vmatpush1.bf16.msra.mxu0 0
    %1791 = vmatprep.subr.bf16.mxu0 0
    %1792 = vmatpush1.bf16.msra.mxu0 0
    %1793 = vmatprep.subr.bf16.mxu0 0
    %1794 = vmatpush1.bf16.msra.mxu0 0
    %1795 = vmatprep.subr.bf16.mxu0 0
    %1796 = vmatpush1.bf16.msra.mxu0 0
    %1797 = vmatprep.subr.bf16.mxu0 0
    %1798 = vmatpush1.bf16.msra.mxu0 0
    %1799 = vmatprep.subr.bf16.mxu0 0
    %1800 = vmatpush1.bf16.msra.mxu0 0
    %1801 = vmatprep.subr.bf16.mxu0 0
    %1802 = vmatpush1.bf16.msra.mxu0 0
    %1803 = vmatprep.mubr.bf16.mxu0 0
    %1804 = vmatmul.mubr.bf16.gmra.mrb[0].mxu0 %v1517
    %v1805 = vpop.f32.mrb[0].mxu0
    %v1806 = vadd.f32 %v1566, %v1805
    %v1807 = vpop.f32.mrb[0].mxu0
    %v1808 = vpop.f32.mrb[0].mxu0
    %v1809 = vadd.f32 %v1566, %v1808
    %v1810 = vpop.f32.mrb[0].mxu0
    %1811 = vmatprep.mubr.bf16.mxu0 0
    %1812 = vmatmul.mubr.bf16.gmra.mrb[0].mxu0 %v1518
    %v1813 = vpop.f32.mrb[0].mxu0
    %v1814 = vadd.f32 %v1566, %v1813
    %v1815 = vpop.f32.mrb[0].mxu0
    %v1816 = vpop.f32.mrb[0].mxu0
    %v1817 = vadd.f32 %v1566, %v1816
    %v1818 = vpop.f32.mrb[0].mxu0
    %1819 = vmatprep.mubr.bf16.mxu0 0
    %1820 = vmatmul.mubr.bf16.gmra.mrb[0].mxu0 %v1519
    %v1821 = vpop.f32.mrb[0].mxu0
    %v1822 = vadd.f32 %v1566, %v1821
    %v1823 = vpop.f32.mrb[0].mxu0
    %v1824 = vpop.f32.mrb[0].mxu0
    %v1825 = vadd.f32 %v1566, %v1824
    %v1826 = vpop.f32.mrb[0].mxu0
    %1827 = vmatprep.mubr.bf16.mxu0 0
    %1828 = vmatmul.mubr.bf16.gmra.mrb[0].mxu0 %v1520
    %v1829 = vpop.f32.mrb[0].mxu0
    %v1830 = vadd.f32 %v1566, %v1829
    %v1831 = vpop.f32.mrb[0].mxu0
    %v1832 = vpop.f32.mrb[0].mxu0
    %v1833 = vadd.f32 %v1566, %v1832
    %v1834 = vpop.f32.mrb[0].mxu0
    %1835 = vdwg.mxu0
    %1836 = vst [vmem:[#allocation2] sm:$0xff] %v1733
    %1837 = vst [vmem:[#allocation2 + $0x8] sm:$0xff] %v1735
    %1838 = vst [vmem:[#allocation2 + $0x10] sm:$0xff] %v1806
    %1839 = vst [vmem:[#allocation2 + $0x18] sm:$0xff] %v1737
    %1840 = vst [vmem:[#allocation2 + $0x20] sm:$0xff] %v1739
    %1841 = vst [vmem:[#allocation2 + $0x28] sm:$0xff] %v1809
    %1842 = vst [vmem:[#allocation2 + $0x30] sm:$0xff] %v1743
    %1843 = vst [vmem:[#allocation2 + $0x38] sm:$0xff] %v1745
    %1844 = vst [vmem:[#allocation2 + $0x40] sm:$0xff] %v1814
    %1845 = vst [vmem:[#allocation2 + $0x48] sm:$0xff] %v1747
    %1846 = vst [vmem:[#allocation2 + $0x50] sm:$0xff] %v1749
    %1847 = vst [vmem:[#allocation2 + $0x58] sm:$0xff] %v1817
    %1848 = vst [vmem:[#allocation2 + $0x60] sm:$0xff] %v1753
    %1849 = vst [vmem:[#allocation2 + $0x68] sm:$0xff] %v1755
    %1850 = vst [vmem:[#allocation2 + $0x70] sm:$0xff] %v1822
    %1851 = vst [vmem:[#allocation2 + $0x78] sm:$0xff] %v1757
    %1852 = vst [vmem:[#allocation2 + $0x80] sm:$0xff] %v1759
    %1853 = vst [vmem:[#allocation2 + $0x88] sm:$0xff] %v1825
    %1854 = vst [vmem:[#allocation2 + $0x90] sm:$0xff] %v1763
    %1855 = vst [vmem:[#allocation2 + $0x98] sm:$0xff] %v1765
    %1856 = vst [vmem:[#allocation2 + $0xa0] sm:$0xff] %v1830
    %1857 = vst [vmem:[#allocation2 + $0xa8] sm:$0xff] %v1767
    %1858 = vst [vmem:[#allocation2 + $0xb0] sm:$0xff] %v1769
    %1859 = vst [vmem:[#allocation2 + $0xb8] sm:$0xff] %v1833
    %v1860 = vld [vmem:[#allocation12] sm:$0xff]
    %v1861 = vld [vmem:[#allocation12 + $0x8] sm:$0xf]
    %v1862 = vld [vmem:[#allocation12 + $0xc] sm:$0xff]
    %v1863 = vld [vmem:[#allocation12 + $0x14] sm:$0xf]
    %v1864 = vld [vmem:[#allocation12 + $0x18] sm:$0xff]
    %v1865 = vld [vmem:[#allocation12 + $0x20] sm:$0xf]
    %v1866 = vld [vmem:[#allocation12 + $0x24] sm:$0xff]
    %v1867 = vld [vmem:[#allocation12 + $0x2c] sm:$0xf]
    %v1868 = vld [vmem:[#allocation12 + $0x30] sm:$0xff]
    %v1869 = vld [vmem:[#allocation12 + $0x38] sm:$0xf]
    %v1870 = vld [vmem:[#allocation12 + $0x3c] sm:$0xff]
    %v1871 = vld [vmem:[#allocation12 + $0x44] sm:$0xf]
    %v1872 = vld [vmem:[#allocation12 + $0x48] sm:$0xff]
    %v1873 = vld [vmem:[#allocation12 + $0x50] sm:$0xf]
    %v1874 = vld [vmem:[#allocation12 + $0x54] sm:$0xff]
    %v1875 = vld [vmem:[#allocation12 + $0x5c] sm:$0xf]
    %v1876 = vld [vmem:[#allocation12 + $0x60] sm:$0xff]
    %v1877 = vld [vmem:[#allocation12 + $0x68] sm:$0xf]
    %v1878 = vld [vmem:[#allocation12 + $0x6c] sm:$0xff]
    %v1879 = vld [vmem:[#allocation12 + $0x74] sm:$0xf]
    %v1880 = vld [vmem:[#allocation12 + $0x78] sm:$0xff]
    %v1881 = vld [vmem:[#allocation12 + $0x80] sm:$0xf]
    %v1882 = vld [vmem:[#allocation12 + $0x84] sm:$0xff]
    %v1883 = vld [vmem:[#allocation12 + $0x8c] sm:$0xf]
    %v1884 = vld [vmem:[#allocation12 + $0x90] sm:$0xff]
    %v1885 = vld [vmem:[#allocation12 + $0x98] sm:$0xf]
    %v1886 = vld [vmem:[#allocation12 + $0x9c] sm:$0xff]
    %v1887 = vld [vmem:[#allocation12 + $0xa4] sm:$0xf]
    %v1888 = vld [vmem:[#allocation12 + $0xa8] sm:$0xff]
    %v1889 = vld [vmem:[#allocation12 + $0xb0] sm:$0xf]
    %v1890 = vld [vmem:[#allocation12 + $0xb4] sm:$0xff]
    %v1891 = vld [vmem:[#allocation12 + $0xbc] sm:$0xf]
    %v1892 = vld [vmem:[%s8] sm:$0x1]
    %v1894 = vlaneseq
    %v1895 = vshrl.u32 %v1894, 7
    %v1896 = vsub.s32 0, %v1895
    %v1897 = vrot.slane %v1892, %v1896
    %v1931 = vunpack.c.l.b16 %v1860
    %v1932 = vunpack.c.h.b16 %v1860
    %v1933 = vunpack.c.l.b16 %v1861
    %v1934 = vunpack.c.l.b16 %v1862
    %v1935 = vunpack.c.h.b16 %v1862
    %v1936 = vunpack.c.l.b16 %v1863
    %v1937 = vunpack.c.l.b16 %v1864
    %v1938 = vunpack.c.h.b16 %v1864
    %v1939 = vunpack.c.l.b16 %v1865
    %v1940 = vunpack.c.l.b16 %v1866
    %v1941 = vunpack.c.h.b16 %v1866
    %v1942 = vunpack.c.l.b16 %v1867
    %v1943 = vunpack.c.l.b16 %v1868
    %v1944 = vunpack.c.h.b16 %v1868
    %v1945 = vunpack.c.l.b16 %v1869
    %v1946 = vunpack.c.l.b16 %v1870
    %v1947 = vunpack.c.h.b16 %v1870
    %v1948 = vunpack.c.l.b16 %v1871
    %v1949 = vunpack.c.l.b16 %v1872
    %v1950 = vunpack.c.h.b16 %v1872
    %v1951 = vunpack.c.l.b16 %v1873
    %v1952 = vunpack.c.l.b16 %v1874
    %v1953 = vunpack.c.h.b16 %v1874
    %v1954 = vunpack.c.l.b16 %v1875
    %v1955 = vunpack.c.l.b16 %v1876
    %v1956 = vunpack.c.h.b16 %v1876
    %v1957 = vunpack.c.l.b16 %v1877
    %v1958 = vunpack.c.l.b16 %v1878
    %v1959 = vunpack.c.h.b16 %v1878
    %v1960 = vunpack.c.l.b16 %v1879
    %v1961 = vunpack.c.l.b16 %v1880
    %v1962 = vunpack.c.h.b16 %v1880
    %v1963 = vunpack.c.l.b16 %v1881
    %v1964 = vunpack.c.l.b16 %v1882
    %v1965 = vunpack.c.h.b16 %v1882
    %v1966 = vunpack.c.l.b16 %v1883
    %v1967 = vunpack.c.l.b16 %v1884
    %v1968 = vunpack.c.h.b16 %v1884
    %v1969 = vunpack.c.l.b16 %v1885
    %v1970 = vunpack.c.l.b16 %v1886
    %v1971 = vunpack.c.h.b16 %v1886
    %v1972 = vunpack.c.l.b16 %v1887
    %v1973 = vunpack.c.l.b16 %v1888
    %v1974 = vunpack.c.h.b16 %v1888
    %v1975 = vunpack.c.l.b16 %v1889
    %v1976 = vunpack.c.l.b16 %v1890
    %v1977 = vunpack.c.h.b16 %v1890
    %v1978 = vunpack.c.l.b16 %v1891
    %v1979 = vpack.c.b16 %v1934, %v1931
    %v1980 = vpack.c.b16 %v1935, %v1932
    %v1981 = vpack.c.b16 %v1936, %v1933
    %v1982 = vpack.c.b16 %v1940, %v1937
    %v1983 = vpack.c.b16 %v1941, %v1938
    %v1984 = vpack.c.b16 %v1942, %v1939
    %v1985 = vpack.c.b16 %v1946, %v1943
    %v1986 = vpack.c.b16 %v1947, %v1944
    %v1987 = vpack.c.b16 %v1948, %v1945
    %v1988 = vpack.c.b16 %v1952, %v1949
    %v1989 = vpack.c.b16 %v1953, %v1950
    %v1990 = vpack.c.b16 %v1954, %v1951
    %v1991 = vpack.c.b16 %v1958, %v1955
    %v1992 = vpack.c.b16 %v1959, %v1956
    %v1993 = vpack.c.b16 %v1960, %v1957
    %v1994 = vpack.c.b16 %v1964, %v1961
    %v1995 = vpack.c.b16 %v1965, %v1962
    %v1996 = vpack.c.b16 %v1966, %v1963
    %v1997 = vpack.c.b16 %v1970, %v1967
    %v1998 = vpack.c.b16 %v1971, %v1968
    %v1999 = vpack.c.b16 %v1972, %v1969
    %v2000 = vpack.c.b16 %v1976, %v1973
    %v2001 = vpack.c.b16 %v1977, %v1974
    %v2002 = vpack.c.b16 %v1978, %v1975
    %2027 = vmatprep.subr.bf16.mxu0 %v1980
    %2028 = vmatpush1.bf16.msra.mxu0 %v1979
    %2029 = vmatprep.subr.bf16.mxu0 %v1983
    %2030 = vmatpush1.bf16.msra.mxu0 %v1982
    %2031 = vmatprep.subr.bf16.mxu0 %v1986
    %2032 = vmatpush1.bf16.msra.mxu0 %v1985
    %2033 = vmatprep.subr.bf16.mxu0 %v1989
    %2034 = vmatpush1.bf16.msra.mxu0 %v1988
    %2035 = vmatprep.subr.bf16.mxu0 %v1992
    %2036 = vmatpush1.bf16.msra.mxu0 %v1991
    %2037 = vmatprep.subr.bf16.mxu0 %v1995
    %2038 = vmatpush1.bf16.msra.mxu0 %v1994
    %2039 = vmatprep.subr.bf16.mxu0 %v1998
    %2040 = vmatpush1.bf16.msra.mxu0 %v1997
    %2041 = vmatprep.subr.bf16.mxu0 %v2001
    %2042 = vmatpush1.bf16.msra.mxu0 %v2000
    %2043 = vmatprep.subr.bf16.mxu0 0
    %2044 = vmatpush1.bf16.msra.mxu0 0
    %2045 = vmatprep.subr.bf16.mxu0 0
    %2046 = vmatpush1.bf16.msra.mxu0 0
    %2047 = vmatprep.subr.bf16.mxu0 0
    %2048 = vmatpush1.bf16.msra.mxu0 0
    %2049 = vmatprep.subr.bf16.mxu0 0
    %2050 = vmatpush1.bf16.msra.mxu0 0
    %2051 = vmatprep.subr.bf16.mxu0 0
    %2052 = vmatpush1.bf16.msra.mxu0 0
    %2053 = vmatprep.subr.bf16.mxu0 0
    %2054 = vmatpush1.bf16.msra.mxu0 0
    %2055 = vmatprep.subr.bf16.mxu0 0
    %2056 = vmatpush1.bf16.msra.mxu0 0
    %2057 = vmatprep.subr.bf16.mxu0 0
    %2058 = vmatpush1.bf16.msra.mxu0 0
    %2059 = vmatprep.mubr.bf16.mxu0 0
    %2060 = vmatmul.mubr.bf16.gmra.mrb[0].mxu0 0
    %v2061 = vpop.f32.mrb[0].mxu0
    %v2062 = vadd.f32 0.0, %v2061
    %v2063 = vpop.f32.mrb[0].mxu0
    %v2064 = vadd.f32 0.0, %v2063
    %v2065 = vpop.f32.mrb[0].mxu0
    %v2066 = vpop.f32.mrb[0].mxu0
    %2067 = vdwg.mxu0
    %2068 = vmatprep.subr.bf16.mxu0 0
    %2069 = vmatpush1.bf16.msra.mxu0 %v1981
    %2070 = vmatprep.subr.bf16.mxu0 0
    %2071 = vmatpush1.bf16.msra.mxu0 %v1984
    %2072 = vmatprep.subr.bf16.mxu0 0
    %2073 = vmatpush1.bf16.msra.mxu0 %v1987
    %2074 = vmatprep.subr.bf16.mxu0 0
    %2075 = vmatpush1.bf16.msra.mxu0 %v1990
    %2076 = vmatprep.subr.bf16.mxu0 0
    %2077 = vmatpush1.bf16.msra.mxu0 %v1993
    %2078 = vmatprep.subr.bf16.mxu0 0
    %2079 = vmatpush1.bf16.msra.mxu0 %v1996
    %2080 = vmatprep.subr.bf16.mxu0 0
    %2081 = vmatpush1.bf16.msra.mxu0 %v1999
    %2082 = vmatprep.subr.bf16.mxu0 0
    %2083 = vmatpush1.bf16.msra.mxu0 %v2002
    %2084 = vmatprep.subr.bf16.mxu0 0
    %2085 = vmatpush1.bf16.msra.mxu0 0
    %2086 = vmatprep.subr.bf16.mxu0 0
    %2087 = vmatpush1.bf16.msra.mxu0 0
    %2088 = vmatprep.subr.bf16.mxu0 0
    %2089 = vmatpush1.bf16.msra.mxu0 0
    %2090 = vmatprep.subr.bf16.mxu0 0
    %2091 = vmatpush1.bf16.msra.mxu0 0
    %2092 = vmatprep.subr.bf16.mxu0 0
    %2093 = vmatpush1.bf16.msra.mxu0 0
    %2094 = vmatprep.subr.bf16.mxu0 0
    %2095 = vmatpush1.bf16.msra.mxu0 0
    %2096 = vmatprep.subr.bf16.mxu0 0
    %2097 = vmatpush1.bf16.msra.mxu0 0
    %2098 = vmatprep.subr.bf16.mxu0 0
    %2099 = vmatpush1.bf16.msra.mxu0 0
    %2100 = vmatprep.mubr.bf16.mxu0 0
    %2101 = vmatmul.mubr.bf16.gmra.mrb[0].mxu0 0
    %v2102 = vpop.f32.mrb[0].mxu0
    %v2103 = vadd.f32 0.0, %v2102
    %v2104 = vpop.f32.mrb[0].mxu0
    %v2105 = vpop.f32.mrb[0].mxu0
    %v2106 = vpop.f32.mrb[0].mxu0
    %2107 = vdwg.mxu0
    %v2108 = vld [vmem:[#allocation2] sm:$0xff]
    %v2109 = vld [vmem:[#allocation2 + $0x8] sm:$0xff]
    %v2110 = vld [vmem:[#allocation2 + $0x10] sm:$0xff]
    %v2111 = vadd.f32 %v2108, %v2062
    %v2112 = vxor.u32 %v2111, 2147483648
    %v2113 = vmul.f32 %v2112, 1.442695
    %v2114 = vpow.pop %v2113
    %v2115 = vadd.f32 %v2114, 1.0
    %v2116 = vrcp.pop %v2115
    %v2117 = vmul.f32 1.0, %v2116
    %v2118 = vadd.f32 %v2109, %v2064
    %v2119 = vxor.u32 %v2118, 2147483648
    %v2120 = vmul.f32 %v2119, 1.442695
    %v2121 = vpow.pop %v2120
    %v2122 = vadd.f32 %v2121, 1.0
    %v2123 = vrcp.pop %v2122
    %v2124 = vmul.f32 1.0, %v2123
    %v2125 = vadd.f32 %v2103, %v1897
    %v2126 = vmul.f32 %v2117, %v2125
    %v2127 = vadd.f32 %v2110, %v2126
    %v2128 = vtanh.pop %v2127
    %v2129 = vsub.f32 0.0, %v2128
    %v2130 = vmul.f32 %v2124, %v2129
    %v2131 = vadd.f32 %v2128, %v2130
    %v2132 = vpack.c.bf16 %v2131, %v2131
    %2133 = vmatprep.subr.bf16.mxu0 %v1980
    %2134 = vmatpush1.bf16.msra.mxu0 %v1979
    %2135 = vmatprep.subr.bf16.mxu0 %v1983
    %2136 = vmatpush1.bf16.msra.mxu0 %v1982
    %2137 = vmatprep.subr.bf16.mxu0 %v1986
    %2138 = vmatpush1.bf16.msra.mxu0 %v1985
    %2139 = vmatprep.subr.bf16.mxu0 %v1989
    %2140 = vmatpush1.bf16.msra.mxu0 %v1988
    %2141 = vmatprep.subr.bf16.mxu0 %v1992
    %2142 = vmatpush1.bf16.msra.mxu0 %v1991
    %2143 = vmatprep.subr.bf16.mxu0 %v1995
    %2144 = vmatpush1.bf16.msra.mxu0 %v1994
    %2145 = vmatprep.subr.bf16.mxu0 %v1998
    %2146 = vmatpush1.bf16.msra.mxu0 %v1997
    %2147 = vmatprep.subr.bf16.mxu0 %v2001
    %2148 = vmatpush1.bf16.msra.mxu0 %v2000
    %2149 = vmatprep.subr.bf16.mxu0 0
    %2150 = vmatpush1.bf16.msra.mxu0 0
    %2151 = vmatprep.subr.bf16.mxu0 0
    %2152 = vmatpush1.bf16.msra.mxu0 0
    %2153 = vmatprep.subr.bf16.mxu0 0
    %2154 = vmatpush1.bf16.msra.mxu0 0
    %2155 = vmatprep.subr.bf16.mxu0 0
    %2156 = vmatpush1.bf16.msra.mxu0 0
    %2157 = vmatprep.subr.bf16.mxu0 0
    %2158 = vmatpush1.bf16.msra.mxu0 0
    %2159 = vmatprep.subr.bf16.mxu0 0
    %2160 = vmatpush1.bf16.msra.mxu0 0
    %2161 = vmatprep.subr.bf16.mxu0 0
    %2162 = vmatpush1.bf16.msra.mxu0 0
    %2163 = vmatprep.subr.bf16.mxu0 0
    %2164 = vmatpush1.bf16.msra.mxu0 0
    %2165 = vmatprep.mubr.bf16.mxu0 0
    %2166 = vmatmul.mubr.bf16.gmra.mrb[0].mxu0 %v2132
    %v2167 = vpop.f32.mrb[0].mxu0
    %v2168 = vadd.f32 0.0, %v2167
    %v2169 = vpop.f32.mrb[0].mxu0
    %v2170 = vadd.f32 0.0, %v2169
    %v2171 = vpop.f32.mrb[0].mxu0
    %v2172 = vpop.f32.mrb[0].mxu0
    %2173 = vdwg.mxu0
    %2174 = vmatprep.subr.bf16.mxu0 0
    %2175 = vmatpush1.bf16.msra.mxu0 %v1981
    %2176 = vmatprep.subr.bf16.mxu0 0
    %2177 = vmatpush1.bf16.msra.mxu0 %v1984
    %2178 = vmatprep.subr.bf16.mxu0 0
    %2179 = vmatpush1.bf16.msra.mxu0 %v1987
    %2180 = vmatprep.subr.bf16.mxu0 0
    %2181 = vmatpush1.bf16.msra.mxu0 %v1990
    %2182 = vmatprep.subr.bf16.mxu0 0
    %2183 = vmatpush1.bf16.msra.mxu0 %v1993
    %2184 = vmatprep.subr.bf16.mxu0 0
    %2185 = vmatpush1.bf16.msra.mxu0 %v1996
    %2186 = vmatprep.subr.bf16.mxu0 0
    %2187 = vmatpush1.bf16.msra.mxu0 %v1999
    %2188 = vmatprep.subr.bf16.mxu0 0
    %2189 = vmatpush1.bf16.msra.mxu0 %v2002
    %2190 = vmatprep.subr.bf16.mxu0 0
    %2191 = vmatpush1.bf16.msra.mxu0 0
    %2192 = vmatprep.subr.bf16.mxu0 0
    %2193 = vmatpush1.bf16.msra.mxu0 0
    %2194 = vmatprep.subr.bf16.mxu0 0
    %2195 = vmatpush1.bf16.msra.mxu0 0
    %2196 = vmatprep.subr.bf16.mxu0 0
    %2197 = vmatpush1.bf16.msra.mxu0 0
    %2198 = vmatprep.subr.bf16.mxu0 0
    %2199 = vmatpush1.bf16.msra.mxu0 0
    %2200 = vmatprep.subr.bf16.mxu0 0
    %2201 = vmatpush1.bf16.msra.mxu0 0
    %2202 = vmatprep.subr.bf16.mxu0 0
    %2203 = vmatpush1.bf16.msra.mxu0 0
    %2204 = vmatprep.subr.bf16.mxu0 0
    %2205 = vmatpush1.bf16.msra.mxu0 0
    %2206 = vmatprep.mubr.bf16.mxu0 0
    %2207 = vmatmul.mubr.bf16.gmra.mrb[0].mxu0 %v2132
    %v2208 = vpop.f32.mrb[0].mxu0
    %v2209 = vadd.f32 0.0, %v2208
    %v2210 = vpop.f32.mrb[0].mxu0
    %v2211 = vpop.f32.mrb[0].mxu0
    %v2212 = vpop.f32.mrb[0].mxu0
    %2213 = vdwg.mxu0
    %v2214 = vld [vmem:[%s828] sm:$0xff]
    %v2215 = vld [vmem:[%s828 + $0x8] sm:$0xff]
    %v2216 = vld [vmem:[%s828 + $0x10] sm:$0xff]
    %v2217 = vadd.f32 %v2214, %v2168
    %v2218 = vxor.u32 %v2217, 2147483648
    %v2219 = vmul.f32 %v2218, 1.442695
    %v2220 = vpow.pop %v2219
    %v2221 = vadd.f32 %v2220, 1.0
    %v2222 = vrcp.pop %v2221
    %v2223 = vmul.f32 1.0, %v2222
    %v2224 = vadd.f32 %v2215, %v2170
    %v2225 = vxor.u32 %v2224, 2147483648
    %v2226 = vmul.f32 %v2225, 1.442695
    %v2227 = vpow.pop %v2226
    %v2228 = vadd.f32 %v2227, 1.0
    %v2229 = vrcp.pop %v2228
    %v2230 = vmul.f32 1.0, %v2229
    %v2231 = vadd.f32 %v2209, %v1897
    %v2232 = vmul.f32 %v2223, %v2231
    %v2233 = vadd.f32 %v2216, %v2232
    %v2234 = vtanh.pop %v2233
    %v2235 = vsub.f32 %v2131, %v2234
    %v2236 = vmul.f32 %v2230, %v2235
    %v2237 = vadd.f32 %v2234, %v2236
    %v2238 = vpack.c.bf16 %v2237, %v2237
    %2239 = vmatprep.subr.bf16.mxu0 %v1980
    %2240 = vmatpush1.bf16.msra.mxu0 %v1979
    %2241 = vmatprep.subr.bf16.mxu0 %v1983
    %2242 = vmatpush1.bf16.msra.mxu0 %v1982
    %2243 = vmatprep.subr.bf16.mxu0 %v1986
    %2244 = vmatpush1.bf16.msra.mxu0 %v1985
    %2245 = vmatprep.subr.bf16.mxu0 %v1989
    %2246 = vmatpush1.bf16.msra.mxu0 %v1988
    %2247 = vmatprep.subr.bf16.mxu0 %v1992
    %2248 = vmatpush1.bf16.msra.mxu0 %v1991
    %2249 = vmatprep.subr.bf16.mxu0 %v1995
    %2250 = vmatpush1.bf16.msra.mxu0 %v1994
    %2251 = vmatprep.subr.bf16.mxu0 %v1998
    %2252 = vmatpush1.bf16.msra.mxu0 %v1997
    %2253 = vmatprep.subr.bf16.mxu0 %v2001
    %2254 = vmatpush1.bf16.msra.mxu0 %v2000
    %2255 = vmatprep.subr.bf16.mxu0 0
    %2256 = vmatpush1.bf16.msra.mxu0 0
    %2257 = vmatprep.subr.bf16.mxu0 0
    %2258 = vmatpush1.bf16.msra.mxu0 0
    %2259 = vmatprep.subr.bf16.mxu0 0
    %2260 = vmatpush1.bf16.msra.mxu0 0
    %2261 = vmatprep.subr.bf16.mxu0 0
    %2262 = vmatpush1.bf16.msra.mxu0 0
    %2263 = vmatprep.subr.bf16.mxu0 0
    %2264 = vmatpush1.bf16.msra.mxu0 0
    %2265 = vmatprep.subr.bf16.mxu0 0
    %2266 = vmatpush1.bf16.msra.mxu0 0
    %2267 = vmatprep.subr.bf16.mxu0 0
    %2268 = vmatpush1.bf16.msra.mxu0 0
    %2269 = vmatprep.subr.bf16.mxu0 0
    %2270 = vmatpush1.bf16.msra.mxu0 0
    %2271 = vmatprep.mubr.bf16.mxu0 0
    %2272 = vmatmul.mubr.bf16.gmra.mrb[0].mxu0 %v2238
    %v2273 = vpop.f32.mrb[0].mxu0
    %v2274 = vadd.f32 0.0, %v2273
    %v2275 = vpop.f32.mrb[0].mxu0
    %v2276 = vadd.f32 0.0, %v2275
    %v2277 = vpop.f32.mrb[0].mxu0
    %v2278 = vpop.f32.mrb[0].mxu0
    %2279 = vdwg.mxu0
    %2280 = vmatprep.subr.bf16.mxu0 0
    %2281 = vmatpush1.bf16.msra.mxu0 %v1981
    %2282 = vmatprep.subr.bf16.mxu0 0
    %2283 = vmatpush1.bf16.msra.mxu0 %v1984
    %2284 = vmatprep.subr.bf16.mxu0 0
    %2285 = vmatpush1.bf16.msra.mxu0 %v1987
    %2286 = vmatprep.subr.bf16.mxu0 0
    %2287 = vmatpush1.bf16.msra.mxu0 %v1990
    %2288 = vmatprep.subr.bf16.mxu0 0
    %2289 = vmatpush1.bf16.msra.mxu0 %v1993
    %2290 = vmatprep.subr.bf16.mxu0 0
    %2291 = vmatpush1.bf16.msra.mxu0 %v1996
    %2292 = vmatprep.subr.bf16.mxu0 0
    %2293 = vmatpush1.bf16.msra.mxu0 %v1999
    %2294 = vmatprep.subr.bf16.mxu0 0
    %2295 = vmatpush1.bf16.msra.mxu0 %v2002
    %2296 = vmatprep.subr.bf16.mxu0 0
    %2297 = vmatpush1.bf16.msra.mxu0 0
    %2298 = vmatprep.subr.bf16.mxu0 0
    %2299 = vmatpush1.bf16.msra.mxu0 0
    %2300 = vmatprep.subr.bf16.mxu0 0
    %2301 = vmatpush1.bf16.msra.mxu0 0
    %2302 = vmatprep.subr.bf16.mxu0 0
    %2303 = vmatpush1.bf16.msra.mxu0 0
    %2304 = vmatprep.subr.bf16.mxu0 0
    %2305 = vmatpush1.bf16.msra.mxu0 0
    %2306 = vmatprep.subr.bf16.mxu0 0
    %2307 = vmatpush1.bf16.msra.mxu0 0
    %2308 = vmatprep.subr.bf16.mxu0 0
    %2309 = vmatpush1.bf16.msra.mxu0 0
    %2310 = vmatprep.subr.bf16.mxu0 0
    %2311 = vmatpush1.bf16.msra.mxu0 0
    %2312 = vmatprep.mubr.bf16.mxu0 0
    %2313 = vmatmul.mubr.bf16.gmra.mrb[0].mxu0 %v2238
    %v2314 = vpop.f32.mrb[0].mxu0
    %v2315 = vadd.f32 0.0, %v2314
    %v2316 = vpop.f32.mrb[0].mxu0
    %v2317 = vpop.f32.mrb[0].mxu0
    %v2318 = vpop.f32.mrb[0].mxu0
    %2319 = vdwg.mxu0
    %v2320 = vld [vmem:[%s937] sm:$0xff]
    %v2321 = vld [vmem:[%s937 + $0x8] sm:$0xff]
    %v2322 = vld [vmem:[%s937 + $0x10] sm:$0xff]
    %v2323 = vadd.f32 %v2320, %v2274
    %v2324 = vxor.u32 %v2323, 2147483648
    %v2325 = vmul.f32 %v2324, 1.442695
    %v2326 = vpow.pop %v2325
    %v2327 = vadd.f32 %v2326, 1.0
    %v2328 = vrcp.pop %v2327
    %v2329 = vmul.f32 1.0, %v2328
    %v2330 = vadd.f32 %v2321, %v2276
    %v2331 = vxor.u32 %v2330, 2147483648
    %v2332 = vmul.f32 %v2331, 1.442695
    %v2333 = vpow.pop %v2332
    %v2334 = vadd.f32 %v2333, 1.0
    %v2335 = vrcp.pop %v2334
    %v2336 = vmul.f32 1.0, %v2335
    %v2337 = vadd.f32 %v2315, %v1897
    %v2338 = vmul.f32 %v2329, %v2337
    %v2339 = vadd.f32 %v2322, %v2338
    %v2340 = vtanh.pop %v2339
    %v2341 = vsub.f32 %v2237, %v2340
    %v2342 = vmul.f32 %v2336, %v2341
    %v2343 = vadd.f32 %v2340, %v2342
    %v2344 = vpack.c.bf16 %v2343, %v2343
    %2345 = vmatprep.subr.bf16.mxu0 %v1980
    %2346 = vmatpush1.bf16.msra.mxu0 %v1979
    %2347 = vmatprep.subr.bf16.mxu0 %v1983
    %2348 = vmatpush1.bf16.msra.mxu0 %v1982
    %2349 = vmatprep.subr.bf16.mxu0 %v1986
    %2350 = vmatpush1.bf16.msra.mxu0 %v1985
    %2351 = vmatprep.subr.bf16.mxu0 %v1989
    %2352 = vmatpush1.bf16.msra.mxu0 %v1988
    %2353 = vmatprep.subr.bf16.mxu0 %v1992
    %2354 = vmatpush1.bf16.msra.mxu0 %v1991
    %2355 = vmatprep.subr.bf16.mxu0 %v1995
    %2356 = vmatpush1.bf16.msra.mxu0 %v1994
    %2357 = vmatprep.subr.bf16.mxu0 %v1998
    %2358 = vmatpush1.bf16.msra.mxu0 %v1997
    %2359 = vmatprep.subr.bf16.mxu0 %v2001
    %2360 = vmatpush1.bf16.msra.mxu0 %v2000
    %2361 = vmatprep.subr.bf16.mxu0 0
    %2362 = vmatpush1.bf16.msra.mxu0 0
    %2363 = vmatprep.subr.bf16.mxu0 0
    %2364 = vmatpush1.bf16.msra.mxu0 0
    %2365 = vmatprep.subr.bf16.mxu0 0
    %2366 = vmatpush1.bf16.msra.mxu0 0
    %2367 = vmatprep.subr.bf16.mxu0 0
    %2368 = vmatpush1.bf16.msra.mxu0 0
    %2369 = vmatprep.subr.bf16.mxu0 0
    %2370 = vmatpush1.bf16.msra.mxu0 0
    %2371 = vmatprep.subr.bf16.mxu0 0
    %2372 = vmatpush1.bf16.msra.mxu0 0
    %2373 = vmatprep.subr.bf16.mxu0 0
    %2374 = vmatpush1.bf16.msra.mxu0 0
    %2375 = vmatprep.subr.bf16.mxu0 0
    %2376 = vmatpush1.bf16.msra.mxu0 0
    %2377 = vmatprep.mubr.bf16.mxu0 0
    %2378 = vmatmul.mubr.bf16.gmra.mrb[0].mxu0 %v2344
    %v2379 = vpop.f32.mrb[0].mxu0
    %v2380 = vadd.f32 0.0, %v2379
    %v2381 = vpop.f32.mrb[0].mxu0
    %v2382 = vadd.f32 0.0, %v2381
    %v2383 = vpop.f32.mrb[0].mxu0
    %v2384 = vpop.f32.mrb[0].mxu0
    %2385 = vdwg.mxu0
    %2386 = vmatprep.subr.bf16.mxu0 0
    %2387 = vmatpush1.bf16.msra.mxu0 %v1981
    %2388 = vmatprep.subr.bf16.mxu0 0
    %2389 = vmatpush1.bf16.msra.mxu0 %v1984
    %2390 = vmatprep.subr.bf16.mxu0 0
    %2391 = vmatpush1.bf16.msra.mxu0 %v1987
    %2392 = vmatprep.subr.bf16.mxu0 0
    %2393 = vmatpush1.bf16.msra.mxu0 %v1990
    %2394 = vmatprep.subr.bf16.mxu0 0
    %2395 = vmatpush1.bf16.msra.mxu0 %v1993
    %2396 = vmatprep.subr.bf16.mxu0 0
    %2397 = vmatpush1.bf16.msra.mxu0 %v1996
    %2398 = vmatprep.subr.bf16.mxu0 0
    %2399 = vmatpush1.bf16.msra.mxu0 %v1999
    %2400 = vmatprep.subr.bf16.mxu0 0
    %2401 = vmatpush1.bf16.msra.mxu0 %v2002
    %2402 = vmatprep.subr.bf16.mxu0 0
    %2403 = vmatpush1.bf16.msra.mxu0 0
    %2404 = vmatprep.subr.bf16.mxu0 0
    %2405 = vmatpush1.bf16.msra.mxu0 0
    %2406 = vmatprep.subr.bf16.mxu0 0
    %2407 = vmatpush1.bf16.msra.mxu0 0
    %2408 = vmatprep.subr.bf16.mxu0 0
    %2409 = vmatpush1.bf16.msra.mxu0 0
    %2410 = vmatprep.subr.bf16.mxu0 0
    %2411 = vmatpush1.bf16.msra.mxu0 0
    %2412 = vmatprep.subr.bf16.mxu0 0
    %2413 = vmatpush1.bf16.msra.mxu0 0
    %2414 = vmatprep.subr.bf16.mxu0 0
    %2415 = vmatpush1.bf16.msra.mxu0 0
    %2416 = vmatprep.subr.bf16.mxu0 0
    %2417 = vmatpush1.bf16.msra.mxu0 0
    %2418 = vmatprep.mubr.bf16.mxu0 0
    %2419 = vmatmul.mubr.bf16.gmra.mrb[0].mxu0 %v2344
    %v2420 = vpop.f32.mrb[0].mxu0
    %v2421 = vadd.f32 0.0, %v2420
    %v2422 = vpop.f32.mrb[0].mxu0
    %v2423 = vpop.f32.mrb[0].mxu0
    %v2424 = vpop.f32.mrb[0].mxu0
    %2425 = vdwg.mxu0
    %v2426 = vld [vmem:[%s1046] sm:$0xff]
    %v2427 = vld [vmem:[%s1046 + $0x8] sm:$0xff]
    %v2428 = vld [vmem:[%s1046 + $0x10] sm:$0xff]
    %v2429 = vadd.f32 %v2426, %v2380
    %v2430 = vxor.u32 %v2429, 2147483648
    %v2431 = vmul.f32 %v2430, 1.442695
    %v2432 = vpow.pop %v2431
    %v2433 = vadd.f32 %v2432, 1.0
    %v2434 = vrcp.pop %v2433
    %v2435 = vmul.f32 1.0, %v2434
    %v2436 = vadd.f32 %v2427, %v2382
    %v2437 = vxor.u32 %v2436, 2147483648
    %v2438 = vmul.f32 %v2437, 1.442695
    %v2439 = vpow.pop %v2438
    %v2440 = vadd.f32 %v2439, 1.0
    %v2441 = vrcp.pop %v2440
    %v2442 = vmul.f32 1.0, %v2441
    %v2443 = vadd.f32 %v2421, %v1897
    %v2444 = vmul.f32 %v2435, %v2443
    %v2445 = vadd.f32 %v2428, %v2444
    %v2446 = vtanh.pop %v2445
    %v2447 = vsub.f32 %v2343, %v2446
    %v2448 = vmul.f32 %v2442, %v2447
    %v2449 = vadd.f32 %v2446, %v2448
    %v2450 = vpack.c.bf16 %v2449, %v2449
    %2451 = vmatprep.subr.bf16.mxu0 %v1980
    %2452 = vmatpush1.bf16.msra.mxu0 %v1979
    %2453 = vmatprep.subr.bf16.mxu0 %v1983
    %2454 = vmatpush1.bf16.msra.mxu0 %v1982
    %2455 = vmatprep.subr.bf16.mxu0 %v1986
    %2456 = vmatpush1.bf16.msra.mxu0 %v1985
    %2457 = vmatprep.subr.bf16.mxu0 %v1989
    %2458 = vmatpush1.bf16.msra.mxu0 %v1988
    %2459 = vmatprep.subr.bf16.mxu0 %v1992
    %2460 = vmatpush1.bf16.msra.mxu0 %v1991
    %2461 = vmatprep.subr.bf16.mxu0 %v1995
    %2462 = vmatpush1.bf16.msra.mxu0 %v1994
    %2463 = vmatprep.subr.bf16.mxu0 %v1998
    %2464 = vmatpush1.bf16.msra.mxu0 %v1997
    %2465 = vmatprep.subr.bf16.mxu0 %v2001
    %2466 = vmatpush1.bf16.msra.mxu0 %v2000
    %2467 = vmatprep.subr.bf16.mxu0 0
    %2468 = vmatpush1.bf16.msra.mxu0 0
    %2469 = vmatprep.subr.bf16.mxu0 0
    %2470 = vmatpush1.bf16.msra.mxu0 0
    %2471 = vmatprep.subr.bf16.mxu0 0
    %2472 = vmatpush1.bf16.msra.mxu0 0
    %2473 = vmatprep.subr.bf16.mxu0 0
    %2474 = vmatpush1.bf16.msra.mxu0 0
    %2475 = vmatprep.subr.bf16.mxu0 0
    %2476 = vmatpush1.bf16.msra.mxu0 0
    %2477 = vmatprep.subr.bf16.mxu0 0
    %2478 = vmatpush1.bf16.msra.mxu0 0
    %2479 = vmatprep.subr.bf16.mxu0 0
    %2480 = vmatpush1.bf16.msra.mxu0 0
    %2481 = vmatprep.subr.bf16.mxu0 0
    %2482 = vmatpush1.bf16.msra.mxu0 0
    %2483 = vmatprep.mubr.bf16.mxu0 0
    %2484 = vmatmul.mubr.bf16.gmra.mrb[0].mxu0 %v2450
    %v2485 = vpop.f32.mrb[0].mxu0
    %v2486 = vadd.f32 0.0, %v2485
    %v2487 = vpop.f32.mrb[0].mxu0
    %v2488 = vadd.f32 0.0, %v2487
    %v2489 = vpop.f32.mrb[0].mxu0
    %v2490 = vpop.f32.mrb[0].mxu0
    %2491 = vdwg.mxu0
    %2492 = vmatprep.subr.bf16.mxu0 0
    %2493 = vmatpush1.bf16.msra.mxu0 %v1981
    %2494 = vmatprep.subr.bf16.mxu0 0
    %2495 = vmatpush1.bf16.msra.mxu0 %v1984
    %2496 = vmatprep.subr.bf16.mxu0 0
    %2497 = vmatpush1.bf16.msra.mxu0 %v1987
    %2498 = vmatprep.subr.bf16.mxu0 0
    %2499 = vmatpush1.bf16.msra.mxu0 %v1990
    %2500 = vmatprep.subr.bf16.mxu0 0
    %2501 = vmatpush1.bf16.msra.mxu0 %v1993
    %2502 = vmatprep.subr.bf16.mxu0 0
    %2503 = vmatpush1.bf16.msra.mxu0 %v1996
    %2504 = vmatprep.subr.bf16.mxu0 0
    %2505 = vmatpush1.bf16.msra.mxu0 %v1999
    %2506 = vmatprep.subr.bf16.mxu0 0
    %2507 = vmatpush1.bf16.msra.mxu0 %v2002
    %2508 = vmatprep.subr.bf16.mxu0 0
    %2509 = vmatpush1.bf16.msra.mxu0 0
    %2510 = vmatprep.subr.bf16.mxu0 0
    %2511 = vmatpush1.bf16.msra.mxu0 0
    %2512 = vmatprep.subr.bf16.mxu0 0
    %2513 = vmatpush1.bf16.msra.mxu0 0
    %2514 = vmatprep.subr.bf16.mxu0 0
    %2515 = vmatpush1.bf16.msra.mxu0 0
    %2516 = vmatprep.subr.bf16.mxu0 0
    %2517 = vmatpush1.bf16.msra.mxu0 0
    %2518 = vmatprep.subr.bf16.mxu0 0
    %2519 = vmatpush1.bf16.msra.mxu0 0
    %2520 = vmatprep.subr.bf16.mxu0 0
    %2521 = vmatpush1.bf16.msra.mxu0 0
    %2522 = vmatprep.subr.bf16.mxu0 0
    %2523 = vmatpush1.bf16.msra.mxu0 0
    %2524 = vmatprep.mubr.bf16.mxu0 0
    %2525 = vmatmul.mubr.bf16.gmra.mrb[0].mxu0 %v2450
    %v2526 = vpop.f32.mrb[0].mxu0
    %v2527 = vadd.f32 0.0, %v2526
    %v2528 = vpop.f32.mrb[0].mxu0
    %v2529 = vpop.f32.mrb[0].mxu0
    %v2530 = vpop.f32.mrb[0].mxu0
    %2531 = vdwg.mxu0
    %v2532 = vld [vmem:[%s1155] sm:$0xff]
    %v2533 = vld [vmem:[%s1155 + $0x8] sm:$0xff]
    %v2534 = vld [vmem:[%s1155 + $0x10] sm:$0xff]
    %v2535 = vadd.f32 %v2532, %v2486
    %v2536 = vxor.u32 %v2535, 2147483648
    %v2537 = vmul.f32 %v2536, 1.442695
    %v2538 = vpow.pop %v2537
    %v2539 = vadd.f32 %v2538, 1.0
    %v2540 = vrcp.pop %v2539
    %v2541 = vmul.f32 1.0, %v2540
    %v2542 = vadd.f32 %v2533, %v2488
    %v2543 = vxor.u32 %v2542, 2147483648
    %v2544 = vmul.f32 %v2543, 1.442695
    %v2545 = vpow.pop %v2544
    %v2546 = vadd.f32 %v2545, 1.0
    %v2547 = vrcp.pop %v2546
    %v2548 = vmul.f32 1.0, %v2547
    %v2549 = vadd.f32 %v2527, %v1897
    %v2550 = vmul.f32 %v2541, %v2549
    %v2551 = vadd.f32 %v2534, %v2550
    %v2552 = vtanh.pop %v2551
    %v2553 = vsub.f32 %v2449, %v2552
    %v2554 = vmul.f32 %v2548, %v2553
    %v2555 = vadd.f32 %v2552, %v2554
    %v2556 = vpack.c.bf16 %v2555, %v2555
    %2557 = vmatprep.subr.bf16.mxu0 %v1980
    %2558 = vmatpush1.bf16.msra.mxu0 %v1979
    %2559 = vmatprep.subr.bf16.mxu0 %v1983
    %2560 = vmatpush1.bf16.msra.mxu0 %v1982
    %2561 = vmatprep.subr.bf16.mxu0 %v1986
    %2562 = vmatpush1.bf16.msra.mxu0 %v1985
    %2563 = vmatprep.subr.bf16.mxu0 %v1989
    %2564 = vmatpush1.bf16.msra.mxu0 %v1988
    %2565 = vmatprep.subr.bf16.mxu0 %v1992
    %2566 = vmatpush1.bf16.msra.mxu0 %v1991
    %2567 = vmatprep.subr.bf16.mxu0 %v1995
    %2568 = vmatpush1.bf16.msra.mxu0 %v1994
    %2569 = vmatprep.subr.bf16.mxu0 %v1998
    %2570 = vmatpush1.bf16.msra.mxu0 %v1997
    %2571 = vmatprep.subr.bf16.mxu0 %v2001
    %2572 = vmatpush1.bf16.msra.mxu0 %v2000
    %2573 = vmatprep.subr.bf16.mxu0 0
    %2574 = vmatpush1.bf16.msra.mxu0 0
    %2575 = vmatprep.subr.bf16.mxu0 0
    %2576 = vmatpush1.bf16.msra.mxu0 0
    %2577 = vmatprep.subr.bf16.mxu0 0
    %2578 = vmatpush1.bf16.msra.mxu0 0
    %2579 = vmatprep.subr.bf16.mxu0 0
    %2580 = vmatpush1.bf16.msra.mxu0 0
    %2581 = vmatprep.subr.bf16.mxu0 0
    %2582 = vmatpush1.bf16.msra.mxu0 0
    %2583 = vmatprep.subr.bf16.mxu0 0
    %2584 = vmatpush1.bf16.msra.mxu0 0
    %2585 = vmatprep.subr.bf16.mxu0 0
    %2586 = vmatpush1.bf16.msra.mxu0 0
    %2587 = vmatprep.subr.bf16.mxu0 0
    %2588 = vmatpush1.bf16.msra.mxu0 0
    %2589 = vmatprep.mubr.bf16.mxu0 0
    %2590 = vmatmul.mubr.bf16.gmra.mrb[0].mxu0 %v2556
    %v2591 = vpop.f32.mrb[0].mxu0
    %v2592 = vadd.f32 0.0, %v2591
    %v2593 = vpop.f32.mrb[0].mxu0
    %v2594 = vadd.f32 0.0, %v2593
    %v2595 = vpop.f32.mrb[0].mxu0
    %v2596 = vpop.f32.mrb[0].mxu0
    %2597 = vdwg.mxu0
    %2598 = vmatprep.subr.bf16.mxu0 0
    %2599 = vmatpush1.bf16.msra.mxu0 %v1981
    %2600 = vmatprep.subr.bf16.mxu0 0
    %2601 = vmatpush1.bf16.msra.mxu0 %v1984
    %2602 = vmatprep.subr.bf16.mxu0 0
    %2603 = vmatpush1.bf16.msra.mxu0 %v1987
    %2604 = vmatprep.subr.bf16.mxu0 0
    %2605 = vmatpush1.bf16.msra.mxu0 %v1990
    %2606 = vmatprep.subr.bf16.mxu0 0
    %2607 = vmatpush1.bf16.msra.mxu0 %v1993
    %2608 = vmatprep.subr.bf16.mxu0 0
    %2609 = vmatpush1.bf16.msra.mxu0 %v1996
    %2610 = vmatprep.subr.bf16.mxu0 0
    %2611 = vmatpush1.bf16.msra.mxu0 %v1999
    %2612 = vmatprep.subr.bf16.mxu0 0
    %2613 = vmatpush1.bf16.msra.mxu0 %v2002
    %2614 = vmatprep.subr.bf16.mxu0 0
    %2615 = vmatpush1.bf16.msra.mxu0 0
    %2616 = vmatprep.subr.bf16.mxu0 0
    %2617 = vmatpush1.bf16.msra.mxu0 0
    %2618 = vmatprep.subr.bf16.mxu0 0
    %2619 = vmatpush1.bf16.msra.mxu0 0
    %2620 = vmatprep.subr.bf16.mxu0 0
    %2621 = vmatpush1.bf16.msra.mxu0 0
    %2622 = vmatprep.subr.bf16.mxu0 0
    %2623 = vmatpush1.bf16.msra.mxu0 0
    %2624 = vmatprep.subr.bf16.mxu0 0
    %2625 = vmatpush1.bf16.msra.mxu0 0
    %2626 = vmatprep.subr.bf16.mxu0 0
    %2627 = vmatpush1.bf16.msra.mxu0 0
    %2628 = vmatprep.subr.bf16.mxu0 0
    %2629 = vmatpush1.bf16.msra.mxu0 0
    %2630 = vmatprep.mubr.bf16.mxu0 0
    %2631 = vmatmul.mubr.bf16.gmra.mrb[0].mxu0 %v2556
    %v2632 = vpop.f32.mrb[0].mxu0
    %v2633 = vadd.f32 0.0, %v2632
    %v2634 = vpop.f32.mrb[0].mxu0
    %v2635 = vpop.f32.mrb[0].mxu0
    %v2636 = vpop.f32.mrb[0].mxu0
    %2637 = vdwg.mxu0
    %v2638 = vld [vmem:[%s1264] sm:$0xff]
    %v2639 = vld [vmem:[%s1264 + $0x8] sm:$0xff]
    %v2640 = vld [vmem:[%s1264 + $0x10] sm:$0xff]
    %v2641 = vadd.f32 %v2638, %v2592
    %v2642 = vxor.u32 %v2641, 2147483648
    %v2643 = vmul.f32 %v2642, 1.442695
    %v2644 = vpow.pop %v2643
    %v2645 = vadd.f32 %v2644, 1.0
    %v2646 = vrcp.pop %v2645
    %v2647 = vmul.f32 1.0, %v2646
    %v2648 = vadd.f32 %v2639, %v2594
    %v2649 = vxor.u32 %v2648, 2147483648
    %v2650 = vmul.f32 %v2649, 1.442695
    %v2651 = vpow.pop %v2650
    %v2652 = vadd.f32 %v2651, 1.0
    %v2653 = vrcp.pop %v2652
    %v2654 = vmul.f32 1.0, %v2653
    %v2655 = vadd.f32 %v2633, %v1897
    %v2656 = vmul.f32 %v2647, %v2655
    %v2657 = vadd.f32 %v2640, %v2656
    %v2658 = vtanh.pop %v2657
    %v2659 = vsub.f32 %v2555, %v2658
    %v2660 = vmul.f32 %v2654, %v2659
    %v2661 = vadd.f32 %v2658, %v2660
    %v2662 = vpack.c.bf16 %v2661, %v2661
    %2663 = vmatprep.subr.bf16.mxu0 %v1980
    %2664 = vmatpush1.bf16.msra.mxu0 %v1979
    %2665 = vmatprep.subr.bf16.mxu0 %v1983
    %2666 = vmatpush1.bf16.msra.mxu0 %v1982
    %2667 = vmatprep.subr.bf16.mxu0 %v1986
    %2668 = vmatpush1.bf16.msra.mxu0 %v1985
    %2669 = vmatprep.subr.bf16.mxu0 %v1989
    %2670 = vmatpush1.bf16.msra.mxu0 %v1988
    %2671 = vmatprep.subr.bf16.mxu0 %v1992
    %2672 = vmatpush1.bf16.msra.mxu0 %v1991
    %2673 = vmatprep.subr.bf16.mxu0 %v1995
    %2674 = vmatpush1.bf16.msra.mxu0 %v1994
    %2675 = vmatprep.subr.bf16.mxu0 %v1998
    %2676 = vmatpush1.bf16.msra.mxu0 %v1997
    %2677 = vmatprep.subr.bf16.mxu0 %v2001
    %2678 = vmatpush1.bf16.msra.mxu0 %v2000
    %2679 = vmatprep.subr.bf16.mxu0 0
    %2680 = vmatpush1.bf16.msra.mxu0 0
    %2681 = vmatprep.subr.bf16.mxu0 0
    %2682 = vmatpush1.bf16.msra.mxu0 0
    %2683 = vmatprep.subr.bf16.mxu0 0
    %2684 = vmatpush1.bf16.msra.mxu0 0
    %2685 = vmatprep.subr.bf16.mxu0 0
    %2686 = vmatpush1.bf16.msra.mxu0 0
    %2687 = vmatprep.subr.bf16.mxu0 0
    %2688 = vmatpush1.bf16.msra.mxu0 0
    %2689 = vmatprep.subr.bf16.mxu0 0
    %2690 = vmatpush1.bf16.msra.mxu0 0
    %2691 = vmatprep.subr.bf16.mxu0 0
    %2692 = vmatpush1.bf16.msra.mxu0 0
    %2693 = vmatprep.subr.bf16.mxu0 0
    %2694 = vmatpush1.bf16.msra.mxu0 0
    %2695 = vmatprep.mubr.bf16.mxu0 0
    %2696 = vmatmul.mubr.bf16.gmra.mrb[0].mxu0 %v2662
    %v2697 = vpop.f32.mrb[0].mxu0
    %v2698 = vadd.f32 0.0, %v2697
    %v2699 = vpop.f32.mrb[0].mxu0
    %v2700 = vadd.f32 0.0, %v2699
    %v2701 = vpop.f32.mrb[0].mxu0
    %v2702 = vpop.f32.mrb[0].mxu0
    %2703 = vdwg.mxu0
    %2704 = vmatprep.subr.bf16.mxu0 0
    %2705 = vmatpush1.bf16.msra.mxu0 %v1981
    %2706 = vmatprep.subr.bf16.mxu0 0
    %2707 = vmatpush1.bf16.msra.mxu0 %v1984
    %2708 = vmatprep.subr.bf16.mxu0 0
    %2709 = vmatpush1.bf16.msra.mxu0 %v1987
    %2710 = vmatprep.subr.bf16.mxu0 0
    %2711 = vmatpush1.bf16.msra.mxu0 %v1990
    %2712 = vmatprep.subr.bf16.mxu0 0
    %2713 = vmatpush1.bf16.msra.mxu0 %v1993
    %2714 = vmatprep.subr.bf16.mxu0 0
    %2715 = vmatpush1.bf16.msra.mxu0 %v1996
    %2716 = vmatprep.subr.bf16.mxu0 0
    %2717 = vmatpush1.bf16.msra.mxu0 %v1999
    %2718 = vmatprep.subr.bf16.mxu0 0
    %2719 = vmatpush1.bf16.msra.mxu0 %v2002
    %2720 = vmatprep.subr.bf16.mxu0 0
    %2721 = vmatpush1.bf16.msra.mxu0 0
    %2722 = vmatprep.subr.bf16.mxu0 0
    %2723 = vmatpush1.bf16.msra.mxu0 0
    %2724 = vmatprep.subr.bf16.mxu0 0
    %2725 = vmatpush1.bf16.msra.mxu0 0
    %2726 = vmatprep.subr.bf16.mxu0 0
    %2727 = vmatpush1.bf16.msra.mxu0 0
    %2728 = vmatprep.subr.bf16.mxu0 0
    %2729 = vmatpush1.bf16.msra.mxu0 0
    %2730 = vmatprep.subr.bf16.mxu0 0
    %2731 = vmatpush1.bf16.msra.mxu0 0
    %2732 = vmatprep.subr.bf16.mxu0 0
    %2733 = vmatpush1.bf16.msra.mxu0 0
    %2734 = vmatprep.subr.bf16.mxu0 0
    %2735 = vmatpush1.bf16.msra.mxu0 0
    %2736 = vmatprep.mubr.bf16.mxu0 0
    %2737 = vmatmul.mubr.bf16.gmra.mrb[0].mxu0 %v2662
    %v2738 = vpop.f32.mrb[0].mxu0
    %v2739 = vadd.f32 0.0, %v2738
    %v2740 = vpop.f32.mrb[0].mxu0
    %v2741 = vpop.f32.mrb[0].mxu0
    %v2742 = vpop.f32.mrb[0].mxu0
    %2743 = vdwg.mxu0
    %v2744 = vld [vmem:[%s1373] sm:$0xff]
    %v2745 = vld [vmem:[%s1373 + $0x8] sm:$0xff]
    %v2746 = vld [vmem:[%s1373 + $0x10] sm:$0xff]
    %v2747 = vadd.f32 %v2744, %v2698
    %v2748 = vxor.u32 %v2747, 2147483648
    %v2749 = vmul.f32 %v2748, 1.442695
    %v2750 = vpow.pop %v2749
    %v2751 = vadd.f32 %v2750, 1.0
    %v2752 = vrcp.pop %v2751
    %v2753 = vmul.f32 1.0, %v2752
    %v2754 = vadd.f32 %v2745, %v2700
    %v2755 = vxor.u32 %v2754, 2147483648
    %v2756 = vmul.f32 %v2755, 1.442695
    %v2757 = vpow.pop %v2756
    %v2758 = vadd.f32 %v2757, 1.0
    %v2759 = vrcp.pop %v2758
    %v2760 = vmul.f32 1.0, %v2759
    %v2761 = vadd.f32 %v2739, %v1897
    %v2762 = vmul.f32 %v2753, %v2761
    %v2763 = vadd.f32 %v2746, %v2762
    %v2764 = vtanh.pop %v2763
    %v2765 = vsub.f32 %v2661, %v2764
    %v2766 = vmul.f32 %v2760, %v2765
    %v2767 = vadd.f32 %v2764, %v2766
    %v2768 = vpack.c.bf16 %v2767, %v2767
    %2769 = vmatprep.subr.bf16.mxu0 %v1980
    %2770 = vmatpush1.bf16.msra.mxu0 %v1979
    %2771 = vmatprep.subr.bf16.mxu0 %v1983
    %2772 = vmatpush1.bf16.msra.mxu0 %v1982
    %2773 = vmatprep.subr.bf16.mxu0 %v1986
    %2774 = vmatpush1.bf16.msra.mxu0 %v1985
    %2775 = vmatprep.subr.bf16.mxu0 %v1989
    %2776 = vmatpush1.bf16.msra.mxu0 %v1988
    %2777 = vmatprep.subr.bf16.mxu0 %v1992
    %2778 = vmatpush1.bf16.msra.mxu0 %v1991
    %2779 = vmatprep.subr.bf16.mxu0 %v1995
    %2780 = vmatpush1.bf16.msra.mxu0 %v1994
    %2781 = vmatprep.subr.bf16.mxu0 %v1998
    %2782 = vmatpush1.bf16.msra.mxu0 %v1997
    %2783 = vmatprep.subr.bf16.mxu0 %v2001
    %2784 = vmatpush1.bf16.msra.mxu0 %v2000
    %2785 = vmatprep.subr.bf16.mxu0 0
    %2786 = vmatpush1.bf16.msra.mxu0 0
    %2787 = vmatprep.subr.bf16.mxu0 0
    %2788 = vmatpush1.bf16.msra.mxu0 0
    %2789 = vmatprep.subr.bf16.mxu0 0
    %2790 = vmatpush1.bf16.msra.mxu0 0
    %2791 = vmatprep.subr.bf16.mxu0 0
    %2792 = vmatpush1.bf16.msra.mxu0 0
    %2793 = vmatprep.subr.bf16.mxu0 0
    %2794 = vmatpush1.bf16.msra.mxu0 0
    %2795 = vmatprep.subr.bf16.mxu0 0
    %2796 = vmatpush1.bf16.msra.mxu0 0
    %2797 = vmatprep.subr.bf16.mxu0 0
    %2798 = vmatpush1.bf16.msra.mxu0 0
    %2799 = vmatprep.subr.bf16.mxu0 0
    %2800 = vmatpush1.bf16.msra.mxu0 0
    %2801 = vmatprep.mubr.bf16.mxu0 0
    %2802 = vmatmul.mubr.bf16.gmra.mrb[0].mxu0 %v2768
    %v2803 = vpop.f32.mrb[0].mxu0
    %v2804 = vadd.f32 0.0, %v2803
    %v2805 = vpop.f32.mrb[0].mxu0
    %v2806 = vadd.f32 0.0, %v2805
    %v2807 = vpop.f32.mrb[0].mxu0
    %v2808 = vpop.f32.mrb[0].mxu0
    %2809 = vdwg.mxu0
    %2810 = vmatprep.subr.bf16.mxu0 0
    %2811 = vmatpush1.bf16.msra.mxu0 %v1981
    %2812 = vmatprep.subr.bf16.mxu0 0
    %2813 = vmatpush1.bf16.msra.mxu0 %v1984
    %2814 = vmatprep.subr.bf16.mxu0 0
    %2815 = vmatpush1.bf16.msra.mxu0 %v1987
    %2816 = vmatprep.subr.bf16.mxu0 0
    %2817 = vmatpush1.bf16.msra.mxu0 %v1990
    %2818 = vmatprep.subr.bf16.mxu0 0
    %2819 = vmatpush1.bf16.msra.mxu0 %v1993
    %2820 = vmatprep.subr.bf16.mxu0 0
    %2821 = vmatpush1.bf16.msra.mxu0 %v1996
    %2822 = vmatprep.subr.bf16.mxu0 0
    %2823 = vmatpush1.bf16.msra.mxu0 %v1999
    %2824 = vmatprep.subr.bf16.mxu0 0
    %2825 = vmatpush1.bf16.msra.mxu0 %v2002
    %2826 = vmatprep.subr.bf16.mxu0 0
    %2827 = vmatpush1.bf16.msra.mxu0 0
    %2828 = vmatprep.subr.bf16.mxu0 0
    %2829 = vmatpush1.bf16.msra.mxu0 0
    %2830 = vmatprep.subr.bf16.mxu0 0
    %2831 = vmatpush1.bf16.msra.mxu0 0
    %2832 = vmatprep.subr.bf16.mxu0 0
    %2833 = vmatpush1.bf16.msra.mxu0 0
    %2834 = vmatprep.subr.bf16.mxu0 0
    %2835 = vmatpush1.bf16.msra.mxu0 0
    %2836 = vmatprep.subr.bf16.mxu0 0
    %2837 = vmatpush1.bf16.msra.mxu0 0
    %2838 = vmatprep.subr.bf16.mxu0 0
    %2839 = vmatpush1.bf16.msra.mxu0 0
    %2840 = vmatprep.subr.bf16.mxu0 0
    %2841 = vmatpush1.bf16.msra.mxu0 0
    %2842 = vmatprep.mubr.bf16.mxu0 0
    %2843 = vmatmul.mubr.bf16.gmra.mrb[0].mxu0 %v2768
    %v2844 = vpop.f32.mrb[0].mxu0
    %v2845 = vadd.f32 0.0, %v2844
    %v2846 = vpop.f32.mrb[0].mxu0
    %v2847 = vpop.f32.mrb[0].mxu0
    %v2848 = vpop.f32.mrb[0].mxu0
    %2849 = vdwg.mxu0
    %v2850 = vld [vmem:[%s1482] sm:$0xff]
    %v2851 = vld [vmem:[%s1482 + $0x8] sm:$0xff]
    %v2852 = vld [vmem:[%s1482 + $0x10] sm:$0xff]
    %v2853 = vadd.f32 %v2850, %v2804
    %v2854 = vxor.u32 %v2853, 2147483648
    %v2855 = vmul.f32 %v2854, 1.442695
    %v2856 = vpow.pop %v2855
    %v2857 = vadd.f32 %v2856, 1.0
    %v2858 = vrcp.pop %v2857
    %v2859 = vmul.f32 1.0, %v2858
    %v2860 = vadd.f32 %v2851, %v2806
    %v2861 = vxor.u32 %v2860, 2147483648
    %v2862 = vmul.f32 %v2861, 1.442695
    %v2863 = vpow.pop %v2862
    %v2864 = vadd.f32 %v2863, 1.0
    %v2865 = vrcp.pop %v2864
    %v2866 = vmul.f32 1.0, %v2865
    %v2867 = vadd.f32 %v2845, %v1897
    %v2868 = vmul.f32 %v2859, %v2867
    %v2869 = vadd.f32 %v2852, %v2868
    %v2870 = vtanh.pop %v2869
    %v2871 = vsub.f32 %v2767, %v2870
    %v2872 = vmul.f32 %v2866, %v2871
    %v2873 = vadd.f32 %v2870, %v2872
    %v2874 = vpack.c.bf16 %v2873, %v2873
    %v2875 = vld [vmem:[#allocation13] sm:$0xf]
    %v2876 = vld [vmem:[#allocation13 + $0x4] sm:$0xf]
    %v2877 = vld [vmem:[#allocation13 + $0x8] sm:$0xf]
    %v2878 = vld [vmem:[#allocation13 + $0xc] sm:$0xf]
    %v2879 = vld [vmem:[#allocation13 + $0x10] sm:$0xf]
    %v2880 = vld [vmem:[#allocation13 + $0x14] sm:$0xf]
    %v2881 = vld [vmem:[#allocation13 + $0x18] sm:$0xf]
    %v2882 = vld [vmem:[#allocation13 + $0x1c] sm:$0xf]
    %v2883 = vld [vmem:[#allocation13 + $0x20] sm:$0xf]
    %v2884 = vld [vmem:[#allocation13 + $0x24] sm:$0xf]
    %v2885 = vld [vmem:[#allocation13 + $0x28] sm:$0xf]
    %v2886 = vld [vmem:[#allocation13 + $0x2c] sm:$0xf]
    %v2887 = vld [vmem:[#allocation13 + $0x30] sm:$0xf]
    %v2888 = vld [vmem:[#allocation13 + $0x34] sm:$0xf]
    %v2889 = vld [vmem:[#allocation13 + $0x38] sm:$0xf]
    %v2890 = vld [vmem:[#allocation13 + $0x3c] sm:$0xf]
    %v2891 = vld [vmem:[%s10] sm:$0x1]
    %v2893 = vlaneseq
    %v2894 = vshrl.u32 %v2893, 7
    %v2895 = vsub.s32 0, %v2894
    %v2896 = vrot.slane %v2891, %v2895
    %v2914 = vunpack.c.l.b16 %v2875
    %v2915 = vunpack.c.l.b16 %v2876
    %v2916 = vunpack.c.l.b16 %v2877
    %v2917 = vunpack.c.l.b16 %v2878
    %v2918 = vunpack.c.l.b16 %v2879
    %v2919 = vunpack.c.l.b16 %v2880
    %v2920 = vunpack.c.l.b16 %v2881
    %v2921 = vunpack.c.l.b16 %v2882
    %v2922 = vunpack.c.l.b16 %v2883
    %v2923 = vunpack.c.l.b16 %v2884
    %v2924 = vunpack.c.l.b16 %v2885
    %v2925 = vunpack.c.l.b16 %v2886
    %v2926 = vunpack.c.l.b16 %v2887
    %v2927 = vunpack.c.l.b16 %v2888
    %v2928 = vunpack.c.l.b16 %v2889
    %v2929 = vunpack.c.l.b16 %v2890
    %v2930 = vpack.c.b16 %v2915, %v2914
    %v2931 = vpack.c.b16 %v2917, %v2916
    %v2932 = vpack.c.b16 %v2919, %v2918
    %v2933 = vpack.c.b16 %v2921, %v2920
    %v2934 = vpack.c.b16 %v2923, %v2922
    %v2935 = vpack.c.b16 %v2925, %v2924
    %v2936 = vpack.c.b16 %v2927, %v2926
    %v2937 = vpack.c.b16 %v2929, %v2928
    %2946 = vmatprep.subr.bf16.mxu0 0
    %2947 = vmatpush1.bf16.msra.mxu0 %v2930
    %2948 = vmatprep.subr.bf16.mxu0 0
    %2949 = vmatpush1.bf16.msra.mxu0 %v2931
    %2950 = vmatprep.subr.bf16.mxu0 0
    %2951 = vmatpush1.bf16.msra.mxu0 %v2932
    %2952 = vmatprep.subr.bf16.mxu0 0
    %2953 = vmatpush1.bf16.msra.mxu0 %v2933
    %2954 = vmatprep.subr.bf16.mxu0 0
    %2955 = vmatpush1.bf16.msra.mxu0 %v2934
    %2956 = vmatprep.subr.bf16.mxu0 0
    %2957 = vmatpush1.bf16.msra.mxu0 %v2935
    %2958 = vmatprep.subr.bf16.mxu0 0
    %2959 = vmatpush1.bf16.msra.mxu0 %v2936
    %2960 = vmatprep.subr.bf16.mxu0 0
    %2961 = vmatpush1.bf16.msra.mxu0 %v2937
    %2962 = vmatprep.subr.bf16.mxu0 0
    %2963 = vmatpush1.bf16.msra.mxu0 0
    %2964 = vmatprep.subr.bf16.mxu0 0
    %2965 = vmatpush1.bf16.msra.mxu0 0
    %2966 = vmatprep.subr.bf16.mxu0 0
    %2967 = vmatpush1.bf16.msra.mxu0 0
    %2968 = vmatprep.subr.bf16.mxu0 0
    %2969 = vmatpush1.bf16.msra.mxu0 0
    %2970 = vmatprep.subr.bf16.mxu0 0
    %2971 = vmatpush1.bf16.msra.mxu0 0
    %2972 = vmatprep.subr.bf16.mxu0 0
    %2973 = vmatpush1.bf16.msra.mxu0 0
    %2974 = vmatprep.subr.bf16.mxu0 0
    %2975 = vmatpush1.bf16.msra.mxu0 0
    %2976 = vmatprep.subr.bf16.mxu0 0
    %2977 = vmatpush1.bf16.msra.mxu0 0
    %2978 = vmatprep.mubr.bf16.mxu0 0
    %2979 = vmatmul.mubr.bf16.gmra.mrb[0].mxu0 %v2874
    %v2980 = vpop.f32.mrb[0].mxu0
    %v2981 = vadd.f32 %v2896, %v2980
    %v2982 = vpop.f32.mrb[0].mxu0
    %v2983 = vpop.f32.mrb[0].mxu0
    %v2984 = vpop.f32.mrb[0].mxu0
    %2985 = vdwg.mxu0
    %2986 = vst [vmem:[#allocation15] sm:$0xff] %v2981
    // Predicated region
    $region70: #{tpu_custom_call.1} parent=1 // pred_check
      _
    $region71: #{tpu_custom_call.1} parent=1 // pred_check_branch
      %2988 = sbr.rel (0) target = $region73
    $region72: #{tpu_custom_call.1} parent=1 // pred_region
      %s2990 = ssub.s32 128, 128
      %2991 = vsyncadd [#allocation6], %s2990
      %s2993 = sshll.u32 [#allocation15], 4
      %s2994 = int_to_ptr.vmem [resolvable:$true] %s2993
      %2996 = dma.vmem_to_hbm [thread:$0]  %s2994, 128, %s11, [#allocation6]
    $region73: #{tpu_custom_call.1} parent=1 // pred_fallthru
      _
    // Predicated region
    $region74: #{tpu_custom_call.1} parent=1 // pred_check
      _
    $region75: #{tpu_custom_call.1} parent=1 // pred_check_branch
      %2998 = sbr.rel (0) target = $region77
    $region76: #{tpu_custom_call.1} parent=1 // pred_region
      %2999 = dma.done [#allocation6], 128
    $region77: #{tpu_custom_call.1} parent=1 // pred_fallthru
      _
    %3000 = vsyncpa [#allocation5], 1
    %3001 = vsyncpa [#allocation8], 1
    %3002 = vsyncpa [#allocation11], 1
    %3003 = vsyncpa [#allocation14], 1
    %3004 = vsyncpa [#allocation6], 1

</llo_original>
